<compile_context>
chip_gen: v7x
topology: tpu7x:2x2x1
jax: 0.10.0
libtpu: 0.0.40
codegen_flags: <defaults>
</compile_context>

<pallas_src>
import functools

import jax
import jax.numpy as jnp
import numpy as np
from jax.experimental import pallas as pl
from jax.experimental.pallas import tpu as pltpu

# ----------------------- config (small, consistent with forward) -------------
HIDDEN = 32          # cfg.TRANSFORMER.hidden_size
N_HEADS = 4          # cfg.TRANSFORMER.n_heads
FFN = 64             # cfg.TRANSFORMER.dim_feedforward
NUM_LAYERS = 2       # cfg.TRANSFORMER.num_layers
SCHEMA_LEN = 4       # padded schema sequence length
LANE = 128
NEG = -1e9


# ----------------------------- fused Pallas kernel ---------------------------
def fused_forward_kernel(patches1_ref, schema_ref,
                         w1c_ref, misc_ref, g2_ref, w2c_ref,
                         placep_ref, projw_ref, schplace_ref, rowconst_ref,
                         headmask_ref, bmask_ref,
                         wqkv_ref, wo_ref, wff1_ref, wff2_ref, lvec_ref,
                         encsel_ref, schsel_ref, ptrmask_ref, lanepad_ref,
                         out_ref, *, n_heads, num_layers):
    """One grid step = B_BLK batch elements, row-packed. Everything on-chip."""
    f32 = jnp.float32
    bf16 = jnp.bfloat16

    def mm(a, b):
        # bf16 MXU operands, f32 accumulate; elementwise math stays f32.
        return jnp.dot(a.astype(bf16), b.astype(bf16), preferred_element_type=f32)

    def mm_nt(a, b):  # a @ b.T
        return jnp.dot(a.astype(bf16), b.astype(bf16).T, preferred_element_type=f32)

    # -------- conv1: im2col patches (host glue) @ W1 + ReLU   (B_BLK*S1, C1)
    c1out = w1c_ref.shape[1]
    c1 = mm(patches1_ref[...], w1c_ref[...])
    c1 = jnp.maximum(c1 + misc_ref[0:1, 0:c1out], 0.0)

    # -------- conv2: block-diag spatial gathers + accumulating matmuls
    #          (no lane concat; every operand lane-aligned)
    c2out = w2c_ref.shape[2]
    bs2 = g2_ref.shape[1]
    c2 = jnp.zeros((bs2, c2out), f32)
    for kk in range(g2_ref.shape[0]):
        c2 = c2 + mm(mm(g2_ref[kk], c1), w2c_ref[kk])
    c2 = jnp.maximum(c2 + misc_ref[1:2, 0:c2out], 0.0)          # (B_BLK*S2, C2)

    # -------- flatten + linear projection folded into accumulating selector
    #          matmuls, placed straight into the encoder-input rows; schema
    #          rows placed via a second selector. No scratch round-trip.
    bl, hsz = rowconst_ref.shape
    h = jnp.zeros((bl, hsz), f32)
    for f in range(placep_ref.shape[0]):
        h = h + mm(mm(placep_ref[f], c2), projw_ref[f])
    h = h + mm(schplace_ref[...], schema_ref[...])
    h = h + rowconst_ref[...]        # positional encoding (+ proj bias on speech rows)

    hd = hsz // n_heads
    scale = float(hd) ** -0.5
    headmask = headmask_ref[...]     # (nh*BL, H) static, hoisted to host
    bmask = bmask_ref[...]           # (nh*BL, BL) additive cross-batch mask

    for layer in range(num_layers):
        lv = lvec_ref[layer]                                     # (8, 128) packed vecs

        # fused QKV projection (single MXU push, 3H output lanes)
        qkv = mm(h, wqkv_ref[layer]) + lv[0:1, 0:3 * hsz]        # (BL, 3H)
        q = qkv[:, 0:hsz]
        k = qkv[:, hsz:2 * hsz]
        v = qkv[:, 2 * hsz:3 * hsz]

        # all heads packed along rows; cross-batch keys masked additively
        q_rep = jnp.concatenate([q] * n_heads, axis=0) * headmask   # (nh*BL, H)
        s = mm_nt(q_rep, k) * scale + bmask                         # (nh*BL, BL)
        s = s - jnp.max(s, axis=-1, keepdims=True)
        p = jnp.exp(s)
        p = p * pl.reciprocal(jnp.sum(p, axis=-1, keepdims=True), approx=True)
        o_full = mm(p, v) * headmask                                # (nh*BL, H)
        attn = o_full[0:bl]
        for hh in range(1, n_heads):
            attn = attn + o_full[hh * bl:(hh + 1) * bl]             # (BL, H)

        attn = mm(attn, wo_ref[layer]) + lv[1:2, 0:hsz]

        # residual + LayerNorm 1 (f32)
        y = h + attn
        mu = jnp.mean(y, axis=-1, keepdims=True)
        var = jnp.mean((y - mu) ** 2, axis=-1, keepdims=True)
        y = (y - mu) * jax.lax.rsqrt(var + 1e-5) * lv[2:3, 0:hsz] + lv[3:4, 0:hsz]

        # feed-forward
        ffn = wff1_ref.shape[2]
        ff = jnp.maximum(mm(y, wff1_ref[layer]) + lv[4:5, 0:ffn], 0.0)
        ff = mm(ff, wff2_ref[layer]) + lv[5:6, 0:hsz]

        # residual + LayerNorm 2 (f32)
        z = y + ff
        mu2 = jnp.mean(z, axis=-1, keepdims=True)
        var2 = jnp.mean((z - mu2) ** 2, axis=-1, keepdims=True)
        h = (z - mu2) * jax.lax.rsqrt(var2 + 1e-5) * lv[6:7, 0:hsz] + lv[7:8, 0:hsz]

    # -------- pointer-attention distributions of encoder frames over schema
    enc = mm(encsel_ref[...], h)                                   # (B_BLK*T2, H)
    sch = mm(schsel_ref[...], h)                                   # (B_BLK*S, H)
    scores = mm_nt(enc, sch) * (float(hsz) ** -0.5) + ptrmask_ref[...]
    scores = scores - jnp.max(scores, axis=-1, keepdims=True)
    pr = jnp.exp(scores)
    pr = pr / jnp.sum(pr, axis=-1, keepdims=True)   # exact normalization for output
    # lane-dense (rows, 128) store; padded lanes hold exact zeros.
    out_ref[...] = jnp.dot(pr, lanepad_ref[...], preferred_element_type=f32)


# ----------------------------- host-side helpers ------------------------------
def im2col_nhwc(x, k=3, stride=2, pad=1):
    """3x3 stride-2 im2col on the RAW input only (pure glue; depends only on x)."""
    xp = jnp.pad(x, ((0, 0), (pad, pad), (pad, pad), (0, 0)))
    B, Hp, Wp, C = xp.shape
    Ho = (Hp - k) // stride + 1
    Wo = (Wp - k) // stride + 1
    cols = []
    for di in range(k):
        for dj in range(k):
            cols.append(xp[:, di:di + stride * Ho:stride,
                           dj:dj + stride * Wo:stride, :])
    patches = jnp.stack(cols, axis=3)                              # (B,Ho,Wo,9,C)
    return patches.reshape(B, Ho * Wo, k * k * C), (Ho, Wo)


def conv2_gather_blockdiag(h1, w1, h2, w2, b_blk, k=3, stride=2, pad=1):
    """Static 0/1 block-diagonal gather matrices realizing conv2's im2col."""
    s1, s2 = h1 * w1, h2 * w2
    g = np.zeros((k * k, s2, s1), np.float32)
    for i2 in range(h2):
        for j2 in range(w2):
            t = i2 * w2 + j2
            for di in range(k):
                for dj in range(k):
                    i1 = stride * i2 + di - pad
                    j1 = stride * j2 + dj - pad
                    if 0 <= i1 < h1 and 0 <= j1 < w1:
                        g[di * k + dj, t, i1 * w1 + j1] = 1.0
    gb = np.zeros((k * k, b_blk * s2, b_blk * s1), np.float32)
    for b in range(b_blk):
        gb[:, b * s2:(b + 1) * s2, b * s1:(b + 1) * s1] = g
    return gb


def build_static_selectors(b_blk, t2, f2, s_len, hidden, n_heads):
    """All static 0/1 selectors and additive masks, hoisted out of the kernel."""
    s2 = t2 * f2
    L = t2 + s_len
    BL = b_blk * L
    placep = np.zeros((f2, BL, b_blk * s2), np.float32)
    schplace = np.zeros((BL, b_blk * s_len), np.float32)
    encsel = np.zeros((b_blk * t2, BL), np.float32)
    schsel = np.zeros((b_blk * s_len, BL), np.float32)
    for b in range(b_blk):
        for t in range(t2):
            encsel[b * t2 + t, b * L + t] = 1.0
            for f in range(f2):
                placep[f, b * L + t, b * s2 + t * f2 + f] = 1.0
        for j in range(s_len):
            schplace[b * L + t2 + j, b * s_len + j] = 1.0
            schsel[b * s_len + j, b * L + t2 + j] = 1.0
    hd = hidden // n_heads
    headmask = np.zeros((n_heads * BL, hidden), np.float32)
    bmask = np.full((n_heads * BL, BL), NEG, np.float32)
    for hh in range(n_heads):
        headmask[hh * BL:(hh + 1) * BL, hh * hd:(hh + 1) * hd] = 1.0
        for b in range(b_blk):
            bmask[hh * BL + b * L:hh * BL + (b + 1) * L, b * L:(b + 1) * L] = 0.0
    ptrmask = np.full((b_blk * t2, b_blk * s_len), NEG, np.float32)
    lanepad = np.zeros((b_blk * s_len, LANE), np.float32)
    for b in range(b_blk):
        ptrmask[b * t2:(b + 1) * t2, b * s_len:(b + 1) * s_len] = 0.0
        for j in range(s_len):
            lanepad[b * s_len + j, j] = 1.0
    return placep, schplace, encsel, schsel, headmask, bmask, ptrmask, lanepad


def sinusoid_pe(L, H):
    pos = np.arange(L)[:, None].astype(np.float32)
    i = np.arange(H)[None, :].astype(np.float32)
    angle = pos / np.power(10000.0, (2.0 * np.floor(i / 2.0)) / H)
    pe = np.where((np.arange(H)[None, :] % 2) == 0, np.sin(angle), np.cos(angle))
    return pe.astype(np.float32)


def _pad_row(v, width=LANE):
    return jnp.pad(v.astype(jnp.float32), (0, width - v.shape[0]))


def pack_layer_vecs(lp):
    """Pack all per-layer bias / LayerNorm vectors into one (8, 128) slab."""
    return jnp.stack([_pad_row(lp['bqkv']), _pad_row(lp['bo']),
                      _pad_row(lp['ln1_g']), _pad_row(lp['ln1_b']),
                      _pad_row(lp['b1']), _pad_row(lp['b2']),
                      _pad_row(lp['ln2_g']), _pad_row(lp['ln2_b'])], axis=0)


def pack_misc(params):
    rows = [_pad_row(params['conv1_b']), _pad_row(params['conv2_b'])]
    rows += [jnp.zeros((LANE,), jnp.float32)] * 6
    return jnp.stack(rows, axis=0)                                 # (8, 128)


# ----------------------------- full forward ----------------------------------
def speech_sqlnet_forward(params, speech_nchw, schema_emb, b_blk=2):
    f32 = jnp.float32
    bf16 = jnp.bfloat16
    B = speech_nchw.shape[0]
    assert B % b_blk == 0, "batch must be divisible by the per-step batch block"
    n_blk = B // b_blk

    c1out = params['conv1_w'].shape[0]
    c2out = params['conv2_w'].shape[0]

    # NCHW -> NHWC, im2col for conv1 (glue on raw input only).
    x = jnp.transpose(speech_nchw, (0, 2, 3, 1))                   # (B, T, F, 1)
    patches1, (t1, f1) = im2col_nhwc(x)                            # (B, t1*f1, 9)
    s1 = t1 * f1
    t2 = (t1 + 2 - 3) // 2 + 1
    f2 = (f1 + 2 - 3) // 2 + 1
    assert f2 * c2out == params['proj_w'].shape[0], \
        "proj_w expects Fq*C flattened conv features"

    s_len = schema_emb.shape[1]
    L = t2 + s_len
    BL = b_blk * L

    # static host constants (selectors / masks), hoisted out of the kernel
    g2_blk = jnp.asarray(conv2_gather_blockdiag(t1, f1, t2, f2, b_blk), bf16)
    placep, schplace, encsel, schsel, headmask, bmask, ptrmask, lanepad = \
        build_static_selectors(b_blk, t2, f2, s_len, HIDDEN, N_HEADS)
    placep = jnp.asarray(placep, bf16)
    schplace = jnp.asarray(schplace, bf16)
    encsel = jnp.asarray(encsel, bf16)
    schsel = jnp.asarray(schsel, bf16)
    headmask = jnp.asarray(headmask, f32)
    # TODO(synk): a real key-padding mask (batch.padding_mask()) would be folded
    # additively into bmask's per-batch key columns here (all-valid in this path).
    bmask = jnp.asarray(bmask, f32)
    ptrmask = jnp.asarray(ptrmask, f32)
    lanepad = jnp.asarray(lanepad, f32)

    # weights (bf16 matmul operands); biases / LN params stay f32
    w1mat = jnp.transpose(params['conv1_w'], (2, 3, 1, 0)).reshape(9, c1out).astype(bf16)
    w2c = jnp.transpose(params['conv2_w'], (2, 3, 1, 0)).reshape(9, c1out, c2out).astype(bf16)
    projw = params['proj_w'].reshape(f2, c2out, HIDDEN).astype(bf16)
    misc = pack_misc(params)
    wqkv = jnp.stack([lp['wqkv'] for lp in params['layers']]).astype(bf16)   # (NL,H,3H)
    wo = jnp.stack([lp['wo'] for lp in params['layers']]).astype(bf16)       # (NL,H,H)
    wff1 = jnp.stack([lp['w1'] for lp in params['layers']]).astype(bf16)     # (NL,H,FFN)
    wff2 = jnp.stack([lp['w2'] for lp in params['layers']]).astype(bf16)     # (NL,FFN,H)
    lvecs = jnp.stack([pack_layer_vecs(lp) for lp in params['layers']])      # (NL,8,128)

    # positional encoding (per batch element) + projection bias on speech rows
    pe = jnp.asarray(sinusoid_pe(L, HIDDEN), f32)
    sp_rows = np.zeros((BL, 1), np.float32)
    for b in range(b_blk):
        sp_rows[b * L:b * L + t2, 0] = 1.0
    row_const = jnp.tile(pe, (b_blk, 1)) + jnp.asarray(sp_rows) * params['proj_b'][None, :]

    shared = [w1mat, misc, g2_blk, w2c, placep, projw, schplace, row_const,
              headmask, bmask, wqkv, wo, wff1, wff2, lvecs,
              encsel, schsel, ptrmask, lanepad]

    def full_spec(a):
        z = (0,) * a.ndim
        return pl.BlockSpec(a.shape, lambda g, _z=z: _z)

    # batch row-packed per-step inputs / output
    patches1_flat = patches1.reshape(B * s1, 9).astype(f32)
    schema_flat = schema_emb.reshape(B * s_len, HIDDEN).astype(f32)

    kernel = functools.partial(fused_forward_kernel, n_heads=N_HEADS,
                               num_layers=NUM_LAYERS)

    out_flat = pl.pallas_call(
        kernel,
        out_shape=jax.ShapeDtypeStruct((B * t2, LANE), f32),
        grid=(n_blk,),
        in_specs=([pl.BlockSpec((b_blk * s1, 9), lambda g: (g, 0)),
                   pl.BlockSpec((b_blk * s_len, HIDDEN), lambda g: (g, 0))]
                  + [full_spec(a) for a in shared]),
        out_specs=pl.BlockSpec((b_blk * t2, LANE), lambda g: (g, 0)),
        compiler_params=pltpu.CompilerParams(dimension_semantics=("parallel",)),
    )(patches1_flat, schema_flat, *shared)

    # lane-dense slab -> (B, T2, s_len); padded lanes hold exact zeros.
    decoder_outputs = out_flat.reshape(B, t2, LANE)[:, :, :s_len]

    # TODO(synk): SQLDecoder's grammar-guided autoregressive AST decoding has no
    # clean Pallas equivalent; pointer-attention distributions over schema items
    # are emitted instead.
    return decoder_outputs, 0


# ----------------------------- deterministic params --------------------------
def init_params(key):
    keys = iter(jax.random.split(key, 64))

    def rnd(shape, scale=0.05):
        return scale * jax.random.normal(next(keys), shape, jnp.float32)

    p = {
        'conv1_w': rnd((8, 1, 3, 3)),                 # PyTorch OIHW layout
        'conv1_b': jnp.zeros((8,), jnp.float32),
        'conv2_w': rnd((8, 8, 3, 3)),
        'conv2_b': jnp.zeros((8,), jnp.float32),
        'proj_w': rnd((32, HIDDEN)),
        'proj_b': jnp.zeros((HIDDEN,), jnp.float32),
        'layers': [],
    }
    for _ in range(NUM_LAYERS):
        p['layers'].append({
            'wqkv': rnd((HIDDEN, 3 * HIDDEN)),        # fused [Wq | Wk | Wv]
            'bqkv': jnp.zeros((3 * HIDDEN,), jnp.float32),
            'wo': rnd((HIDDEN, HIDDEN)),
            'bo': jnp.zeros((HIDDEN,), jnp.float32),
            'ln1_g': jnp.ones((HIDDEN,), jnp.float32),
            'ln1_b': jnp.zeros((HIDDEN,), jnp.float32),
            'w1': rnd((HIDDEN, FFN)),
            'b1': jnp.zeros((FFN,), jnp.float32),
            'w2': rnd((FFN, HIDDEN)),
            'b2': jnp.zeros((HIDDEN,), jnp.float32),
            'ln2_g': jnp.ones((HIDDEN,), jnp.float32),
            'ln2_b': jnp.zeros((HIDDEN,), jnp.float32),
        })
    return p


if __name__ == "__main__":
    key = jax.random.PRNGKey(0)
    k_param, k_speech, k_schema = jax.random.split(key, 3)

    params = init_params(k_param)
    B = 4
    # padded speech spectrograms, unsqueeze(1) -> NCHW (B, 1, T, F)
    speech = jax.random.normal(k_speech, (B, 1, 16, 16), jnp.float32)
    # padded schema sentence embeddings (use_gcn=False path)
    schema_emb = 0.1 * jax.random.normal(k_schema, (B, SCHEMA_LEN, HIDDEN), jnp.float32)

    decoder_outputs, aux = speech_sqlnet_forward(params, speech, schema_emb, b_blk=2)
    decoder_outputs = jax.block_until_ready(decoder_outputs)

    assert decoder_outputs.shape == (B, 4, SCHEMA_LEN)
    assert bool(jnp.all(jnp.isfinite(decoder_outputs)))
    print("KERNEL_OK")
</pallas_src>

<mosaic_0001>
module attributes {stable_mosaic.version = 11 : i64} {
  func.func @fused_forward_kernel(%arg0: i32, %arg1: memref<128x9xf32, #tpu.memory_space<vmem>>, %arg2: memref<8x32xf32, #tpu.memory_space<vmem>>, %arg3: memref<9x8xbf16, #tpu.memory_space<vmem>>, %arg4: memref<8x128xf32, #tpu.memory_space<vmem>>, %arg5: memref<9x32x128xbf16, #tpu.memory_space<vmem>>, %arg6: memref<9x8x8xbf16, #tpu.memory_space<vmem>>, %arg7: memref<4x16x32xbf16, #tpu.memory_space<vmem>>, %arg8: memref<4x8x32xbf16, #tpu.memory_space<vmem>>, %arg9: memref<16x8xbf16, #tpu.memory_space<vmem>>, %arg10: memref<16x32xf32, #tpu.memory_space<vmem>>, %arg11: memref<64x32xf32, #tpu.memory_space<vmem>>, %arg12: memref<64x16xf32, #tpu.memory_space<vmem>>, %arg13: memref<2x32x96xbf16, #tpu.memory_space<vmem>>, %arg14: memref<2x32x32xbf16, #tpu.memory_space<vmem>>, %arg15: memref<2x32x64xbf16, #tpu.memory_space<vmem>>, %arg16: memref<2x64x32xbf16, #tpu.memory_space<vmem>>, %arg17: memref<2x8x128xf32, #tpu.memory_space<vmem>>, %arg18: memref<8x16xbf16, #tpu.memory_space<vmem>>, %arg19: memref<8x16xbf16, #tpu.memory_space<vmem>>, %arg20: memref<8x8xf32, #tpu.memory_space<vmem>>, %arg21: memref<8x128xf32, #tpu.memory_space<vmem>>, %arg22: memref<8x128xf32, #tpu.memory_space<vmem>>) attributes {dimension_semantics = [#tpu.dimension_semantics<parallel>], iteration_bounds = array<i64: 2>, scalar_prefetch = 0 : i64, scratch_operands = 0 : i64, tpu.core_type = #tpu.core_type<tc>, window_params = [{transform_indices = @transform_0, window_bounds = array<i64: 128, 9>}, {transform_indices = @transform_1, window_bounds = array<i64: 8, 32>}, {pipeline_mode = #tpu.pipeline_mode<synchronous>, transform_indices = @transform_2, window_bounds = array<i64: 9, 8>}, {pipeline_mode = #tpu.pipeline_mode<synchronous>, transform_indices = @transform_3, window_bounds = array<i64: 8, 128>}, {pipeline_mode = #tpu.pipeline_mode<synchronous>, transform_indices = @transform_4, window_bounds = array<i64: 9, 32, 128>}, {pipeline_mode = #tpu.pipeline_mode<synchronous>, transform_indices = @transform_5, window_bounds = array<i64: 9, 8, 8>}, {pipeline_mode = #tpu.pipeline_mode<synchronous>, transform_indices = @transform_6, window_bounds = array<i64: 4, 16, 32>}, {pipeline_mode = #tpu.pipeline_mode<synchronous>, transform_indices = @transform_7, window_bounds = array<i64: 4, 8, 32>}, {pipeline_mode = #tpu.pipeline_mode<synchronous>, transform_indices = @transform_8, window_bounds = array<i64: 16, 8>}, {pipeline_mode = #tpu.pipeline_mode<synchronous>, transform_indices = @transform_9, window_bounds = array<i64: 16, 32>}, {pipeline_mode = #tpu.pipeline_mode<synchronous>, transform_indices = @transform_10, window_bounds = array<i64: 64, 32>}, {pipeline_mode = #tpu.pipeline_mode<synchronous>, transform_indices = @transform_11, window_bounds = array<i64: 64, 16>}, {pipeline_mode = #tpu.pipeline_mode<synchronous>, transform_indices = @transform_12, window_bounds = array<i64: 2, 32, 96>}, {pipeline_mode = #tpu.pipeline_mode<synchronous>, transform_indices = @transform_13, window_bounds = array<i64: 2, 32, 32>}, {pipeline_mode = #tpu.pipeline_mode<synchronous>, transform_indices = @transform_14, window_bounds = array<i64: 2, 32, 64>}, {pipeline_mode = #tpu.pipeline_mode<synchronous>, transform_indices = @transform_15, window_bounds = array<i64: 2, 64, 32>}, {pipeline_mode = #tpu.pipeline_mode<synchronous>, transform_indices = @transform_16, window_bounds = array<i64: 2, 8, 128>}, {pipeline_mode = #tpu.pipeline_mode<synchronous>, transform_indices = @transform_17, window_bounds = array<i64: 8, 16>}, {pipeline_mode = #tpu.pipeline_mode<synchronous>, transform_indices = @transform_18, window_bounds = array<i64: 8, 16>}, {pipeline_mode = #tpu.pipeline_mode<synchronous>, transform_indices = @transform_19, window_bounds = array<i64: 8, 8>}, {pipeline_mode = #tpu.pipeline_mode<synchronous>, transform_indices = @transform_20, window_bounds = array<i64: 8, 128>}, {transform_indices = @transform_21, window_bounds = array<i64: 8, 128>}]} {
    %c0 = arith.constant 0 : index
    %c0_0 = arith.constant 0 : index
    %0 = vector.load %arg1[%c0, %c0_0] : memref<128x9xf32, #tpu.memory_space<vmem>>, vector<128x9xf32>
    %c0_1 = arith.constant 0 : index
    %c0_2 = arith.constant 0 : index
    %1 = vector.load %arg3[%c0_1, %c0_2] : memref<9x8xbf16, #tpu.memory_space<vmem>>, vector<9x8xbf16>
    %2 = arith.truncf %0 : vector<128x9xf32> to vector<128x9xbf16>
    %cst = arith.constant dense<0.000000e+00> : vector<128x8xf32>
    %3 = tpu.matmul %2, %1, %cst {dimension_numbers = #tpu.dot_dimension_numbers<[1], [0], [0], [1], [0, 0, 1, 1], [], []>} : vector<128x9xbf16>, vector<9x8xbf16>, vector<128x8xf32> -> vector<128x8xf32>
    %c0_3 = arith.constant 0 : index
    %c0_4 = arith.constant 0 : index
    %4 = vector.load %arg4[%c0_3, %c0_4] : memref<8x128xf32, #tpu.memory_space<vmem>>, vector<1x8xf32>
    %5 = vector.broadcast %4 : vector<1x8xf32> to vector<128x8xf32>
    %6 = arith.addf %3, %5 : vector<128x8xf32>
    %cst_5 = arith.constant 0.000000e+00 : f32
    %7 = vector.broadcast %cst_5 : f32 to vector<128x8xf32>
    %8 = arith.maximumf %6, %7 : vector<128x8xf32>
    %cst_6 = arith.constant 0.000000e+00 : f32
    %9 = vector.broadcast %cst_6 : f32 to vector<32x8xf32>
    %c0_7 = arith.constant 0 : index
    %c0_8 = arith.constant 0 : index
    %c0_9 = arith.constant 0 : index
    %10 = vector.load %arg5[%c0_7, %c0_8, %c0_9] : memref<9x32x128xbf16, #tpu.memory_space<vmem>>, vector<1x32x128xbf16>
    %11 = vector.shape_cast %10 : vector<1x32x128xbf16> to vector<32x128xbf16>
    %12 = arith.truncf %8 : vector<128x8xf32> to vector<128x8xbf16>
    %cst_10 = arith.constant dense<0.000000e+00> : vector<32x8xf32>
    %13 = tpu.matmul %11, %12, %cst_10 {dimension_numbers = #tpu.dot_dimension_numbers<[1], [0], [0], [1], [0, 0, 1, 1], [], []>} : vector<32x128xbf16>, vector<128x8xbf16>, vector<32x8xf32> -> vector<32x8xf32>
    %c0_11 = arith.constant 0 : index
    %c0_12 = arith.constant 0 : index
    %c0_13 = arith.constant 0 : index
    %14 = vector.load %arg6[%c0_11, %c0_12, %c0_13] : memref<9x8x8xbf16, #tpu.memory_space<vmem>>, vector<1x8x8xbf16>
    %15 = vector.shape_cast %14 : vector<1x8x8xbf16> to vector<8x8xbf16>
    %16 = arith.truncf %13 : vector<32x8xf32> to vector<32x8xbf16>
    %cst_14 = arith.constant dense<0.000000e+00> : vector<32x8xf32>
    %17 = tpu.matmul %16, %15, %cst_14 {dimension_numbers = #tpu.dot_dimension_numbers<[1], [0], [0], [1], [0, 0, 1, 1], [], []>} : vector<32x8xbf16>, vector<8x8xbf16>, vector<32x8xf32> -> vector<32x8xf32>
    %18 = arith.addf %9, %17 : vector<32x8xf32>
    %c1 = arith.constant 1 : index
    %c0_15 = arith.constant 0 : index
    %c0_16 = arith.constant 0 : index
    %19 = vector.load %arg5[%c1, %c0_15, %c0_16] : memref<9x32x128xbf16, #tpu.memory_space<vmem>>, vector<1x32x128xbf16>
    %20 = vector.shape_cast %19 : vector<1x32x128xbf16> to vector<32x128xbf16>
    %21 = arith.truncf %8 : vector<128x8xf32> to vector<128x8xbf16>
    %cst_17 = arith.constant dense<0.000000e+00> : vector<32x8xf32>
    %22 = tpu.matmul %20, %21, %cst_17 {dimension_numbers = #tpu.dot_dimension_numbers<[1], [0], [0], [1], [0, 0, 1, 1], [], []>} : vector<32x128xbf16>, vector<128x8xbf16>, vector<32x8xf32> -> vector<32x8xf32>
    %c1_18 = arith.constant 1 : index
    %c0_19 = arith.constant 0 : index
    %c0_20 = arith.constant 0 : index
    %23 = vector.load %arg6[%c1_18, %c0_19, %c0_20] : memref<9x8x8xbf16, #tpu.memory_space<vmem>>, vector<1x8x8xbf16>
    %24 = vector.shape_cast %23 : vector<1x8x8xbf16> to vector<8x8xbf16>
    %25 = arith.truncf %22 : vector<32x8xf32> to vector<32x8xbf16>
    %cst_21 = arith.constant dense<0.000000e+00> : vector<32x8xf32>
    %26 = tpu.matmul %25, %24, %cst_21 {dimension_numbers = #tpu.dot_dimension_numbers<[1], [0], [0], [1], [0, 0, 1, 1], [], []>} : vector<32x8xbf16>, vector<8x8xbf16>, vector<32x8xf32> -> vector<32x8xf32>
    %27 = arith.addf %18, %26 : vector<32x8xf32>
    %c2 = arith.constant 2 : index
    %c0_22 = arith.constant 0 : index
    %c0_23 = arith.constant 0 : index
    %28 = vector.load %arg5[%c2, %c0_22, %c0_23] : memref<9x32x128xbf16, #tpu.memory_space<vmem>>, vector<1x32x128xbf16>
    %29 = vector.shape_cast %28 : vector<1x32x128xbf16> to vector<32x128xbf16>
    %30 = arith.truncf %8 : vector<128x8xf32> to vector<128x8xbf16>
    %cst_24 = arith.constant dense<0.000000e+00> : vector<32x8xf32>
    %31 = tpu.matmul %29, %30, %cst_24 {dimension_numbers = #tpu.dot_dimension_numbers<[1], [0], [0], [1], [0, 0, 1, 1], [], []>} : vector<32x128xbf16>, vector<128x8xbf16>, vector<32x8xf32> -> vector<32x8xf32>
    %c2_25 = arith.constant 2 : index
    %c0_26 = arith.constant 0 : index
    %c0_27 = arith.constant 0 : index
    %32 = vector.load %arg6[%c2_25, %c0_26, %c0_27] : memref<9x8x8xbf16, #tpu.memory_space<vmem>>, vector<1x8x8xbf16>
    %33 = vector.shape_cast %32 : vector<1x8x8xbf16> to vector<8x8xbf16>
    %34 = arith.truncf %31 : vector<32x8xf32> to vector<32x8xbf16>
    %cst_28 = arith.constant dense<0.000000e+00> : vector<32x8xf32>
    %35 = tpu.matmul %34, %33, %cst_28 {dimension_numbers = #tpu.dot_dimension_numbers<[1], [0], [0], [1], [0, 0, 1, 1], [], []>} : vector<32x8xbf16>, vector<8x8xbf16>, vector<32x8xf32> -> vector<32x8xf32>
    %36 = arith.addf %27, %35 : vector<32x8xf32>
    %c3 = arith.constant 3 : index
    %c0_29 = arith.constant 0 : index
    %c0_30 = arith.constant 0 : index
    %37 = vector.load %arg5[%c3, %c0_29, %c0_30] : memref<9x32x128xbf16, #tpu.memory_space<vmem>>, vector<1x32x128xbf16>
    %38 = vector.shape_cast %37 : vector<1x32x128xbf16> to vector<32x128xbf16>
    %39 = arith.truncf %8 : vector<128x8xf32> to vector<128x8xbf16>
    %cst_31 = arith.constant dense<0.000000e+00> : vector<32x8xf32>
    %40 = tpu.matmul %38, %39, %cst_31 {dimension_numbers = #tpu.dot_dimension_numbers<[1], [0], [0], [1], [0, 0, 1, 1], [], []>} : vector<32x128xbf16>, vector<128x8xbf16>, vector<32x8xf32> -> vector<32x8xf32>
    %c3_32 = arith.constant 3 : index
    %c0_33 = arith.constant 0 : index
    %c0_34 = arith.constant 0 : index
    %41 = vector.load %arg6[%c3_32, %c0_33, %c0_34] : memref<9x8x8xbf16, #tpu.memory_space<vmem>>, vector<1x8x8xbf16>
    %42 = vector.shape_cast %41 : vector<1x8x8xbf16> to vector<8x8xbf16>
    %43 = arith.truncf %40 : vector<32x8xf32> to vector<32x8xbf16>
    %cst_35 = arith.constant dense<0.000000e+00> : vector<32x8xf32>
    %44 = tpu.matmul %43, %42, %cst_35 {dimension_numbers = #tpu.dot_dimension_numbers<[1], [0], [0], [1], [0, 0, 1, 1], [], []>} : vector<32x8xbf16>, vector<8x8xbf16>, vector<32x8xf32> -> vector<32x8xf32>
    %45 = arith.addf %36, %44 : vector<32x8xf32>
    %c4 = arith.constant 4 : index
    %c0_36 = arith.constant 0 : index
    %c0_37 = arith.constant 0 : index
    %46 = vector.load %arg5[%c4, %c0_36, %c0_37] : memref<9x32x128xbf16, #tpu.memory_space<vmem>>, vector<1x32x128xbf16>
    %47 = vector.shape_cast %46 : vector<1x32x128xbf16> to vector<32x128xbf16>
    %48 = arith.truncf %8 : vector<128x8xf32> to vector<128x8xbf16>
    %cst_38 = arith.constant dense<0.000000e+00> : vector<32x8xf32>
    %49 = tpu.matmul %47, %48, %cst_38 {dimension_numbers = #tpu.dot_dimension_numbers<[1], [0], [0], [1], [0, 0, 1, 1], [], []>} : vector<32x128xbf16>, vector<128x8xbf16>, vector<32x8xf32> -> vector<32x8xf32>
    %c4_39 = arith.constant 4 : index
    %c0_40 = arith.constant 0 : index
    %c0_41 = arith.constant 0 : index
    %50 = vector.load %arg6[%c4_39, %c0_40, %c0_41] : memref<9x8x8xbf16, #tpu.memory_space<vmem>>, vector<1x8x8xbf16>
    %51 = vector.shape_cast %50 : vector<1x8x8xbf16> to vector<8x8xbf16>
    %52 = arith.truncf %49 : vector<32x8xf32> to vector<32x8xbf16>
    %cst_42 = arith.constant dense<0.000000e+00> : vector<32x8xf32>
    %53 = tpu.matmul %52, %51, %cst_42 {dimension_numbers = #tpu.dot_dimension_numbers<[1], [0], [0], [1], [0, 0, 1, 1], [], []>} : vector<32x8xbf16>, vector<8x8xbf16>, vector<32x8xf32> -> vector<32x8xf32>
    %54 = arith.addf %45, %53 : vector<32x8xf32>
    %c5 = arith.constant 5 : index
    %c0_43 = arith.constant 0 : index
    %c0_44 = arith.constant 0 : index
    %55 = vector.load %arg5[%c5, %c0_43, %c0_44] : memref<9x32x128xbf16, #tpu.memory_space<vmem>>, vector<1x32x128xbf16>
    %56 = vector.shape_cast %55 : vector<1x32x128xbf16> to vector<32x128xbf16>
    %57 = arith.truncf %8 : vector<128x8xf32> to vector<128x8xbf16>
    %cst_45 = arith.constant dense<0.000000e+00> : vector<32x8xf32>
    %58 = tpu.matmul %56, %57, %cst_45 {dimension_numbers = #tpu.dot_dimension_numbers<[1], [0], [0], [1], [0, 0, 1, 1], [], []>} : vector<32x128xbf16>, vector<128x8xbf16>, vector<32x8xf32> -> vector<32x8xf32>
    %c5_46 = arith.constant 5 : index
    %c0_47 = arith.constant 0 : index
    %c0_48 = arith.constant 0 : index
    %59 = vector.load %arg6[%c5_46, %c0_47, %c0_48] : memref<9x8x8xbf16, #tpu.memory_space<vmem>>, vector<1x8x8xbf16>
    %60 = vector.shape_cast %59 : vector<1x8x8xbf16> to vector<8x8xbf16>
    %61 = arith.truncf %58 : vector<32x8xf32> to vector<32x8xbf16>
    %cst_49 = arith.constant dense<0.000000e+00> : vector<32x8xf32>
    %62 = tpu.matmul %61, %60, %cst_49 {dimension_numbers = #tpu.dot_dimension_numbers<[1], [0], [0], [1], [0, 0, 1, 1], [], []>} : vector<32x8xbf16>, vector<8x8xbf16>, vector<32x8xf32> -> vector<32x8xf32>
    %63 = arith.addf %54, %62 : vector<32x8xf32>
    %c6 = arith.constant 6 : index
    %c0_50 = arith.constant 0 : index
    %c0_51 = arith.constant 0 : index
    %64 = vector.load %arg5[%c6, %c0_50, %c0_51] : memref<9x32x128xbf16, #tpu.memory_space<vmem>>, vector<1x32x128xbf16>
    %65 = vector.shape_cast %64 : vector<1x32x128xbf16> to vector<32x128xbf16>
    %66 = arith.truncf %8 : vector<128x8xf32> to vector<128x8xbf16>
    %cst_52 = arith.constant dense<0.000000e+00> : vector<32x8xf32>
    %67 = tpu.matmul %65, %66, %cst_52 {dimension_numbers = #tpu.dot_dimension_numbers<[1], [0], [0], [1], [0, 0, 1, 1], [], []>} : vector<32x128xbf16>, vector<128x8xbf16>, vector<32x8xf32> -> vector<32x8xf32>
    %c6_53 = arith.constant 6 : index
    %c0_54 = arith.constant 0 : index
    %c0_55 = arith.constant 0 : index
    %68 = vector.load %arg6[%c6_53, %c0_54, %c0_55] : memref<9x8x8xbf16, #tpu.memory_space<vmem>>, vector<1x8x8xbf16>
    %69 = vector.shape_cast %68 : vector<1x8x8xbf16> to vector<8x8xbf16>
    %70 = arith.truncf %67 : vector<32x8xf32> to vector<32x8xbf16>
    %cst_56 = arith.constant dense<0.000000e+00> : vector<32x8xf32>
    %71 = tpu.matmul %70, %69, %cst_56 {dimension_numbers = #tpu.dot_dimension_numbers<[1], [0], [0], [1], [0, 0, 1, 1], [], []>} : vector<32x8xbf16>, vector<8x8xbf16>, vector<32x8xf32> -> vector<32x8xf32>
    %72 = arith.addf %63, %71 : vector<32x8xf32>
    %c7 = arith.constant 7 : index
    %c0_57 = arith.constant 0 : index
    %c0_58 = arith.constant 0 : index
    %73 = vector.load %arg5[%c7, %c0_57, %c0_58] : memref<9x32x128xbf16, #tpu.memory_space<vmem>>, vector<1x32x128xbf16>
    %74 = vector.shape_cast %73 : vector<1x32x128xbf16> to vector<32x128xbf16>
    %75 = arith.truncf %8 : vector<128x8xf32> to vector<128x8xbf16>
    %cst_59 = arith.constant dense<0.000000e+00> : vector<32x8xf32>
    %76 = tpu.matmul %74, %75, %cst_59 {dimension_numbers = #tpu.dot_dimension_numbers<[1], [0], [0], [1], [0, 0, 1, 1], [], []>} : vector<32x128xbf16>, vector<128x8xbf16>, vector<32x8xf32> -> vector<32x8xf32>
    %c7_60 = arith.constant 7 : index
    %c0_61 = arith.constant 0 : index
    %c0_62 = arith.constant 0 : index
    %77 = vector.load %arg6[%c7_60, %c0_61, %c0_62] : memref<9x8x8xbf16, #tpu.memory_space<vmem>>, vector<1x8x8xbf16>
    %78 = vector.shape_cast %77 : vector<1x8x8xbf16> to vector<8x8xbf16>
    %79 = arith.truncf %76 : vector<32x8xf32> to vector<32x8xbf16>
    %cst_63 = arith.constant dense<0.000000e+00> : vector<32x8xf32>
    %80 = tpu.matmul %79, %78, %cst_63 {dimension_numbers = #tpu.dot_dimension_numbers<[1], [0], [0], [1], [0, 0, 1, 1], [], []>} : vector<32x8xbf16>, vector<8x8xbf16>, vector<32x8xf32> -> vector<32x8xf32>
    %81 = arith.addf %72, %80 : vector<32x8xf32>
    %c8 = arith.constant 8 : index
    %c0_64 = arith.constant 0 : index
    %c0_65 = arith.constant 0 : index
    %82 = vector.load %arg5[%c8, %c0_64, %c0_65] : memref<9x32x128xbf16, #tpu.memory_space<vmem>>, vector<1x32x128xbf16>
    %83 = vector.shape_cast %82 : vector<1x32x128xbf16> to vector<32x128xbf16>
    %84 = arith.truncf %8 : vector<128x8xf32> to vector<128x8xbf16>
    %cst_66 = arith.constant dense<0.000000e+00> : vector<32x8xf32>
    %85 = tpu.matmul %83, %84, %cst_66 {dimension_numbers = #tpu.dot_dimension_numbers<[1], [0], [0], [1], [0, 0, 1, 1], [], []>} : vector<32x128xbf16>, vector<128x8xbf16>, vector<32x8xf32> -> vector<32x8xf32>
    %c8_67 = arith.constant 8 : index
    %c0_68 = arith.constant 0 : index
    %c0_69 = arith.constant 0 : index
    %86 = vector.load %arg6[%c8_67, %c0_68, %c0_69] : memref<9x8x8xbf16, #tpu.memory_space<vmem>>, vector<1x8x8xbf16>
    %87 = vector.shape_cast %86 : vector<1x8x8xbf16> to vector<8x8xbf16>
    %88 = arith.truncf %85 : vector<32x8xf32> to vector<32x8xbf16>
    %cst_70 = arith.constant dense<0.000000e+00> : vector<32x8xf32>
    %89 = tpu.matmul %88, %87, %cst_70 {dimension_numbers = #tpu.dot_dimension_numbers<[1], [0], [0], [1], [0, 0, 1, 1], [], []>} : vector<32x8xbf16>, vector<8x8xbf16>, vector<32x8xf32> -> vector<32x8xf32>
    %90 = arith.addf %81, %89 : vector<32x8xf32>
    %c1_71 = arith.constant 1 : index
    %c0_72 = arith.constant 0 : index
    %91 = vector.load %arg4[%c1_71, %c0_72] : memref<8x128xf32, #tpu.memory_space<vmem>>, vector<1x8xf32>
    %92 = vector.broadcast %91 : vector<1x8xf32> to vector<32x8xf32>
    %93 = arith.addf %90, %92 : vector<32x8xf32>
    %cst_73 = arith.constant 0.000000e+00 : f32
    %94 = vector.broadcast %cst_73 : f32 to vector<32x8xf32>
    %95 = arith.maximumf %93, %94 : vector<32x8xf32>
    %cst_74 = arith.constant 0.000000e+00 : f32
    %96 = vector.broadcast %cst_74 : f32 to vector<16x32xf32>
    %c0_75 = arith.constant 0 : index
    %c0_76 = arith.constant 0 : index
    %c0_77 = arith.constant 0 : index
    %97 = vector.load %arg7[%c0_75, %c0_76, %c0_77] : memref<4x16x32xbf16, #tpu.memory_space<vmem>>, vector<1x16x32xbf16>
    %98 = vector.shape_cast %97 : vector<1x16x32xbf16> to vector<16x32xbf16>
    %99 = arith.truncf %95 : vector<32x8xf32> to vector<32x8xbf16>
    %cst_78 = arith.constant dense<0.000000e+00> : vector<16x8xf32>
    %100 = tpu.matmul %98, %99, %cst_78 {dimension_numbers = #tpu.dot_dimension_numbers<[1], [0], [0], [1], [0, 0, 1, 1], [], []>} : vector<16x32xbf16>, vector<32x8xbf16>, vector<16x8xf32> -> vector<16x8xf32>
    %c0_79 = arith.constant 0 : index
    %c0_80 = arith.constant 0 : index
    %c0_81 = arith.constant 0 : index
    %101 = vector.load %arg8[%c0_79, %c0_80, %c0_81] : memref<4x8x32xbf16, #tpu.memory_space<vmem>>, vector<1x8x32xbf16>
    %102 = vector.shape_cast %101 : vector<1x8x32xbf16> to vector<8x32xbf16>
    %103 = arith.truncf %100 : vector<16x8xf32> to vector<16x8xbf16>
    %cst_82 = arith.constant dense<0.000000e+00> : vector<16x32xf32>
    %104 = tpu.matmul %103, %102, %cst_82 {dimension_numbers = #tpu.dot_dimension_numbers<[1], [0], [0], [1], [0, 0, 1, 1], [], []>} : vector<16x8xbf16>, vector<8x32xbf16>, vector<16x32xf32> -> vector<16x32xf32>
    %105 = arith.addf %96, %104 : vector<16x32xf32>
    %c1_83 = arith.constant 1 : index
    %c0_84 = arith.constant 0 : index
    %c0_85 = arith.constant 0 : index
    %106 = vector.load %arg7[%c1_83, %c0_84, %c0_85] : memref<4x16x32xbf16, #tpu.memory_space<vmem>>, vector<1x16x32xbf16>
    %107 = vector.shape_cast %106 : vector<1x16x32xbf16> to vector<16x32xbf16>
    %108 = arith.truncf %95 : vector<32x8xf32> to vector<32x8xbf16>
    %cst_86 = arith.constant dense<0.000000e+00> : vector<16x8xf32>
    %109 = tpu.matmul %107, %108, %cst_86 {dimension_numbers = #tpu.dot_dimension_numbers<[1], [0], [0], [1], [0, 0, 1, 1], [], []>} : vector<16x32xbf16>, vector<32x8xbf16>, vector<16x8xf32> -> vector<16x8xf32>
    %c1_87 = arith.constant 1 : index
    %c0_88 = arith.constant 0 : index
    %c0_89 = arith.constant 0 : index
    %110 = vector.load %arg8[%c1_87, %c0_88, %c0_89] : memref<4x8x32xbf16, #tpu.memory_space<vmem>>, vector<1x8x32xbf16>
    %111 = vector.shape_cast %110 : vector<1x8x32xbf16> to vector<8x32xbf16>
    %112 = arith.truncf %109 : vector<16x8xf32> to vector<16x8xbf16>
    %cst_90 = arith.constant dense<0.000000e+00> : vector<16x32xf32>
    %113 = tpu.matmul %112, %111, %cst_90 {dimension_numbers = #tpu.dot_dimension_numbers<[1], [0], [0], [1], [0, 0, 1, 1], [], []>} : vector<16x8xbf16>, vector<8x32xbf16>, vector<16x32xf32> -> vector<16x32xf32>
    %114 = arith.addf %105, %113 : vector<16x32xf32>
    %c2_91 = arith.constant 2 : index
    %c0_92 = arith.constant 0 : index
    %c0_93 = arith.constant 0 : index
    %115 = vector.load %arg7[%c2_91, %c0_92, %c0_93] : memref<4x16x32xbf16, #tpu.memory_space<vmem>>, vector<1x16x32xbf16>
    %116 = vector.shape_cast %115 : vector<1x16x32xbf16> to vector<16x32xbf16>
    %117 = arith.truncf %95 : vector<32x8xf32> to vector<32x8xbf16>
    %cst_94 = arith.constant dense<0.000000e+00> : vector<16x8xf32>
    %118 = tpu.matmul %116, %117, %cst_94 {dimension_numbers = #tpu.dot_dimension_numbers<[1], [0], [0], [1], [0, 0, 1, 1], [], []>} : vector<16x32xbf16>, vector<32x8xbf16>, vector<16x8xf32> -> vector<16x8xf32>
    %c2_95 = arith.constant 2 : index
    %c0_96 = arith.constant 0 : index
    %c0_97 = arith.constant 0 : index
    %119 = vector.load %arg8[%c2_95, %c0_96, %c0_97] : memref<4x8x32xbf16, #tpu.memory_space<vmem>>, vector<1x8x32xbf16>
    %120 = vector.shape_cast %119 : vector<1x8x32xbf16> to vector<8x32xbf16>
    %121 = arith.truncf %118 : vector<16x8xf32> to vector<16x8xbf16>
    %cst_98 = arith.constant dense<0.000000e+00> : vector<16x32xf32>
    %122 = tpu.matmul %121, %120, %cst_98 {dimension_numbers = #tpu.dot_dimension_numbers<[1], [0], [0], [1], [0, 0, 1, 1], [], []>} : vector<16x8xbf16>, vector<8x32xbf16>, vector<16x32xf32> -> vector<16x32xf32>
    %123 = arith.addf %114, %122 : vector<16x32xf32>
    %c3_99 = arith.constant 3 : index
    %c0_100 = arith.constant 0 : index
    %c0_101 = arith.constant 0 : index
    %124 = vector.load %arg7[%c3_99, %c0_100, %c0_101] : memref<4x16x32xbf16, #tpu.memory_space<vmem>>, vector<1x16x32xbf16>
    %125 = vector.shape_cast %124 : vector<1x16x32xbf16> to vector<16x32xbf16>
    %126 = arith.truncf %95 : vector<32x8xf32> to vector<32x8xbf16>
    %cst_102 = arith.constant dense<0.000000e+00> : vector<16x8xf32>
    %127 = tpu.matmul %125, %126, %cst_102 {dimension_numbers = #tpu.dot_dimension_numbers<[1], [0], [0], [1], [0, 0, 1, 1], [], []>} : vector<16x32xbf16>, vector<32x8xbf16>, vector<16x8xf32> -> vector<16x8xf32>
    %c3_103 = arith.constant 3 : index
    %c0_104 = arith.constant 0 : index
    %c0_105 = arith.constant 0 : index
    %128 = vector.load %arg8[%c3_103, %c0_104, %c0_105] : memref<4x8x32xbf16, #tpu.memory_space<vmem>>, vector<1x8x32xbf16>
    %129 = vector.shape_cast %128 : vector<1x8x32xbf16> to vector<8x32xbf16>
    %130 = arith.truncf %127 : vector<16x8xf32> to vector<16x8xbf16>
    %cst_106 = arith.constant dense<0.000000e+00> : vector<16x32xf32>
    %131 = tpu.matmul %130, %129, %cst_106 {dimension_numbers = #tpu.dot_dimension_numbers<[1], [0], [0], [1], [0, 0, 1, 1], [], []>} : vector<16x8xbf16>, vector<8x32xbf16>, vector<16x32xf32> -> vector<16x32xf32>
    %132 = arith.addf %123, %131 : vector<16x32xf32>
    %c0_107 = arith.constant 0 : index
    %c0_108 = arith.constant 0 : index
    %133 = vector.load %arg9[%c0_107, %c0_108] : memref<16x8xbf16, #tpu.memory_space<vmem>>, vector<16x8xbf16>
    %c0_109 = arith.constant 0 : index
    %c0_110 = arith.constant 0 : index
    %134 = vector.load %arg2[%c0_109, %c0_110] : memref<8x32xf32, #tpu.memory_space<vmem>>, vector<8x32xf32>
    %135 = arith.truncf %134 : vector<8x32xf32> to vector<8x32xbf16>
    %cst_111 = arith.constant dense<0.000000e+00> : vector<16x32xf32>
    %136 = tpu.matmul %133, %135, %cst_111 {dimension_numbers = #tpu.dot_dimension_numbers<[1], [0], [0], [1], [0, 0, 1, 1], [], []>} : vector<16x8xbf16>, vector<8x32xbf16>, vector<16x32xf32> -> vector<16x32xf32>
    %137 = arith.addf %132, %136 : vector<16x32xf32>
    %c0_112 = arith.constant 0 : index
    %c0_113 = arith.constant 0 : index
    %138 = vector.load %arg10[%c0_112, %c0_113] : memref<16x32xf32, #tpu.memory_space<vmem>>, vector<16x32xf32>
    %139 = arith.addf %137, %138 : vector<16x32xf32>
    %c0_114 = arith.constant 0 : index
    %c0_115 = arith.constant 0 : index
    %140 = vector.load %arg11[%c0_114, %c0_115] : memref<64x32xf32, #tpu.memory_space<vmem>>, vector<64x32xf32>
    %c0_116 = arith.constant 0 : index
    %c0_117 = arith.constant 0 : index
    %141 = vector.load %arg12[%c0_116, %c0_117] : memref<64x16xf32, #tpu.memory_space<vmem>>, vector<64x16xf32>
    %c0_118 = arith.constant 0 : index
    %c0_119 = arith.constant 0 : index
    %c0_120 = arith.constant 0 : index
    %142 = vector.load %arg17[%c0_118, %c0_119, %c0_120] : memref<2x8x128xf32, #tpu.memory_space<vmem>>, vector<1x8x128xf32>
    %143 = vector.shape_cast %142 : vector<1x8x128xf32> to vector<8x128xf32>
    %c0_121 = arith.constant 0 : index
    %c0_122 = arith.constant 0 : index
    %c0_123 = arith.constant 0 : index
    %144 = vector.load %arg13[%c0_121, %c0_122, %c0_123] : memref<2x32x96xbf16, #tpu.memory_space<vmem>>, vector<1x32x96xbf16>
    %145 = vector.shape_cast %144 : vector<1x32x96xbf16> to vector<32x96xbf16>
    %146 = arith.truncf %139 : vector<16x32xf32> to vector<16x32xbf16>
    %cst_124 = arith.constant dense<0.000000e+00> : vector<16x96xf32>
    %147 = tpu.matmul %146, %145, %cst_124 {dimension_numbers = #tpu.dot_dimension_numbers<[1], [0], [0], [1], [0, 0, 1, 1], [], []>} : vector<16x32xbf16>, vector<32x96xbf16>, vector<16x96xf32> -> vector<16x96xf32>
    %148 = vector.extract_strided_slice %143 {offsets = [0, 0], sizes = [1, 96], strides = [1, 1]} : vector<8x128xf32> to vector<1x96xf32>
    %149 = vector.broadcast %148 : vector<1x96xf32> to vector<16x96xf32>
    %150 = arith.addf %147, %149 : vector<16x96xf32>
    %151 = vector.extract_strided_slice %150 {offsets = [0, 0], sizes = [16, 32], strides = [1, 1]} : vector<16x96xf32> to vector<16x32xf32>
    %152 = vector.extract_strided_slice %150 {offsets = [0, 32], sizes = [16, 32], strides = [1, 1]} : vector<16x96xf32> to vector<16x32xf32>
    %153 = vector.extract_strided_slice %150 {offsets = [0, 64], sizes = [16, 32], strides = [1, 1]} : vector<16x96xf32> to vector<16x32xf32>
    %154 = tpu.concatenate %151, %151, %151, %151 in 0 : vector<16x32xf32>, vector<16x32xf32>, vector<16x32xf32>, vector<16x32xf32> -> vector<64x32xf32>
    %155 = arith.mulf %154, %140 : vector<64x32xf32>
    %156 = arith.truncf %155 : vector<64x32xf32> to vector<64x32xbf16>
    %157 = arith.truncf %152 : vector<16x32xf32> to vector<16x32xbf16>
    %158 = tpu.transpose %157, [1, 0] : vector<16x32xbf16> -> vector<32x16xbf16>
    %cst_125 = arith.constant dense<0.000000e+00> : vector<64x16xf32>
    %159 = tpu.matmul %156, %158, %cst_125 {dimension_numbers = #tpu.dot_dimension_numbers<[1], [0], [0], [1], [0, 0, 1, 1], [], []>} : vector<64x32xbf16>, vector<32x16xbf16>, vector<64x16xf32> -> vector<64x16xf32>
    %cst_126 = arith.constant 0.353553385 : f32
    %160 = vector.broadcast %cst_126 : f32 to vector<64x16xf32>
    %161 = arith.mulf %159, %160 : vector<64x16xf32>
    %162 = arith.addf %161, %141 : vector<64x16xf32>
    %cst_127 = arith.constant dense<0xFF800000> : vector<64xf32>
    %163 = vector.multi_reduction <maximumf>, %162, %cst_127 [1] : vector<64x16xf32> to vector<64xf32>
    %164 = vector.shape_cast %163 : vector<64xf32> to vector<64x1xf32>
    %165 = vector.broadcast %164 : vector<64x1xf32> to vector<64x16xf32>
    %166 = arith.subf %162, %165 : vector<64x16xf32>
    %167 = math.exp %166 : vector<64x16xf32>
    %cst_128 = arith.constant dense<0.000000e+00> : vector<64xf32>
    %168 = vector.multi_reduction <add>, %167, %cst_128 [1] : vector<64x16xf32> to vector<64xf32>
    %169 = vector.shape_cast %168 : vector<64xf32> to vector<64x1xf32>
    %170 = tpu.reciprocal %169 {approx = true} : vector<64x1xf32> -> vector<64x1xf32>
    %171 = vector.broadcast %170 : vector<64x1xf32> to vector<64x16xf32>
    %172 = arith.mulf %167, %171 : vector<64x16xf32>
    %173 = arith.truncf %172 : vector<64x16xf32> to vector<64x16xbf16>
    %174 = arith.truncf %153 : vector<16x32xf32> to vector<16x32xbf16>
    %cst_129 = arith.constant dense<0.000000e+00> : vector<64x32xf32>
    %175 = tpu.matmul %173, %174, %cst_129 {dimension_numbers = #tpu.dot_dimension_numbers<[1], [0], [0], [1], [0, 0, 1, 1], [], []>} : vector<64x16xbf16>, vector<16x32xbf16>, vector<64x32xf32> -> vector<64x32xf32>
    %176 = arith.mulf %175, %140 : vector<64x32xf32>
    %177 = vector.extract_strided_slice %176 {offsets = [0, 0], sizes = [16, 32], strides = [1, 1]} : vector<64x32xf32> to vector<16x32xf32>
    %178 = vector.extract_strided_slice %176 {offsets = [16, 0], sizes = [16, 32], strides = [1, 1]} : vector<64x32xf32> to vector<16x32xf32>
    %179 = arith.addf %177, %178 : vector<16x32xf32>
    %180 = vector.extract_strided_slice %176 {offsets = [32, 0], sizes = [16, 32], strides = [1, 1]} : vector<64x32xf32> to vector<16x32xf32>
    %181 = arith.addf %179, %180 : vector<16x32xf32>
    %182 = vector.extract_strided_slice %176 {offsets = [48, 0], sizes = [16, 32], strides = [1, 1]} : vector<64x32xf32> to vector<16x32xf32>
    %183 = arith.addf %181, %182 : vector<16x32xf32>
    %c0_130 = arith.constant 0 : index
    %c0_131 = arith.constant 0 : index
    %c0_132 = arith.constant 0 : index
    %184 = vector.load %arg14[%c0_130, %c0_131, %c0_132] : memref<2x32x32xbf16, #tpu.memory_space<vmem>>, vector<1x32x32xbf16>
    %185 = vector.shape_cast %184 : vector<1x32x32xbf16> to vector<32x32xbf16>
    %186 = arith.truncf %183 : vector<16x32xf32> to vector<16x32xbf16>
    %cst_133 = arith.constant dense<0.000000e+00> : vector<16x32xf32>
    %187 = tpu.matmul %186, %185, %cst_133 {dimension_numbers = #tpu.dot_dimension_numbers<[1], [0], [0], [1], [0, 0, 1, 1], [], []>} : vector<16x32xbf16>, vector<32x32xbf16>, vector<16x32xf32> -> vector<16x32xf32>
    %188 = vector.extract_strided_slice %143 {offsets = [1, 0], sizes = [1, 32], strides = [1, 1]} : vector<8x128xf32> to vector<1x32xf32>
    %189 = vector.broadcast %188 : vector<1x32xf32> to vector<16x32xf32>
    %190 = arith.addf %187, %189 : vector<16x32xf32>
    %191 = arith.addf %139, %190 : vector<16x32xf32>
    %cst_134 = arith.constant dense<0.000000e+00> : vector<16xf32>
    %192 = vector.multi_reduction <add>, %191, %cst_134 [1] : vector<16x32xf32> to vector<16xf32>
    %193 = vector.shape_cast %192 : vector<16xf32> to vector<16x1xf32>
    %cst_135 = arith.constant 3.200000e+01 : f32
    %194 = vector.broadcast %cst_135 : f32 to vector<16x1xf32>
    %195 = arith.divf %193, %194 : vector<16x1xf32>
    %196 = vector.broadcast %195 : vector<16x1xf32> to vector<16x32xf32>
    %197 = arith.subf %191, %196 : vector<16x32xf32>
    %198 = arith.mulf %197, %197 : vector<16x32xf32>
    %cst_136 = arith.constant dense<0.000000e+00> : vector<16xf32>
    %199 = vector.multi_reduction <add>, %198, %cst_136 [1] : vector<16x32xf32> to vector<16xf32>
    %200 = vector.shape_cast %199 : vector<16xf32> to vector<16x1xf32>
    %cst_137 = arith.constant 3.200000e+01 : f32
    %201 = vector.broadcast %cst_137 : f32 to vector<16x1xf32>
    %202 = arith.divf %200, %201 : vector<16x1xf32>
    %203 = vector.broadcast %195 : vector<16x1xf32> to vector<16x32xf32>
    %204 = arith.subf %191, %203 : vector<16x32xf32>
    %cst_138 = arith.constant 9.99999974E-6 : f32
    %205 = vector.broadcast %cst_138 : f32 to vector<16x1xf32>
    %206 = arith.addf %202, %205 : vector<16x1xf32>
    %207 = math.rsqrt %206 : vector<16x1xf32>
    %208 = vector.broadcast %207 : vector<16x1xf32> to vector<16x32xf32>
    %209 = arith.mulf %204, %208 : vector<16x32xf32>
    %210 = vector.extract_strided_slice %143 {offsets = [2, 0], sizes = [1, 32], strides = [1, 1]} : vector<8x128xf32> to vector<1x32xf32>
    %211 = vector.broadcast %210 : vector<1x32xf32> to vector<16x32xf32>
    %212 = arith.mulf %209, %211 : vector<16x32xf32>
    %213 = vector.extract_strided_slice %143 {offsets = [3, 0], sizes = [1, 32], strides = [1, 1]} : vector<8x128xf32> to vector<1x32xf32>
    %214 = vector.broadcast %213 : vector<1x32xf32> to vector<16x32xf32>
    %215 = arith.addf %212, %214 : vector<16x32xf32>
    %c0_139 = arith.constant 0 : index
    %c0_140 = arith.constant 0 : index
    %c0_141 = arith.constant 0 : index
    %216 = vector.load %arg15[%c0_139, %c0_140, %c0_141] : memref<2x32x64xbf16, #tpu.memory_space<vmem>>, vector<1x32x64xbf16>
    %217 = vector.shape_cast %216 : vector<1x32x64xbf16> to vector<32x64xbf16>
    %218 = arith.truncf %215 : vector<16x32xf32> to vector<16x32xbf16>
    %cst_142 = arith.constant dense<0.000000e+00> : vector<16x64xf32>
    %219 = tpu.matmul %218, %217, %cst_142 {dimension_numbers = #tpu.dot_dimension_numbers<[1], [0], [0], [1], [0, 0, 1, 1], [], []>} : vector<16x32xbf16>, vector<32x64xbf16>, vector<16x64xf32> -> vector<16x64xf32>
    %220 = vector.extract_strided_slice %143 {offsets = [4, 0], sizes = [1, 64], strides = [1, 1]} : vector<8x128xf32> to vector<1x64xf32>
    %221 = vector.broadcast %220 : vector<1x64xf32> to vector<16x64xf32>
    %222 = arith.addf %219, %221 : vector<16x64xf32>
    %cst_143 = arith.constant 0.000000e+00 : f32
    %223 = vector.broadcast %cst_143 : f32 to vector<16x64xf32>
    %224 = arith.maximumf %222, %223 : vector<16x64xf32>
    %c0_144 = arith.constant 0 : index
    %c0_145 = arith.constant 0 : index
    %c0_146 = arith.constant 0 : index
    %225 = vector.load %arg16[%c0_144, %c0_145, %c0_146] : memref<2x64x32xbf16, #tpu.memory_space<vmem>>, vector<1x64x32xbf16>
    %226 = vector.shape_cast %225 : vector<1x64x32xbf16> to vector<64x32xbf16>
    %227 = arith.truncf %224 : vector<16x64xf32> to vector<16x64xbf16>
    %cst_147 = arith.constant dense<0.000000e+00> : vector<16x32xf32>
    %228 = tpu.matmul %227, %226, %cst_147 {dimension_numbers = #tpu.dot_dimension_numbers<[1], [0], [0], [1], [0, 0, 1, 1], [], []>} : vector<16x64xbf16>, vector<64x32xbf16>, vector<16x32xf32> -> vector<16x32xf32>
    %229 = vector.extract_strided_slice %143 {offsets = [5, 0], sizes = [1, 32], strides = [1, 1]} : vector<8x128xf32> to vector<1x32xf32>
    %230 = vector.broadcast %229 : vector<1x32xf32> to vector<16x32xf32>
    %231 = arith.addf %228, %230 : vector<16x32xf32>
    %232 = arith.addf %215, %231 : vector<16x32xf32>
    %cst_148 = arith.constant dense<0.000000e+00> : vector<16xf32>
    %233 = vector.multi_reduction <add>, %232, %cst_148 [1] : vector<16x32xf32> to vector<16xf32>
    %234 = vector.shape_cast %233 : vector<16xf32> to vector<16x1xf32>
    %cst_149 = arith.constant 3.200000e+01 : f32
    %235 = vector.broadcast %cst_149 : f32 to vector<16x1xf32>
    %236 = arith.divf %234, %235 : vector<16x1xf32>
    %237 = vector.broadcast %236 : vector<16x1xf32> to vector<16x32xf32>
    %238 = arith.subf %232, %237 : vector<16x32xf32>
    %239 = arith.mulf %238, %238 : vector<16x32xf32>
    %cst_150 = arith.constant dense<0.000000e+00> : vector<16xf32>
    %240 = vector.multi_reduction <add>, %239, %cst_150 [1] : vector<16x32xf32> to vector<16xf32>
    %241 = vector.shape_cast %240 : vector<16xf32> to vector<16x1xf32>
    %cst_151 = arith.constant 3.200000e+01 : f32
    %242 = vector.broadcast %cst_151 : f32 to vector<16x1xf32>
    %243 = arith.divf %241, %242 : vector<16x1xf32>
    %244 = vector.broadcast %236 : vector<16x1xf32> to vector<16x32xf32>
    %245 = arith.subf %232, %244 : vector<16x32xf32>
    %cst_152 = arith.constant 9.99999974E-6 : f32
    %246 = vector.broadcast %cst_152 : f32 to vector<16x1xf32>
    %247 = arith.addf %243, %246 : vector<16x1xf32>
    %248 = math.rsqrt %247 : vector<16x1xf32>
    %249 = vector.broadcast %248 : vector<16x1xf32> to vector<16x32xf32>
    %250 = arith.mulf %245, %249 : vector<16x32xf32>
    %251 = vector.extract_strided_slice %143 {offsets = [6, 0], sizes = [1, 32], strides = [1, 1]} : vector<8x128xf32> to vector<1x32xf32>
    %252 = vector.broadcast %251 : vector<1x32xf32> to vector<16x32xf32>
    %253 = arith.mulf %250, %252 : vector<16x32xf32>
    %254 = vector.extract_strided_slice %143 {offsets = [7, 0], sizes = [1, 32], strides = [1, 1]} : vector<8x128xf32> to vector<1x32xf32>
    %255 = vector.broadcast %254 : vector<1x32xf32> to vector<16x32xf32>
    %256 = arith.addf %253, %255 : vector<16x32xf32>
    %c1_153 = arith.constant 1 : index
    %c0_154 = arith.constant 0 : index
    %c0_155 = arith.constant 0 : index
    %257 = vector.load %arg17[%c1_153, %c0_154, %c0_155] : memref<2x8x128xf32, #tpu.memory_space<vmem>>, vector<1x8x128xf32>
    %258 = vector.shape_cast %257 : vector<1x8x128xf32> to vector<8x128xf32>
    %c1_156 = arith.constant 1 : index
    %c0_157 = arith.constant 0 : index
    %c0_158 = arith.constant 0 : index
    %259 = vector.load %arg13[%c1_156, %c0_157, %c0_158] : memref<2x32x96xbf16, #tpu.memory_space<vmem>>, vector<1x32x96xbf16>
    %260 = vector.shape_cast %259 : vector<1x32x96xbf16> to vector<32x96xbf16>
    %261 = arith.truncf %256 : vector<16x32xf32> to vector<16x32xbf16>
    %cst_159 = arith.constant dense<0.000000e+00> : vector<16x96xf32>
    %262 = tpu.matmul %261, %260, %cst_159 {dimension_numbers = #tpu.dot_dimension_numbers<[1], [0], [0], [1], [0, 0, 1, 1], [], []>} : vector<16x32xbf16>, vector<32x96xbf16>, vector<16x96xf32> -> vector<16x96xf32>
    %263 = vector.extract_strided_slice %258 {offsets = [0, 0], sizes = [1, 96], strides = [1, 1]} : vector<8x128xf32> to vector<1x96xf32>
    %264 = vector.broadcast %263 : vector<1x96xf32> to vector<16x96xf32>
    %265 = arith.addf %262, %264 : vector<16x96xf32>
    %266 = vector.extract_strided_slice %265 {offsets = [0, 0], sizes = [16, 32], strides = [1, 1]} : vector<16x96xf32> to vector<16x32xf32>
    %267 = vector.extract_strided_slice %265 {offsets = [0, 32], sizes = [16, 32], strides = [1, 1]} : vector<16x96xf32> to vector<16x32xf32>
    %268 = vector.extract_strided_slice %265 {offsets = [0, 64], sizes = [16, 32], strides = [1, 1]} : vector<16x96xf32> to vector<16x32xf32>
    %269 = tpu.concatenate %266, %266, %266, %266 in 0 : vector<16x32xf32>, vector<16x32xf32>, vector<16x32xf32>, vector<16x32xf32> -> vector<64x32xf32>
    %270 = arith.mulf %269, %140 : vector<64x32xf32>
    %271 = arith.truncf %270 : vector<64x32xf32> to vector<64x32xbf16>
    %272 = arith.truncf %267 : vector<16x32xf32> to vector<16x32xbf16>
    %273 = tpu.transpose %272, [1, 0] : vector<16x32xbf16> -> vector<32x16xbf16>
    %cst_160 = arith.constant dense<0.000000e+00> : vector<64x16xf32>
    %274 = tpu.matmul %271, %273, %cst_160 {dimension_numbers = #tpu.dot_dimension_numbers<[1], [0], [0], [1], [0, 0, 1, 1], [], []>} : vector<64x32xbf16>, vector<32x16xbf16>, vector<64x16xf32> -> vector<64x16xf32>
    %cst_161 = arith.constant 0.353553385 : f32
    %275 = vector.broadcast %cst_161 : f32 to vector<64x16xf32>
    %276 = arith.mulf %274, %275 : vector<64x16xf32>
    %277 = arith.addf %276, %141 : vector<64x16xf32>
    %cst_162 = arith.constant dense<0xFF800000> : vector<64xf32>
    %278 = vector.multi_reduction <maximumf>, %277, %cst_162 [1] : vector<64x16xf32> to vector<64xf32>
    %279 = vector.shape_cast %278 : vector<64xf32> to vector<64x1xf32>
    %280 = vector.broadcast %279 : vector<64x1xf32> to vector<64x16xf32>
    %281 = arith.subf %277, %280 : vector<64x16xf32>
    %282 = math.exp %281 : vector<64x16xf32>
    %cst_163 = arith.constant dense<0.000000e+00> : vector<64xf32>
    %283 = vector.multi_reduction <add>, %282, %cst_163 [1] : vector<64x16xf32> to vector<64xf32>
    %284 = vector.shape_cast %283 : vector<64xf32> to vector<64x1xf32>
    %285 = tpu.reciprocal %284 {approx = true} : vector<64x1xf32> -> vector<64x1xf32>
    %286 = vector.broadcast %285 : vector<64x1xf32> to vector<64x16xf32>
    %287 = arith.mulf %282, %286 : vector<64x16xf32>
    %288 = arith.truncf %287 : vector<64x16xf32> to vector<64x16xbf16>
    %289 = arith.truncf %268 : vector<16x32xf32> to vector<16x32xbf16>
    %cst_164 = arith.constant dense<0.000000e+00> : vector<64x32xf32>
    %290 = tpu.matmul %288, %289, %cst_164 {dimension_numbers = #tpu.dot_dimension_numbers<[1], [0], [0], [1], [0, 0, 1, 1], [], []>} : vector<64x16xbf16>, vector<16x32xbf16>, vector<64x32xf32> -> vector<64x32xf32>
    %291 = arith.mulf %290, %140 : vector<64x32xf32>
    %292 = vector.extract_strided_slice %291 {offsets = [0, 0], sizes = [16, 32], strides = [1, 1]} : vector<64x32xf32> to vector<16x32xf32>
    %293 = vector.extract_strided_slice %291 {offsets = [16, 0], sizes = [16, 32], strides = [1, 1]} : vector<64x32xf32> to vector<16x32xf32>
    %294 = arith.addf %292, %293 : vector<16x32xf32>
    %295 = vector.extract_strided_slice %291 {offsets = [32, 0], sizes = [16, 32], strides = [1, 1]} : vector<64x32xf32> to vector<16x32xf32>
    %296 = arith.addf %294, %295 : vector<16x32xf32>
    %297 = vector.extract_strided_slice %291 {offsets = [48, 0], sizes = [16, 32], strides = [1, 1]} : vector<64x32xf32> to vector<16x32xf32>
    %298 = arith.addf %296, %297 : vector<16x32xf32>
    %c1_165 = arith.constant 1 : index
    %c0_166 = arith.constant 0 : index
    %c0_167 = arith.constant 0 : index
    %299 = vector.load %arg14[%c1_165, %c0_166, %c0_167] : memref<2x32x32xbf16, #tpu.memory_space<vmem>>, vector<1x32x32xbf16>
    %300 = vector.shape_cast %299 : vector<1x32x32xbf16> to vector<32x32xbf16>
    %301 = arith.truncf %298 : vector<16x32xf32> to vector<16x32xbf16>
    %cst_168 = arith.constant dense<0.000000e+00> : vector<16x32xf32>
    %302 = tpu.matmul %301, %300, %cst_168 {dimension_numbers = #tpu.dot_dimension_numbers<[1], [0], [0], [1], [0, 0, 1, 1], [], []>} : vector<16x32xbf16>, vector<32x32xbf16>, vector<16x32xf32> -> vector<16x32xf32>
    %303 = vector.extract_strided_slice %258 {offsets = [1, 0], sizes = [1, 32], strides = [1, 1]} : vector<8x128xf32> to vector<1x32xf32>
    %304 = vector.broadcast %303 : vector<1x32xf32> to vector<16x32xf32>
    %305 = arith.addf %302, %304 : vector<16x32xf32>
    %306 = arith.addf %256, %305 : vector<16x32xf32>
    %cst_169 = arith.constant dense<0.000000e+00> : vector<16xf32>
    %307 = vector.multi_reduction <add>, %306, %cst_169 [1] : vector<16x32xf32> to vector<16xf32>
    %308 = vector.shape_cast %307 : vector<16xf32> to vector<16x1xf32>
    %cst_170 = arith.constant 3.200000e+01 : f32
    %309 = vector.broadcast %cst_170 : f32 to vector<16x1xf32>
    %310 = arith.divf %308, %309 : vector<16x1xf32>
    %311 = vector.broadcast %310 : vector<16x1xf32> to vector<16x32xf32>
    %312 = arith.subf %306, %311 : vector<16x32xf32>
    %313 = arith.mulf %312, %312 : vector<16x32xf32>
    %cst_171 = arith.constant dense<0.000000e+00> : vector<16xf32>
    %314 = vector.multi_reduction <add>, %313, %cst_171 [1] : vector<16x32xf32> to vector<16xf32>
    %315 = vector.shape_cast %314 : vector<16xf32> to vector<16x1xf32>
    %cst_172 = arith.constant 3.200000e+01 : f32
    %316 = vector.broadcast %cst_172 : f32 to vector<16x1xf32>
    %317 = arith.divf %315, %316 : vector<16x1xf32>
    %318 = vector.broadcast %310 : vector<16x1xf32> to vector<16x32xf32>
    %319 = arith.subf %306, %318 : vector<16x32xf32>
    %cst_173 = arith.constant 9.99999974E-6 : f32
    %320 = vector.broadcast %cst_173 : f32 to vector<16x1xf32>
    %321 = arith.addf %317, %320 : vector<16x1xf32>
    %322 = math.rsqrt %321 : vector<16x1xf32>
    %323 = vector.broadcast %322 : vector<16x1xf32> to vector<16x32xf32>
    %324 = arith.mulf %319, %323 : vector<16x32xf32>
    %325 = vector.extract_strided_slice %258 {offsets = [2, 0], sizes = [1, 32], strides = [1, 1]} : vector<8x128xf32> to vector<1x32xf32>
    %326 = vector.broadcast %325 : vector<1x32xf32> to vector<16x32xf32>
    %327 = arith.mulf %324, %326 : vector<16x32xf32>
    %328 = vector.extract_strided_slice %258 {offsets = [3, 0], sizes = [1, 32], strides = [1, 1]} : vector<8x128xf32> to vector<1x32xf32>
    %329 = vector.broadcast %328 : vector<1x32xf32> to vector<16x32xf32>
    %330 = arith.addf %327, %329 : vector<16x32xf32>
    %c1_174 = arith.constant 1 : index
    %c0_175 = arith.constant 0 : index
    %c0_176 = arith.constant 0 : index
    %331 = vector.load %arg15[%c1_174, %c0_175, %c0_176] : memref<2x32x64xbf16, #tpu.memory_space<vmem>>, vector<1x32x64xbf16>
    %332 = vector.shape_cast %331 : vector<1x32x64xbf16> to vector<32x64xbf16>
    %333 = arith.truncf %330 : vector<16x32xf32> to vector<16x32xbf16>
    %cst_177 = arith.constant dense<0.000000e+00> : vector<16x64xf32>
    %334 = tpu.matmul %333, %332, %cst_177 {dimension_numbers = #tpu.dot_dimension_numbers<[1], [0], [0], [1], [0, 0, 1, 1], [], []>} : vector<16x32xbf16>, vector<32x64xbf16>, vector<16x64xf32> -> vector<16x64xf32>
    %335 = vector.extract_strided_slice %258 {offsets = [4, 0], sizes = [1, 64], strides = [1, 1]} : vector<8x128xf32> to vector<1x64xf32>
    %336 = vector.broadcast %335 : vector<1x64xf32> to vector<16x64xf32>
    %337 = arith.addf %334, %336 : vector<16x64xf32>
    %cst_178 = arith.constant 0.000000e+00 : f32
    %338 = vector.broadcast %cst_178 : f32 to vector<16x64xf32>
    %339 = arith.maximumf %337, %338 : vector<16x64xf32>
    %c1_179 = arith.constant 1 : index
    %c0_180 = arith.constant 0 : index
    %c0_181 = arith.constant 0 : index
    %340 = vector.load %arg16[%c1_179, %c0_180, %c0_181] : memref<2x64x32xbf16, #tpu.memory_space<vmem>>, vector<1x64x32xbf16>
    %341 = vector.shape_cast %340 : vector<1x64x32xbf16> to vector<64x32xbf16>
    %342 = arith.truncf %339 : vector<16x64xf32> to vector<16x64xbf16>
    %cst_182 = arith.constant dense<0.000000e+00> : vector<16x32xf32>
    %343 = tpu.matmul %342, %341, %cst_182 {dimension_numbers = #tpu.dot_dimension_numbers<[1], [0], [0], [1], [0, 0, 1, 1], [], []>} : vector<16x64xbf16>, vector<64x32xbf16>, vector<16x32xf32> -> vector<16x32xf32>
    %344 = vector.extract_strided_slice %258 {offsets = [5, 0], sizes = [1, 32], strides = [1, 1]} : vector<8x128xf32> to vector<1x32xf32>
    %345 = vector.broadcast %344 : vector<1x32xf32> to vector<16x32xf32>
    %346 = arith.addf %343, %345 : vector<16x32xf32>
    %347 = arith.addf %330, %346 : vector<16x32xf32>
    %cst_183 = arith.constant dense<0.000000e+00> : vector<16xf32>
    %348 = vector.multi_reduction <add>, %347, %cst_183 [1] : vector<16x32xf32> to vector<16xf32>
    %349 = vector.shape_cast %348 : vector<16xf32> to vector<16x1xf32>
    %cst_184 = arith.constant 3.200000e+01 : f32
    %350 = vector.broadcast %cst_184 : f32 to vector<16x1xf32>
    %351 = arith.divf %349, %350 : vector<16x1xf32>
    %352 = vector.broadcast %351 : vector<16x1xf32> to vector<16x32xf32>
    %353 = arith.subf %347, %352 : vector<16x32xf32>
    %354 = arith.mulf %353, %353 : vector<16x32xf32>
    %cst_185 = arith.constant dense<0.000000e+00> : vector<16xf32>
    %355 = vector.multi_reduction <add>, %354, %cst_185 [1] : vector<16x32xf32> to vector<16xf32>
    %356 = vector.shape_cast %355 : vector<16xf32> to vector<16x1xf32>
    %cst_186 = arith.constant 3.200000e+01 : f32
    %357 = vector.broadcast %cst_186 : f32 to vector<16x1xf32>
    %358 = arith.divf %356, %357 : vector<16x1xf32>
    %359 = vector.broadcast %351 : vector<16x1xf32> to vector<16x32xf32>
    %360 = arith.subf %347, %359 : vector<16x32xf32>
    %cst_187 = arith.constant 9.99999974E-6 : f32
    %361 = vector.broadcast %cst_187 : f32 to vector<16x1xf32>
    %362 = arith.addf %358, %361 : vector<16x1xf32>
    %363 = math.rsqrt %362 : vector<16x1xf32>
    %364 = vector.broadcast %363 : vector<16x1xf32> to vector<16x32xf32>
    %365 = arith.mulf %360, %364 : vector<16x32xf32>
    %366 = vector.extract_strided_slice %258 {offsets = [6, 0], sizes = [1, 32], strides = [1, 1]} : vector<8x128xf32> to vector<1x32xf32>
    %367 = vector.broadcast %366 : vector<1x32xf32> to vector<16x32xf32>
    %368 = arith.mulf %365, %367 : vector<16x32xf32>
    %369 = vector.extract_strided_slice %258 {offsets = [7, 0], sizes = [1, 32], strides = [1, 1]} : vector<8x128xf32> to vector<1x32xf32>
    %370 = vector.broadcast %369 : vector<1x32xf32> to vector<16x32xf32>
    %371 = arith.addf %368, %370 : vector<16x32xf32>
    %c0_188 = arith.constant 0 : index
    %c0_189 = arith.constant 0 : index
    %372 = vector.load %arg18[%c0_188, %c0_189] : memref<8x16xbf16, #tpu.memory_space<vmem>>, vector<8x16xbf16>
    %373 = arith.truncf %371 : vector<16x32xf32> to vector<16x32xbf16>
    %cst_190 = arith.constant dense<0.000000e+00> : vector<8x32xf32>
    %374 = tpu.matmul %372, %373, %cst_190 {dimension_numbers = #tpu.dot_dimension_numbers<[1], [0], [0], [1], [0, 0, 1, 1], [], []>} : vector<8x16xbf16>, vector<16x32xbf16>, vector<8x32xf32> -> vector<8x32xf32>
    %c0_191 = arith.constant 0 : index
    %c0_192 = arith.constant 0 : index
    %375 = vector.load %arg19[%c0_191, %c0_192] : memref<8x16xbf16, #tpu.memory_space<vmem>>, vector<8x16xbf16>
    %376 = arith.truncf %371 : vector<16x32xf32> to vector<16x32xbf16>
    %cst_193 = arith.constant dense<0.000000e+00> : vector<8x32xf32>
    %377 = tpu.matmul %375, %376, %cst_193 {dimension_numbers = #tpu.dot_dimension_numbers<[1], [0], [0], [1], [0, 0, 1, 1], [], []>} : vector<8x16xbf16>, vector<16x32xbf16>, vector<8x32xf32> -> vector<8x32xf32>
    %378 = arith.truncf %374 : vector<8x32xf32> to vector<8x32xbf16>
    %379 = arith.truncf %377 : vector<8x32xf32> to vector<8x32xbf16>
    %380 = tpu.transpose %379, [1, 0] : vector<8x32xbf16> -> vector<32x8xbf16>
    %cst_194 = arith.constant dense<0.000000e+00> : vector<8x8xf32>
    %381 = tpu.matmul %378, %380, %cst_194 {dimension_numbers = #tpu.dot_dimension_numbers<[1], [0], [0], [1], [0, 0, 1, 1], [], []>} : vector<8x32xbf16>, vector<32x8xbf16>, vector<8x8xf32> -> vector<8x8xf32>
    %cst_195 = arith.constant 0.176776692 : f32
    %382 = vector.broadcast %cst_195 : f32 to vector<8x8xf32>
    %383 = arith.mulf %381, %382 : vector<8x8xf32>
    %c0_196 = arith.constant 0 : index
    %c0_197 = arith.constant 0 : index
    %384 = vector.load %arg20[%c0_196, %c0_197] : memref<8x8xf32, #tpu.memory_space<vmem>>, vector<8x8xf32>
    %385 = arith.addf %383, %384 : vector<8x8xf32>
    %cst_198 = arith.constant dense<0xFF800000> : vector<8xf32>
    %386 = vector.multi_reduction <maximumf>, %385, %cst_198 [1] : vector<8x8xf32> to vector<8xf32>
    %387 = vector.shape_cast %386 : vector<8xf32> to vector<8x1xf32>
    %388 = vector.broadcast %387 : vector<8x1xf32> to vector<8x8xf32>
    %389 = arith.subf %385, %388 : vector<8x8xf32>
    %390 = math.exp %389 : vector<8x8xf32>
    %cst_199 = arith.constant dense<0.000000e+00> : vector<8xf32>
    %391 = vector.multi_reduction <add>, %390, %cst_199 [1] : vector<8x8xf32> to vector<8xf32>
    %392 = vector.shape_cast %391 : vector<8xf32> to vector<8x1xf32>
    %393 = vector.broadcast %392 : vector<8x1xf32> to vector<8x8xf32>
    %394 = arith.divf %390, %393 : vector<8x8xf32>
    %c0_200 = arith.constant 0 : index
    %c0_201 = arith.constant 0 : index
    %395 = vector.load %arg21[%c0_200, %c0_201] : memref<8x128xf32, #tpu.memory_space<vmem>>, vector<8x128xf32>
    %cst_202 = arith.constant dense<0.000000e+00> : vector<8x128xf32>
    %396 = tpu.matmul %394, %395, %cst_202 {dimension_numbers = #tpu.dot_dimension_numbers<[1], [0], [0], [1], [0, 0, 1, 1], [], []>} : vector<8x8xf32>, vector<8x128xf32>, vector<8x128xf32> -> vector<8x128xf32>
    %c0_203 = arith.constant 0 : index
    %c0_204 = arith.constant 0 : index
    %397 = vector.load %arg22[%c0_203, %c0_204] : memref<8x128xf32, #tpu.memory_space<vmem>>, vector<8x128xf32>
    tpu.vector_store %arg22[%c0_203, %c0_204], %396 {strides = array<i32>} : memref<8x128xf32, #tpu.memory_space<vmem>>, vector<8x128xf32>,
    return
  }
  func.func @transform_0(%arg0: i32) -> (i32, i32) {
    %c0_i32 = arith.constant 0 : i32
    %c0_i32_0 = arith.constant 0 : i32
    return %arg0, %c0_i32 : i32, i32
  }
  func.func @transform_1(%arg0: i32) -> (i32, i32) {
    %c0_i32 = arith.constant 0 : i32
    %c0_i32_0 = arith.constant 0 : i32
    return %arg0, %c0_i32 : i32, i32
  }
  func.func @transform_2(%arg0: i32) -> (i32, i32) {
    %c0_i32 = arith.constant 0 : i32
    %c0_i32_0 = arith.constant 0 : i32
    %c0_i32_1 = arith.constant 0 : i32
    return %c0_i32, %c0_i32_0 : i32, i32
  }
  func.func @transform_3(%arg0: i32) -> (i32, i32) {
    %c0_i32 = arith.constant 0 : i32
    %c0_i32_0 = arith.constant 0 : i32
    %c0_i32_1 = arith.constant 0 : i32
    return %c0_i32, %c0_i32_0 : i32, i32
  }
  func.func @transform_4(%arg0: i32) -> (i32, i32, i32) {
    %c0_i32 = arith.constant 0 : i32
    %c0_i32_0 = arith.constant 0 : i32
    %c0_i32_1 = arith.constant 0 : i32
    %c0_i32_2 = arith.constant 0 : i32
    return %c0_i32, %c0_i32_0, %c0_i32_1 : i32, i32, i32
  }
  func.func @transform_5(%arg0: i32) -> (i32, i32, i32) {
    %c0_i32 = arith.constant 0 : i32
    %c0_i32_0 = arith.constant 0 : i32
    %c0_i32_1 = arith.constant 0 : i32
    %c0_i32_2 = arith.constant 0 : i32
    return %c0_i32, %c0_i32_0, %c0_i32_1 : i32, i32, i32
  }
  func.func @transform_6(%arg0: i32) -> (i32, i32, i32) {
    %c0_i32 = arith.constant 0 : i32
    %c0_i32_0 = arith.constant 0 : i32
    %c0_i32_1 = arith.constant 0 : i32
    %c0_i32_2 = arith.constant 0 : i32
    return %c0_i32, %c0_i32_0, %c0_i32_1 : i32, i32, i32
  }
  func.func @transform_7(%arg0: i32) -> (i32, i32, i32) {
    %c0_i32 = arith.constant 0 : i32
    %c0_i32_0 = arith.constant 0 : i32
    %c0_i32_1 = arith.constant 0 : i32
    %c0_i32_2 = arith.constant 0 : i32
    return %c0_i32, %c0_i32_0, %c0_i32_1 : i32, i32, i32
  }
  func.func @transform_8(%arg0: i32) -> (i32, i32) {
    %c0_i32 = arith.constant 0 : i32
    %c0_i32_0 = arith.constant 0 : i32
    %c0_i32_1 = arith.constant 0 : i32
    return %c0_i32, %c0_i32_0 : i32, i32
  }
  func.func @transform_9(%arg0: i32) -> (i32, i32) {
    %c0_i32 = arith.constant 0 : i32
    %c0_i32_0 = arith.constant 0 : i32
    %c0_i32_1 = arith.constant 0 : i32
    return %c0_i32, %c0_i32_0 : i32, i32
  }
  func.func @transform_10(%arg0: i32) -> (i32, i32) {
    %c0_i32 = arith.constant 0 : i32
    %c0_i32_0 = arith.constant 0 : i32
    %c0_i32_1 = arith.constant 0 : i32
    return %c0_i32, %c0_i32_0 : i32, i32
  }
  func.func @transform_11(%arg0: i32) -> (i32, i32) {
    %c0_i32 = arith.constant 0 : i32
    %c0_i32_0 = arith.constant 0 : i32
    %c0_i32_1 = arith.constant 0 : i32
    return %c0_i32, %c0_i32_0 : i32, i32
  }
  func.func @transform_12(%arg0: i32) -> (i32, i32, i32) {
    %c0_i32 = arith.constant 0 : i32
    %c0_i32_0 = arith.constant 0 : i32
    %c0_i32_1 = arith.constant 0 : i32
    %c0_i32_2 = arith.constant 0 : i32
    return %c0_i32, %c0_i32_0, %c0_i32_1 : i32, i32, i32
  }
  func.func @transform_13(%arg0: i32) -> (i32, i32, i32) {
    %c0_i32 = arith.constant 0 : i32
    %c0_i32_0 = arith.constant 0 : i32
    %c0_i32_1 = arith.constant 0 : i32
    %c0_i32_2 = arith.constant 0 : i32
    return %c0_i32, %c0_i32_0, %c0_i32_1 : i32, i32, i32
  }
  func.func @transform_14(%arg0: i32) -> (i32, i32, i32) {
    %c0_i32 = arith.constant 0 : i32
    %c0_i32_0 = arith.constant 0 : i32
    %c0_i32_1 = arith.constant 0 : i32
    %c0_i32_2 = arith.constant 0 : i32
    return %c0_i32, %c0_i32_0, %c0_i32_1 : i32, i32, i32
  }
  func.func @transform_15(%arg0: i32) -> (i32, i32, i32) {
    %c0_i32 = arith.constant 0 : i32
    %c0_i32_0 = arith.constant 0 : i32
    %c0_i32_1 = arith.constant 0 : i32
    %c0_i32_2 = arith.constant 0 : i32
    return %c0_i32, %c0_i32_0, %c0_i32_1 : i32, i32, i32
  }
  func.func @transform_16(%arg0: i32) -> (i32, i32, i32) {
    %c0_i32 = arith.constant 0 : i32
    %c0_i32_0 = arith.constant 0 : i32
    %c0_i32_1 = arith.constant 0 : i32
    %c0_i32_2 = arith.constant 0 : i32
    return %c0_i32, %c0_i32_0, %c0_i32_1 : i32, i32, i32
  }
  func.func @transform_17(%arg0: i32) -> (i32, i32) {
    %c0_i32 = arith.constant 0 : i32
    %c0_i32_0 = arith.constant 0 : i32
    %c0_i32_1 = arith.constant 0 : i32
    return %c0_i32, %c0_i32_0 : i32, i32
  }
  func.func @transform_18(%arg0: i32) -> (i32, i32) {
    %c0_i32 = arith.constant 0 : i32
    %c0_i32_0 = arith.constant 0 : i32
    %c0_i32_1 = arith.constant 0 : i32
    return %c0_i32, %c0_i32_0 : i32, i32
  }
  func.func @transform_19(%arg0: i32) -> (i32, i32) {
    %c0_i32 = arith.constant 0 : i32
    %c0_i32_0 = arith.constant 0 : i32
    %c0_i32_1 = arith.constant 0 : i32
    return %c0_i32, %c0_i32_0 : i32, i32
  }
  func.func @transform_20(%arg0: i32) -> (i32, i32) {
    %c0_i32 = arith.constant 0 : i32
    %c0_i32_0 = arith.constant 0 : i32
    %c0_i32_1 = arith.constant 0 : i32
    return %c0_i32, %c0_i32_0 : i32, i32
  }
  func.func @transform_21(%arg0: i32) -> (i32, i32) {
    %c0_i32 = arith.constant 0 : i32
    %c0_i32_0 = arith.constant 0 : i32
    return %arg0, %c0_i32 : i32, i32
  }
}

</mosaic_0001>

<llo_original>
// kernel: tpu_custom_call.1
$region0: #{tpu_custom_call.1}
  #allocation0 [shape = 'u32[]', space=smem, size = 0x4, offset = 0x4, fixed_abs, tag = 'smem constant byte address 0x4 - core index']
  #allocation1 [shape = 'u32[144,128]{1,0:T(1,128)}', space=vmem, size = 0x12000, scoped, tag = 'internal scratch']
  %s0 = inlined_call_operand.vmem [shape: f32[256,9], index: 0, kind: input, shape index: {}]
  %s1 = inlined_call_operand.vmem [shape: f32[16,32], index: 1, kind: input, shape index: {}]
  %s2 = inlined_call_operand.vmem [shape: bf16[9,8], index: 2, kind: input, shape index: {}]
  %s3 = inlined_call_operand.vmem [shape: f32[8,128], index: 3, kind: input, shape index: {}]
  %s4 = inlined_call_operand.vmem [shape: bf16[9,32,128], index: 4, kind: input, shape index: {}]
  %s5 = inlined_call_operand.vmem [shape: bf16[9,8,8], index: 5, kind: input, shape index: {}]
  %s6 = inlined_call_operand.vmem [shape: bf16[4,16,32], index: 6, kind: input, shape index: {}]
  %s7 = inlined_call_operand.vmem [shape: bf16[4,8,32], index: 7, kind: input, shape index: {}]
  %s8 = inlined_call_operand.vmem [shape: bf16[16,8], index: 8, kind: input, shape index: {}]
  %s9 = inlined_call_operand.vmem [shape: f32[16,32], index: 9, kind: input, shape index: {}]
  %s10 = inlined_call_operand.vmem [shape: f32[64,32], index: 10, kind: input, shape index: {}]
  %s11 = inlined_call_operand.vmem [shape: f32[64,16], index: 11, kind: input, shape index: {}]
  %s12 = inlined_call_operand.vmem [shape: bf16[2,32,96], index: 12, kind: input, shape index: {}]
  %s13 = inlined_call_operand.vmem [shape: bf16[2,32,32], index: 13, kind: input, shape index: {}]
  %s14 = inlined_call_operand.vmem [shape: bf16[2,32,64], index: 14, kind: input, shape index: {}]
  %s15 = inlined_call_operand.vmem [shape: bf16[2,64,32], index: 15, kind: input, shape index: {}]
  %s16 = inlined_call_operand.vmem [shape: f32[2,8,128], index: 16, kind: input, shape index: {}]
  %s17 = inlined_call_operand.vmem [shape: bf16[8,16], index: 17, kind: input, shape index: {}]
  %s18 = inlined_call_operand.vmem [shape: bf16[8,16], index: 18, kind: input, shape index: {}]
  %s19 = inlined_call_operand.vmem [shape: f32[8,8], index: 19, kind: input, shape index: {}]
  %s20 = inlined_call_operand.vmem [shape: f32[8,128], index: 20, kind: input, shape index: {}]
  %s21 = inlined_call_operand.hbm [shape: f32[16,128], index: 21, kind: output, shape index: {}]
  %s22 = sld [smem:[#allocation0]]
  $region117: #{tpu_custom_call.1} parent=0
    _
  %s24 = ssub.s32 1, %s22
  %s25 = scalar_select 0, %s24, %s22
  $region1: #{tpu_custom_call.1} parent=0
    #allocation2 [shape = 'u8[8192]{0}', space=vmem, size = 0x2000, scoped, tag = 'output window, operand 0']
    #allocation3 [shape = 's32[2]{0}', space=sflag, size = 0x8, scoped, tag = 'scoped memory for tpu_custom_call.1']
    %26 = vsyncpa [#allocation3], 0
    %s27 = scalar_lea.sflag [#allocation3], 1
    %28 = vsyncpa %s27, 0
    loop: start=0, step=1, limit=4
    $region2: #{tpu_custom_call.1} parent=1 // loop_pre_header
      _
    $region3: #{tpu_custom_call.1} parent=1 // loop_header
      %s30 = sphi 0, %s34
      %p31 = scmp.ge.s32.totalorder %s30, 4
      %s40 = sphi 0, %s42
      %s43 = sphi 0, %s40
      %s44 = sphi 0, %s43
      %s60 = sphi 0, %s44
      %s66 = sphi 0, %s68
      %s69 = sphi 0, %s66
      %s70 = sphi 0, %s69
      %s86 = sphi 0, %s70
      %s90 = sphi 0, %s90
      %s92 = sphi 0, %s90
      %s93 = sphi 0, %s92
      %s107 = sphi 0, %s93
      %s111 = sphi 0, %s111
      %s113 = sphi 0, %s111
      %s114 = sphi 0, %s113
      %s128 = sphi 0, %s114
      %s132 = sphi 0, %s132
      %s134 = sphi 0, %s132
      %s135 = sphi 0, %s134
      %s149 = sphi 0, %s135
      %s153 = sphi 0, %s153
      %s155 = sphi 0, %s153
      %s156 = sphi 0, %s155
      %s170 = sphi 0, %s156
      %s174 = sphi 0, %s174
      %s176 = sphi 0, %s174
      %s177 = sphi 0, %s176
      %s191 = sphi 0, %s177
      %s195 = sphi 0, %s195
      %s197 = sphi 0, %s195
      %s198 = sphi 0, %s197
      %s212 = sphi 0, %s198
      %s216 = sphi 0, %s216
      %s218 = sphi 0, %s216
      %s219 = sphi 0, %s218
      %s233 = sphi 0, %s219
      %s237 = sphi 0, %s237
      %s239 = sphi 0, %s237
      %s240 = sphi 0, %s239
      %s254 = sphi 0, %s240
      %s258 = sphi 0, %s258
      %s260 = sphi 0, %s258
      %s261 = sphi 0, %s260
      %s275 = sphi 0, %s261
      %s279 = sphi 0, %s279
      %s281 = sphi 0, %s279
      %s282 = sphi 0, %s281
      %s296 = sphi 0, %s282
      %s300 = sphi 0, %s300
      %s302 = sphi 0, %s300
      %s303 = sphi 0, %s302
      %s317 = sphi 0, %s303
      %s321 = sphi 0, %s321
      %s323 = sphi 0, %s321
      %s324 = sphi 0, %s323
      %s338 = sphi 0, %s324
      %s342 = sphi 0, %s342
      %s344 = sphi 0, %s342
      %s345 = sphi 0, %s344
      %s359 = sphi 0, %s345
      %s363 = sphi 0, %s363
      %s365 = sphi 0, %s363
      %s366 = sphi 0, %s365
      %s380 = sphi 0, %s366
      %s384 = sphi 0, %s384
      %s386 = sphi 0, %s384
      %s387 = sphi 0, %s386
      %s401 = sphi 0, %s387
      %s405 = sphi 0, %s405
      %s407 = sphi 0, %s405
      %s408 = sphi 0, %s407
      %s422 = sphi 0, %s408
      %s426 = sphi 0, %s426
      %s428 = sphi 0, %s426
      %s429 = sphi 0, %s428
      %s443 = sphi 0, %s429
      %s447 = sphi 0, %s447
      %s449 = sphi 0, %s447
      %s450 = sphi 0, %s449
      %s464 = sphi 0, %s450
      %s468 = sphi 0, %s468
      %s470 = sphi 0, %s468
      %s471 = sphi 0, %s470
      %s485 = sphi 0, %s471
      %s491 = sphi 0, %s493
      %s494 = sphi 0, %s491
      %s495 = sphi 0, %s494
      %s511 = sphi 0, %s495
    $region4: #{tpu_custom_call.1} parent=1 // loop_header_branch
      %33 = sbr.rel (%p31) target = $region8
    $region5: #{tpu_custom_call.1} parent=1 // loop_body
      %s35 = ssub.s32 %s30, 1
      %s36 = ssub.s32 %s30, 2
      %s37 = sadd.s32 %s30, 1
      %s38 = ssub.s32 %s30, %s37
      %p39 = scmp.eq.s32.totalorder %s38, 0
      %s41 = sadd.s32 %s40, 1
      %s42 = scalar_select %p39, %s40, %s41
      %p45 = pneg %p39
      %p46 = scmp.eq.s32.totalorder %s30, 1
      %p47 = por %p45, %p46
      %p48 = scmp.ne.s32.totalorder %s40, %s43
      %p49 = scmp.eq.s32.totalorder %s30, 0
      %p50 = por %p48, %p49
      %p51 = scmp.ne.s32.totalorder %s40, %s43
      %p52 = scmp.eq.s32.totalorder %s35, 1
      %p53 = por %p51, %p52
      %p54 = scmp.ne.s32.totalorder %s43, %s44
      %p55 = scmp.eq.s32.totalorder %s35, 0
      %p56 = por %p54, %p55
      %p57 = scmp.ne.s32.totalorder %s43, %s44
      %p58 = scmp.eq.s32.totalorder %s36, 1
      %p59 = por %p57, %p58
      %p61 = scmp.ne.s32.totalorder %s44, %s60
      %p62 = scmp.eq.s32.totalorder %s36, 0
      %p63 = por %p61, %p62
      %s64 = ssub.s32 %s30, %s37
      %p65 = scmp.eq.s32.totalorder %s64, 0
      %s67 = sadd.s32 %s66, 1
      %s68 = scalar_select %p65, %s66, %s67
      %p71 = pneg %p65
      %p72 = scmp.eq.s32.totalorder %s30, 1
      %p73 = por %p71, %p72
      %p74 = scmp.ne.s32.totalorder %s66, %s69
      %p75 = scmp.eq.s32.totalorder %s30, 0
      %p76 = por %p74, %p75
      %p77 = scmp.ne.s32.totalorder %s66, %s69
      %p78 = scmp.eq.s32.totalorder %s35, 1
      %p79 = por %p77, %p78
      %p80 = scmp.ne.s32.totalorder %s69, %s70
      %p81 = scmp.eq.s32.totalorder %s35, 0
      %p82 = por %p80, %p81
      %p83 = scmp.ne.s32.totalorder %s69, %s70
      %p84 = scmp.eq.s32.totalorder %s36, 1
      %p85 = por %p83, %p84
      %p87 = scmp.ne.s32.totalorder %s70, %s86
      %p88 = scmp.eq.s32.totalorder %s36, 0
      %p89 = por %p87, %p88
      %s91 = sadd.s32 %s90, 1
      %p94 = scmp.eq.s32.totalorder %s30, 1
      %p95 = scmp.ne.s32.totalorder %s90, %s92
      %p96 = scmp.eq.s32.totalorder %s30, 0
      %p97 = por %p95, %p96
      %p98 = scmp.ne.s32.totalorder %s90, %s92
      %p99 = scmp.eq.s32.totalorder %s35, 1
      %p100 = por %p98, %p99
      %p101 = scmp.ne.s32.totalorder %s92, %s93
      %p102 = scmp.eq.s32.totalorder %s35, 0
      %p103 = por %p101, %p102
      %p104 = scmp.ne.s32.totalorder %s92, %s93
      %p105 = scmp.eq.s32.totalorder %s36, 1
      %p106 = por %p104, %p105
      %p108 = scmp.ne.s32.totalorder %s93, %s107
      %p109 = scmp.eq.s32.totalorder %s36, 0
      %p110 = por %p108, %p109
      %s112 = sadd.s32 %s111, 1
      %p115 = scmp.eq.s32.totalorder %s30, 1
      %p116 = scmp.ne.s32.totalorder %s111, %s113
      %p117 = scmp.eq.s32.totalorder %s30, 0
      %p118 = por %p116, %p117
      %p119 = scmp.ne.s32.totalorder %s111, %s113
      %p120 = scmp.eq.s32.totalorder %s35, 1
      %p121 = por %p119, %p120
      %p122 = scmp.ne.s32.totalorder %s113, %s114
      %p123 = scmp.eq.s32.totalorder %s35, 0
      %p124 = por %p122, %p123
      %p125 = scmp.ne.s32.totalorder %s113, %s114
      %p126 = scmp.eq.s32.totalorder %s36, 1
      %p127 = por %p125, %p126
      %p129 = scmp.ne.s32.totalorder %s114, %s128
      %p130 = scmp.eq.s32.totalorder %s36, 0
      %p131 = por %p129, %p130
      %s133 = sadd.s32 %s132, 1
      %p136 = scmp.eq.s32.totalorder %s30, 1
      %p137 = scmp.ne.s32.totalorder %s132, %s134
      %p138 = scmp.eq.s32.totalorder %s30, 0
      %p139 = por %p137, %p138
      %p140 = scmp.ne.s32.totalorder %s132, %s134
      %p141 = scmp.eq.s32.totalorder %s35, 1
      %p142 = por %p140, %p141
      %p143 = scmp.ne.s32.totalorder %s134, %s135
      %p144 = scmp.eq.s32.totalorder %s35, 0
      %p145 = por %p143, %p144
      %p146 = scmp.ne.s32.totalorder %s134, %s135
      %p147 = scmp.eq.s32.totalorder %s36, 1
      %p148 = por %p146, %p147
      %p150 = scmp.ne.s32.totalorder %s135, %s149
      %p151 = scmp.eq.s32.totalorder %s36, 0
      %p152 = por %p150, %p151
      %s154 = sadd.s32 %s153, 1
      %p157 = scmp.eq.s32.totalorder %s30, 1
      %p158 = scmp.ne.s32.totalorder %s153, %s155
      %p159 = scmp.eq.s32.totalorder %s30, 0
      %p160 = por %p158, %p159
      %p161 = scmp.ne.s32.totalorder %s153, %s155
      %p162 = scmp.eq.s32.totalorder %s35, 1
      %p163 = por %p161, %p162
      %p164 = scmp.ne.s32.totalorder %s155, %s156
      %p165 = scmp.eq.s32.totalorder %s35, 0
      %p166 = por %p164, %p165
      %p167 = scmp.ne.s32.totalorder %s155, %s156
      %p168 = scmp.eq.s32.totalorder %s36, 1
      %p169 = por %p167, %p168
      %p171 = scmp.ne.s32.totalorder %s156, %s170
      %p172 = scmp.eq.s32.totalorder %s36, 0
      %p173 = por %p171, %p172
      %s175 = sadd.s32 %s174, 1
      %p178 = scmp.eq.s32.totalorder %s30, 1
      %p179 = scmp.ne.s32.totalorder %s174, %s176
      %p180 = scmp.eq.s32.totalorder %s30, 0
      %p181 = por %p179, %p180
      %p182 = scmp.ne.s32.totalorder %s174, %s176
      %p183 = scmp.eq.s32.totalorder %s35, 1
      %p184 = por %p182, %p183
      %p185 = scmp.ne.s32.totalorder %s176, %s177
      %p186 = scmp.eq.s32.totalorder %s35, 0
      %p187 = por %p185, %p186
      %p188 = scmp.ne.s32.totalorder %s176, %s177
      %p189 = scmp.eq.s32.totalorder %s36, 1
      %p190 = por %p188, %p189
      %p192 = scmp.ne.s32.totalorder %s177, %s191
      %p193 = scmp.eq.s32.totalorder %s36, 0
      %p194 = por %p192, %p193
      %s196 = sadd.s32 %s195, 1
      %p199 = scmp.eq.s32.totalorder %s30, 1
      %p200 = scmp.ne.s32.totalorder %s195, %s197
      %p201 = scmp.eq.s32.totalorder %s30, 0
      %p202 = por %p200, %p201
      %p203 = scmp.ne.s32.totalorder %s195, %s197
      %p204 = scmp.eq.s32.totalorder %s35, 1
      %p205 = por %p203, %p204
      %p206 = scmp.ne.s32.totalorder %s197, %s198
      %p207 = scmp.eq.s32.totalorder %s35, 0
      %p208 = por %p206, %p207
      %p209 = scmp.ne.s32.totalorder %s197, %s198
      %p210 = scmp.eq.s32.totalorder %s36, 1
      %p211 = por %p209, %p210
      %p213 = scmp.ne.s32.totalorder %s198, %s212
      %p214 = scmp.eq.s32.totalorder %s36, 0
      %p215 = por %p213, %p214
      %s217 = sadd.s32 %s216, 1
      %p220 = scmp.eq.s32.totalorder %s30, 1
      %p221 = scmp.ne.s32.totalorder %s216, %s218
      %p222 = scmp.eq.s32.totalorder %s30, 0
      %p223 = por %p221, %p222
      %p224 = scmp.ne.s32.totalorder %s216, %s218
      %p225 = scmp.eq.s32.totalorder %s35, 1
      %p226 = por %p224, %p225
      %p227 = scmp.ne.s32.totalorder %s218, %s219
      %p228 = scmp.eq.s32.totalorder %s35, 0
      %p229 = por %p227, %p228
      %p230 = scmp.ne.s32.totalorder %s218, %s219
      %p231 = scmp.eq.s32.totalorder %s36, 1
      %p232 = por %p230, %p231
      %p234 = scmp.ne.s32.totalorder %s219, %s233
      %p235 = scmp.eq.s32.totalorder %s36, 0
      %p236 = por %p234, %p235
      %s238 = sadd.s32 %s237, 1
      %p241 = scmp.eq.s32.totalorder %s30, 1
      %p242 = scmp.ne.s32.totalorder %s237, %s239
      %p243 = scmp.eq.s32.totalorder %s30, 0
      %p244 = por %p242, %p243
      %p245 = scmp.ne.s32.totalorder %s237, %s239
      %p246 = scmp.eq.s32.totalorder %s35, 1
      %p247 = por %p245, %p246
      %p248 = scmp.ne.s32.totalorder %s239, %s240
      %p249 = scmp.eq.s32.totalorder %s35, 0
      %p250 = por %p248, %p249
      %p251 = scmp.ne.s32.totalorder %s239, %s240
      %p252 = scmp.eq.s32.totalorder %s36, 1
      %p253 = por %p251, %p252
      %p255 = scmp.ne.s32.totalorder %s240, %s254
      %p256 = scmp.eq.s32.totalorder %s36, 0
      %p257 = por %p255, %p256
      %s259 = sadd.s32 %s258, 1
      %p262 = scmp.eq.s32.totalorder %s30, 1
      %p263 = scmp.ne.s32.totalorder %s258, %s260
      %p264 = scmp.eq.s32.totalorder %s30, 0
      %p265 = por %p263, %p264
      %p266 = scmp.ne.s32.totalorder %s258, %s260
      %p267 = scmp.eq.s32.totalorder %s35, 1
      %p268 = por %p266, %p267
      %p269 = scmp.ne.s32.totalorder %s260, %s261
      %p270 = scmp.eq.s32.totalorder %s35, 0
      %p271 = por %p269, %p270
      %p272 = scmp.ne.s32.totalorder %s260, %s261
      %p273 = scmp.eq.s32.totalorder %s36, 1
      %p274 = por %p272, %p273
      %p276 = scmp.ne.s32.totalorder %s261, %s275
      %p277 = scmp.eq.s32.totalorder %s36, 0
      %p278 = por %p276, %p277
      %s280 = sadd.s32 %s279, 1
      %p283 = scmp.eq.s32.totalorder %s30, 1
      %p284 = scmp.ne.s32.totalorder %s279, %s281
      %p285 = scmp.eq.s32.totalorder %s30, 0
      %p286 = por %p284, %p285
      %p287 = scmp.ne.s32.totalorder %s279, %s281
      %p288 = scmp.eq.s32.totalorder %s35, 1
      %p289 = por %p287, %p288
      %p290 = scmp.ne.s32.totalorder %s281, %s282
      %p291 = scmp.eq.s32.totalorder %s35, 0
      %p292 = por %p290, %p291
      %p293 = scmp.ne.s32.totalorder %s281, %s282
      %p294 = scmp.eq.s32.totalorder %s36, 1
      %p295 = por %p293, %p294
      %p297 = scmp.ne.s32.totalorder %s282, %s296
      %p298 = scmp.eq.s32.totalorder %s36, 0
      %p299 = por %p297, %p298
      %s301 = sadd.s32 %s300, 1
      %p304 = scmp.eq.s32.totalorder %s30, 1
      %p305 = scmp.ne.s32.totalorder %s300, %s302
      %p306 = scmp.eq.s32.totalorder %s30, 0
      %p307 = por %p305, %p306
      %p308 = scmp.ne.s32.totalorder %s300, %s302
      %p309 = scmp.eq.s32.totalorder %s35, 1
      %p310 = por %p308, %p309
      %p311 = scmp.ne.s32.totalorder %s302, %s303
      %p312 = scmp.eq.s32.totalorder %s35, 0
      %p313 = por %p311, %p312
      %p314 = scmp.ne.s32.totalorder %s302, %s303
      %p315 = scmp.eq.s32.totalorder %s36, 1
      %p316 = por %p314, %p315
      %p318 = scmp.ne.s32.totalorder %s303, %s317
      %p319 = scmp.eq.s32.totalorder %s36, 0
      %p320 = por %p318, %p319
      %s322 = sadd.s32 %s321, 1
      %p325 = scmp.eq.s32.totalorder %s30, 1
      %p326 = scmp.ne.s32.totalorder %s321, %s323
      %p327 = scmp.eq.s32.totalorder %s30, 0
      %p328 = por %p326, %p327
      %p329 = scmp.ne.s32.totalorder %s321, %s323
      %p330 = scmp.eq.s32.totalorder %s35, 1
      %p331 = por %p329, %p330
      %p332 = scmp.ne.s32.totalorder %s323, %s324
      %p333 = scmp.eq.s32.totalorder %s35, 0
      %p334 = por %p332, %p333
      %p335 = scmp.ne.s32.totalorder %s323, %s324
      %p336 = scmp.eq.s32.totalorder %s36, 1
      %p337 = por %p335, %p336
      %p339 = scmp.ne.s32.totalorder %s324, %s338
      %p340 = scmp.eq.s32.totalorder %s36, 0
      %p341 = por %p339, %p340
      %s343 = sadd.s32 %s342, 1
      %p346 = scmp.eq.s32.totalorder %s30, 1
      %p347 = scmp.ne.s32.totalorder %s342, %s344
      %p348 = scmp.eq.s32.totalorder %s30, 0
      %p349 = por %p347, %p348
      %p350 = scmp.ne.s32.totalorder %s342, %s344
      %p351 = scmp.eq.s32.totalorder %s35, 1
      %p352 = por %p350, %p351
      %p353 = scmp.ne.s32.totalorder %s344, %s345
      %p354 = scmp.eq.s32.totalorder %s35, 0
      %p355 = por %p353, %p354
      %p356 = scmp.ne.s32.totalorder %s344, %s345
      %p357 = scmp.eq.s32.totalorder %s36, 1
      %p358 = por %p356, %p357
      %p360 = scmp.ne.s32.totalorder %s345, %s359
      %p361 = scmp.eq.s32.totalorder %s36, 0
      %p362 = por %p360, %p361
      %s364 = sadd.s32 %s363, 1
      %p367 = scmp.eq.s32.totalorder %s30, 1
      %p368 = scmp.ne.s32.totalorder %s363, %s365
      %p369 = scmp.eq.s32.totalorder %s30, 0
      %p370 = por %p368, %p369
      %p371 = scmp.ne.s32.totalorder %s363, %s365
      %p372 = scmp.eq.s32.totalorder %s35, 1
      %p373 = por %p371, %p372
      %p374 = scmp.ne.s32.totalorder %s365, %s366
      %p375 = scmp.eq.s32.totalorder %s35, 0
      %p376 = por %p374, %p375
      %p377 = scmp.ne.s32.totalorder %s365, %s366
      %p378 = scmp.eq.s32.totalorder %s36, 1
      %p379 = por %p377, %p378
      %p381 = scmp.ne.s32.totalorder %s366, %s380
      %p382 = scmp.eq.s32.totalorder %s36, 0
      %p383 = por %p381, %p382
      %s385 = sadd.s32 %s384, 1
      %p388 = scmp.eq.s32.totalorder %s30, 1
      %p389 = scmp.ne.s32.totalorder %s384, %s386
      %p390 = scmp.eq.s32.totalorder %s30, 0
      %p391 = por %p389, %p390
      %p392 = scmp.ne.s32.totalorder %s384, %s386
      %p393 = scmp.eq.s32.totalorder %s35, 1
      %p394 = por %p392, %p393
      %p395 = scmp.ne.s32.totalorder %s386, %s387
      %p396 = scmp.eq.s32.totalorder %s35, 0
      %p397 = por %p395, %p396
      %p398 = scmp.ne.s32.totalorder %s386, %s387
      %p399 = scmp.eq.s32.totalorder %s36, 1
      %p400 = por %p398, %p399
      %p402 = scmp.ne.s32.totalorder %s387, %s401
      %p403 = scmp.eq.s32.totalorder %s36, 0
      %p404 = por %p402, %p403
      %s406 = sadd.s32 %s405, 1
      %p409 = scmp.eq.s32.totalorder %s30, 1
      %p410 = scmp.ne.s32.totalorder %s405, %s407
      %p411 = scmp.eq.s32.totalorder %s30, 0
      %p412 = por %p410, %p411
      %p413 = scmp.ne.s32.totalorder %s405, %s407
      %p414 = scmp.eq.s32.totalorder %s35, 1
      %p415 = por %p413, %p414
      %p416 = scmp.ne.s32.totalorder %s407, %s408
      %p417 = scmp.eq.s32.totalorder %s35, 0
      %p418 = por %p416, %p417
      %p419 = scmp.ne.s32.totalorder %s407, %s408
      %p420 = scmp.eq.s32.totalorder %s36, 1
      %p421 = por %p419, %p420
      %p423 = scmp.ne.s32.totalorder %s408, %s422
      %p424 = scmp.eq.s32.totalorder %s36, 0
      %p425 = por %p423, %p424
      %s427 = sadd.s32 %s426, 1
      %p430 = scmp.eq.s32.totalorder %s30, 1
      %p431 = scmp.ne.s32.totalorder %s426, %s428
      %p432 = scmp.eq.s32.totalorder %s30, 0
      %p433 = por %p431, %p432
      %p434 = scmp.ne.s32.totalorder %s426, %s428
      %p435 = scmp.eq.s32.totalorder %s35, 1
      %p436 = por %p434, %p435
      %p437 = scmp.ne.s32.totalorder %s428, %s429
      %p438 = scmp.eq.s32.totalorder %s35, 0
      %p439 = por %p437, %p438
      %p440 = scmp.ne.s32.totalorder %s428, %s429
      %p441 = scmp.eq.s32.totalorder %s36, 1
      %p442 = por %p440, %p441
      %p444 = scmp.ne.s32.totalorder %s429, %s443
      %p445 = scmp.eq.s32.totalorder %s36, 0
      %p446 = por %p444, %p445
      %s448 = sadd.s32 %s447, 1
      %p451 = scmp.eq.s32.totalorder %s30, 1
      %p452 = scmp.ne.s32.totalorder %s447, %s449
      %p453 = scmp.eq.s32.totalorder %s30, 0
      %p454 = por %p452, %p453
      %p455 = scmp.ne.s32.totalorder %s447, %s449
      %p456 = scmp.eq.s32.totalorder %s35, 1
      %p457 = por %p455, %p456
      %p458 = scmp.ne.s32.totalorder %s449, %s450
      %p459 = scmp.eq.s32.totalorder %s35, 0
      %p460 = por %p458, %p459
      %p461 = scmp.ne.s32.totalorder %s449, %s450
      %p462 = scmp.eq.s32.totalorder %s36, 1
      %p463 = por %p461, %p462
      %p465 = scmp.ne.s32.totalorder %s450, %s464
      %p466 = scmp.eq.s32.totalorder %s36, 0
      %p467 = por %p465, %p466
      %s469 = sadd.s32 %s468, 1
      %p472 = scmp.eq.s32.totalorder %s30, 1
      %p473 = scmp.ne.s32.totalorder %s468, %s470
      %p474 = scmp.eq.s32.totalorder %s30, 0
      %p475 = por %p473, %p474
      %p476 = scmp.ne.s32.totalorder %s468, %s470
      %p477 = scmp.eq.s32.totalorder %s35, 1
      %p478 = por %p476, %p477
      %p479 = scmp.ne.s32.totalorder %s470, %s471
      %p480 = scmp.eq.s32.totalorder %s35, 0
      %p481 = por %p479, %p480
      %p482 = scmp.ne.s32.totalorder %s470, %s471
      %p483 = scmp.eq.s32.totalorder %s36, 1
      %p484 = por %p482, %p483
      %p486 = scmp.ne.s32.totalorder %s471, %s485
      %p487 = scmp.eq.s32.totalorder %s36, 0
      %p488 = por %p486, %p487
      %s489 = ssub.s32 %s30, %s37
      %p490 = scmp.eq.s32.totalorder %s489, 0
      %s492 = sadd.s32 %s491, 1
      %s493 = scalar_select %p490, %s491, %s492
      %p496 = pneg %p490
      %p497 = scmp.eq.s32.totalorder %s30, 1
      %p498 = por %p496, %p497
      %p499 = scmp.ne.s32.totalorder %s491, %s494
      %p500 = scmp.eq.s32.totalorder %s30, 0
      %p501 = por %p499, %p500
      %p502 = scmp.ne.s32.totalorder %s491, %s494
      %p503 = scmp.eq.s32.totalorder %s35, 1
      %p504 = por %p502, %p503
      %p505 = scmp.ne.s32.totalorder %s494, %s495
      %p506 = scmp.eq.s32.totalorder %s35, 0
      %p507 = por %p505, %p506
      %p508 = scmp.ne.s32.totalorder %s494, %s495
      %p509 = scmp.eq.s32.totalorder %s36, 1
      %p510 = por %p508, %p509
      %p512 = scmp.ne.s32.totalorder %s495, %s511
      %p513 = scmp.eq.s32.totalorder %s36, 0
      %p514 = por %p512, %p513
      %p515 = scmp.le.s32.totalorder 1, %s30
      %p516 = scmp.lt.s32.totalorder %s30, 3
      %p517 = pnand %p515, %p516
      %p518 = pneg %p517
      // Predicated region
      $region9: #{tpu_custom_call.1} parent=5 // pred_check
        _
      $region10: #{tpu_custom_call.1} parent=5 // pred_check_branch
        %520 = sbr.rel (%p517) target = $region12
      $region11: #{tpu_custom_call.1} parent=5 // pred_region
        %s521 = ssub.s32 %s30, 1
        // Predicated region
        $region13: #{tpu_custom_call.1} parent=11 // pred_check
          %p522 = pneg %p103
        $region14: #{tpu_custom_call.1} parent=11 // pred_check_branch
          %524 = sbr.rel (%p522) target = $region16
        $region15: #{tpu_custom_call.1} parent=11 // pred_region
          _
        $region16: #{tpu_custom_call.1} parent=11 // pred_fallthru
          _
        // Predicated region
        $region17: #{tpu_custom_call.1} parent=11 // pred_check
          %p525 = pneg %p124
        $region18: #{tpu_custom_call.1} parent=11 // pred_check_branch
          %527 = sbr.rel (%p525) target = $region20
        $region19: #{tpu_custom_call.1} parent=11 // pred_region
          _
        $region20: #{tpu_custom_call.1} parent=11 // pred_fallthru
          _
        // Predicated region
        $region21: #{tpu_custom_call.1} parent=11 // pred_check
          %p528 = pneg %p145
        $region22: #{tpu_custom_call.1} parent=11 // pred_check_branch
          %530 = sbr.rel (%p528) target = $region24
        $region23: #{tpu_custom_call.1} parent=11 // pred_region
          _
        $region24: #{tpu_custom_call.1} parent=11 // pred_fallthru
          _
        // Predicated region
        $region25: #{tpu_custom_call.1} parent=11 // pred_check
          %p531 = pneg %p166
        $region26: #{tpu_custom_call.1} parent=11 // pred_check_branch
          %533 = sbr.rel (%p531) target = $region28
        $region27: #{tpu_custom_call.1} parent=11 // pred_region
          _
        $region28: #{tpu_custom_call.1} parent=11 // pred_fallthru
          _
        // Predicated region
        $region29: #{tpu_custom_call.1} parent=11 // pred_check
          %p534 = pneg %p187
        $region30: #{tpu_custom_call.1} parent=11 // pred_check_branch
          %536 = sbr.rel (%p534) target = $region32
        $region31: #{tpu_custom_call.1} parent=11 // pred_region
          _
        $region32: #{tpu_custom_call.1} parent=11 // pred_fallthru
          _
        // Predicated region
        $region33: #{tpu_custom_call.1} parent=11 // pred_check
          %p537 = pneg %p208
        $region34: #{tpu_custom_call.1} parent=11 // pred_check_branch
          %539 = sbr.rel (%p537) target = $region36
        $region35: #{tpu_custom_call.1} parent=11 // pred_region
          _
        $region36: #{tpu_custom_call.1} parent=11 // pred_fallthru
          _
        // Predicated region
        $region37: #{tpu_custom_call.1} parent=11 // pred_check
          %p540 = pneg %p229
        $region38: #{tpu_custom_call.1} parent=11 // pred_check_branch
          %542 = sbr.rel (%p540) target = $region40
        $region39: #{tpu_custom_call.1} parent=11 // pred_region
          _
        $region40: #{tpu_custom_call.1} parent=11 // pred_fallthru
          _
        // Predicated region
        $region41: #{tpu_custom_call.1} parent=11 // pred_check
          %p543 = pneg %p250
        $region42: #{tpu_custom_call.1} parent=11 // pred_check_branch
          %545 = sbr.rel (%p543) target = $region44
        $region43: #{tpu_custom_call.1} parent=11 // pred_region
          _
        $region44: #{tpu_custom_call.1} parent=11 // pred_fallthru
          _
        // Predicated region
        $region45: #{tpu_custom_call.1} parent=11 // pred_check
          %p546 = pneg %p271
        $region46: #{tpu_custom_call.1} parent=11 // pred_check_branch
          %548 = sbr.rel (%p546) target = $region48
        $region47: #{tpu_custom_call.1} parent=11 // pred_region
          _
        $region48: #{tpu_custom_call.1} parent=11 // pred_fallthru
          _
        // Predicated region
        $region49: #{tpu_custom_call.1} parent=11 // pred_check
          %p549 = pneg %p292
        $region50: #{tpu_custom_call.1} parent=11 // pred_check_branch
          %551 = sbr.rel (%p549) target = $region52
        $region51: #{tpu_custom_call.1} parent=11 // pred_region
          _
        $region52: #{tpu_custom_call.1} parent=11 // pred_fallthru
          _
        // Predicated region
        $region53: #{tpu_custom_call.1} parent=11 // pred_check
          %p552 = pneg %p313
        $region54: #{tpu_custom_call.1} parent=11 // pred_check_branch
          %554 = sbr.rel (%p552) target = $region56
        $region55: #{tpu_custom_call.1} parent=11 // pred_region
          _
        $region56: #{tpu_custom_call.1} parent=11 // pred_fallthru
          _
        // Predicated region
        $region57: #{tpu_custom_call.1} parent=11 // pred_check
          %p555 = pneg %p334
        $region58: #{tpu_custom_call.1} parent=11 // pred_check_branch
          %557 = sbr.rel (%p555) target = $region60
        $region59: #{tpu_custom_call.1} parent=11 // pred_region
          _
        $region60: #{tpu_custom_call.1} parent=11 // pred_fallthru
          _
        // Predicated region
        $region61: #{tpu_custom_call.1} parent=11 // pred_check
          %p558 = pneg %p355
        $region62: #{tpu_custom_call.1} parent=11 // pred_check_branch
          %560 = sbr.rel (%p558) target = $region64
        $region63: #{tpu_custom_call.1} parent=11 // pred_region
          _
        $region64: #{tpu_custom_call.1} parent=11 // pred_fallthru
          _
        // Predicated region
        $region65: #{tpu_custom_call.1} parent=11 // pred_check
          %p561 = pneg %p376
        $region66: #{tpu_custom_call.1} parent=11 // pred_check_branch
          %563 = sbr.rel (%p561) target = $region68
        $region67: #{tpu_custom_call.1} parent=11 // pred_region
          _
        $region68: #{tpu_custom_call.1} parent=11 // pred_fallthru
          _
        // Predicated region
        $region69: #{tpu_custom_call.1} parent=11 // pred_check
          %p564 = pneg %p397
        $region70: #{tpu_custom_call.1} parent=11 // pred_check_branch
          %566 = sbr.rel (%p564) target = $region72
        $region71: #{tpu_custom_call.1} parent=11 // pred_region
          _
        $region72: #{tpu_custom_call.1} parent=11 // pred_fallthru
          _
        // Predicated region
        $region73: #{tpu_custom_call.1} parent=11 // pred_check
          %p567 = pneg %p418
        $region74: #{tpu_custom_call.1} parent=11 // pred_check_branch
          %569 = sbr.rel (%p567) target = $region76
        $region75: #{tpu_custom_call.1} parent=11 // pred_region
          _
        $region76: #{tpu_custom_call.1} parent=11 // pred_fallthru
          _
        // Predicated region
        $region77: #{tpu_custom_call.1} parent=11 // pred_check
          %p570 = pneg %p439
        $region78: #{tpu_custom_call.1} parent=11 // pred_check_branch
          %572 = sbr.rel (%p570) target = $region80
        $region79: #{tpu_custom_call.1} parent=11 // pred_region
          _
        $region80: #{tpu_custom_call.1} parent=11 // pred_fallthru
          _
        // Predicated region
        $region81: #{tpu_custom_call.1} parent=11 // pred_check
          %p573 = pneg %p460
        $region82: #{tpu_custom_call.1} parent=11 // pred_check_branch
          %575 = sbr.rel (%p573) target = $region84
        $region83: #{tpu_custom_call.1} parent=11 // pred_region
          _
        $region84: #{tpu_custom_call.1} parent=11 // pred_fallthru
          _
        // Predicated region
        $region85: #{tpu_custom_call.1} parent=11 // pred_check
          %p576 = pneg %p481
        $region86: #{tpu_custom_call.1} parent=11 // pred_check_branch
          %578 = sbr.rel (%p576) target = $region88
        $region87: #{tpu_custom_call.1} parent=11 // pred_region
          _
        $region88: #{tpu_custom_call.1} parent=11 // pred_fallthru
          _
      $region12: #{tpu_custom_call.1} parent=5 // pred_fallthru
        _
      %p579 = scmp.lt.s32.totalorder %s30, 2
      // Predicated region
      $region89: #{tpu_custom_call.1} parent=5 // pred_check
        %p580 = pneg %p579
      $region90: #{tpu_custom_call.1} parent=5 // pred_check_branch
        %582 = sbr.rel (%p580) target = $region92
      $region91: #{tpu_custom_call.1} parent=5 // pred_region
        // Predicated region
        $region93: #{tpu_custom_call.1} parent=91 // pred_check
          %p583 = pneg %p50
        $region94: #{tpu_custom_call.1} parent=91 // pred_check_branch
          %585 = sbr.rel (%p583) target = $region96
        $region95: #{tpu_custom_call.1} parent=91 // pred_region
          %s586 = smul.u32 16, %s30
          %p587 = scmp.lt.s32.totalorder %s586, 31
          %s588 = scalar_select %p587, %s586, 31
          %s589 = smul.addr %s588, 8
          %s590 = scalar_lea.vmem %s0, %s589
          %s591 = smul.u32 16, %s30
        $region96: #{tpu_custom_call.1} parent=91 // pred_fallthru
          _
        // Predicated region
        $region97: #{tpu_custom_call.1} parent=91 // pred_check
          %p592 = pneg %p76
        $region98: #{tpu_custom_call.1} parent=91 // pred_check_branch
          %594 = sbr.rel (%p592) target = $region100
        $region99: #{tpu_custom_call.1} parent=91 // pred_region
          %p595 = scmp.lt.s32.totalorder %s30, 1
          %s596 = scalar_select %p595, %s30, 1
          %s597 = smul.addr %s596, 8
          %s598 = scalar_lea.vmem %s1, %s597
        $region100: #{tpu_custom_call.1} parent=91 // pred_fallthru
          _
      $region92: #{tpu_custom_call.1} parent=5 // pred_fallthru
        _
      %p599 = scmp.le.s32.totalorder 1, %s30
      %p600 = scmp.lt.s32.totalorder %s30, 3
      %p601 = pnand %p599, %p600
      %p602 = pneg %p601
      // Predicated region
      $region101: #{tpu_custom_call.1} parent=5 // pred_check
        _
      $region102: #{tpu_custom_call.1} parent=5 // pred_check_branch
        %604 = sbr.rel (%p601) target = $region104
      $region103: #{tpu_custom_call.1} parent=5 // pred_region
        %s605 = ssub.s32 %s30, 1
        %s606 = smul.u32 16, %s35
        %p607 = scmp.lt.s32.totalorder %s606, 31
        %s608 = scalar_select %p607, %s606, 31
        %s609 = smul.addr %s608, 8
        %s610 = scalar_lea.vmem %s0, %s609
        %p611 = pneg %p56
        %p612 = pneg %p53
        %p613 = scmp.lt.s32.totalorder %s35, 1
        %s614 = scalar_select %p613, %s35, 1
        %s615 = smul.addr %s614, 8
        %s616 = scalar_lea.vmem %s1, %s615
        %p617 = pneg %p82
        %p618 = pneg %p79
        %p619 = pneg %p103
        %p620 = pneg %p100
        %p621 = pneg %p124
        %p622 = pneg %p121
        %p623 = pneg %p145
        %p624 = pneg %p142
        %p625 = pneg %p166
        %p626 = pneg %p163
        %p627 = pneg %p187
        %p628 = pneg %p184
        %p629 = pneg %p208
        %p630 = pneg %p205
        %p631 = pneg %p229
        %p632 = pneg %p226
        %p633 = pneg %p250
        %p634 = pneg %p247
        %p635 = pneg %p271
        %p636 = pneg %p268
        %p637 = pneg %p292
        %p638 = pneg %p289
        %p639 = pneg %p313
        %p640 = pneg %p310
        %p641 = pneg %p334
        %p642 = pneg %p331
        %p643 = pneg %p355
        %p644 = pneg %p352
        %p645 = pneg %p376
        %p646 = pneg %p373
        %p647 = pneg %p397
        %p648 = pneg %p394
        %p649 = pneg %p418
        %p650 = pneg %p415
        %p651 = pneg %p439
        %p652 = pneg %p436
        %p653 = pneg %p460
        %p654 = pneg %p457
        %p655 = pneg %p481
        %p656 = pneg %p478
        %p657 = pneg %p507
        %p658 = pneg %p504
        %s659 = sand.u32 %s494, 1
        %s660 = scalar_lea.sflag [#allocation3], %s659
        %s661 = sand.u32 %s494, 1
        %s662 = smul.addr %s661, 8
        %s663 = scalar_lea.vmem [#allocation2], %s662
        %s664 = smul.u32 16, %s35
        %p665 = scmp.lt.s32.totalorder %s664, 31
        %s666 = scalar_select %p665, %s664, 31
        %s667 = smul.addr %s666, 8
        %s668 = scalar_lea.vmem %s0, %s667
        %s669 = smul.u32 16, %s35
        %p670 = scmp.lt.s32.totalorder %s35, 1
        %s671 = scalar_select %p670, %s35, 1
        %s672 = smul.addr %s671, 8
        %s673 = scalar_lea.vmem %s1, %s672
        %v675 = vld [vmem:[%s668] sm:$0xff]
        %v676 = vld [vmem:[%s668 + $0x8] sm:$0xff]
        %v677 = vld [vmem:[%s668 + $0x10] sm:$0xff]
        %v678 = vld [vmem:[%s668 + $0x18] sm:$0xff]
        %v679 = vld [vmem:[%s668 + $0x20] sm:$0xff]
        %v680 = vld [vmem:[%s668 + $0x28] sm:$0xff]
        %v681 = vld [vmem:[%s668 + $0x30] sm:$0xff]
        %v682 = vld [vmem:[%s668 + $0x38] sm:$0xff]
        %v683 = vld [vmem:[%s668 + $0x40] sm:$0xff]
        %v684 = vld [vmem:[%s668 + $0x48] sm:$0xff]
        %v685 = vld [vmem:[%s668 + $0x50] sm:$0xff]
        %v686 = vld [vmem:[%s668 + $0x58] sm:$0xff]
        %v687 = vld [vmem:[%s668 + $0x60] sm:$0xff]
        %v688 = vld [vmem:[%s668 + $0x68] sm:$0xff]
        %v689 = vld [vmem:[%s668 + $0x70] sm:$0xff]
        %v690 = vld [vmem:[%s668 + $0x78] sm:$0xff]
        %v691 = vld [vmem:[%s2] sm:$0xf]
        %v692 = vld [vmem:[%s2 + $0x4] sm:$0x1]
        %v693 = vpack.c.bf16 %v676, %v675
        %v694 = vpack.c.bf16 %v678, %v677
        %v695 = vpack.c.bf16 %v680, %v679
        %v696 = vpack.c.bf16 %v682, %v681
        %v697 = vpack.c.bf16 %v684, %v683
        %v698 = vpack.c.bf16 %v686, %v685
        %v699 = vpack.c.bf16 %v688, %v687
        %v700 = vpack.c.bf16 %v690, %v689
        %v701 = vld [vmem:[%s3] sm:$0x1]
        %v702 = vlaneseq
        %v703 = vshrl.u32 %v702, 7
        %v704 = vsub.s32 0, %v703
        %v705 = vrot.slane %v701, %v704
        %v708 = vunpack.c.l.b16 %v691
        %v709 = vunpack.c.l.b16 %v692
        %v710 = vpack.c.b16 %v709, %v708
        %vm711 = vcmask 72704
        %v713 = vsel %vm711, %v693, 0
        %v716 = vsel %vm711, %v694, 0
        %v719 = vsel %vm711, %v695, 0
        %v722 = vsel %vm711, %v696, 0
        %v725 = vsel %vm711, %v697, 0
        %v728 = vsel %vm711, %v698, 0
        %v731 = vsel %vm711, %v699, 0
        %v734 = vsel %vm711, %v700, 0
        %vm736 = vcmask 1043456
        %vm737 = vcmask 1044480
        %v738 = vsel %vm736, 4294967295, 65535
        %v739 = vsel %vm737, %v738, 0
        %v741 = vand.u32 %v710, %v739
        %743 = vmatprep.subr.bf16.mxu0 0
        %744 = vmatpush1.bf16.msra.mxu0 %v741
        %745 = vmatprep.subr.bf16.mxu0 0
        %746 = vmatpush1.bf16.msra.mxu0 0
        %747 = vmatprep.subr.bf16.mxu0 0
        %748 = vmatpush1.bf16.msra.mxu0 0
        %749 = vmatprep.subr.bf16.mxu0 0
        %750 = vmatpush1.bf16.msra.mxu0 0
        %751 = vmatprep.subr.bf16.mxu0 0
        %752 = vmatpush1.bf16.msra.mxu0 0
        %753 = vmatprep.subr.bf16.mxu0 0
        %754 = vmatpush1.bf16.msra.mxu0 0
        %755 = vmatprep.subr.bf16.mxu0 0
        %756 = vmatpush1.bf16.msra.mxu0 0
        %757 = vmatprep.subr.bf16.mxu0 0
        %758 = vmatpush1.bf16.msra.mxu0 0
        %759 = vmatprep.subr.bf16.mxu0 0
        %760 = vmatpush1.bf16.msra.mxu0 0
        %761 = vmatprep.subr.bf16.mxu0 0
        %762 = vmatpush1.bf16.msra.mxu0 0
        %763 = vmatprep.subr.bf16.mxu0 0
        %764 = vmatpush1.bf16.msra.mxu0 0
        %765 = vmatprep.subr.bf16.mxu0 0
        %766 = vmatpush1.bf16.msra.mxu0 0
        %767 = vmatprep.subr.bf16.mxu0 0
        %768 = vmatpush1.bf16.msra.mxu0 0
        %769 = vmatprep.subr.bf16.mxu0 0
        %770 = vmatpush1.bf16.msra.mxu0 0
        %771 = vmatprep.subr.bf16.mxu0 0
        %772 = vmatpush1.bf16.msra.mxu0 0
        %773 = vmatprep.subr.bf16.mxu0 0
        %774 = vmatpush1.bf16.msra.mxu0 0
        %775 = vmatprep.mubr.bf16.mxu0 0
        %776 = vmatmul.mubr.bf16.gmra.mrb[0].mxu0 %v713
        %v777 = vpop.f32.mrb[0].mxu0
        %v778 = vadd.f32 %v705, %v777
        %v779 = vpop.f32.mrb[0].mxu0
        %v780 = vpop.f32.mrb[0].mxu0
        %v781 = vadd.f32 %v705, %v780
        %v782 = vpop.f32.mrb[0].mxu0
        %783 = vmatprep.mubr.bf16.mxu0 0
        %784 = vmatmul.mubr.bf16.gmra.mrb[0].mxu0 %v716
        %v785 = vpop.f32.mrb[0].mxu0
        %v786 = vadd.f32 %v705, %v785
        %v787 = vpop.f32.mrb[0].mxu0
        %v788 = vpop.f32.mrb[0].mxu0
        %v789 = vadd.f32 %v705, %v788
        %v790 = vpop.f32.mrb[0].mxu0
        %791 = vmatprep.mubr.bf16.mxu0 0
        %792 = vmatmul.mubr.bf16.gmra.mrb[0].mxu0 %v719
        %v793 = vpop.f32.mrb[0].mxu0
        %v794 = vadd.f32 %v705, %v793
        %v795 = vpop.f32.mrb[0].mxu0
        %v796 = vpop.f32.mrb[0].mxu0
        %v797 = vadd.f32 %v705, %v796
        %v798 = vpop.f32.mrb[0].mxu0
        %799 = vmatprep.mubr.bf16.mxu0 0
        %800 = vmatmul.mubr.bf16.gmra.mrb[0].mxu0 %v722
        %v801 = vpop.f32.mrb[0].mxu0
        %v802 = vadd.f32 %v705, %v801
        %v803 = vpop.f32.mrb[0].mxu0
        %v804 = vpop.f32.mrb[0].mxu0
        %v805 = vadd.f32 %v705, %v804
        %v806 = vpop.f32.mrb[0].mxu0
        %807 = vmatprep.mubr.bf16.mxu0 0
        %808 = vmatmul.mubr.bf16.gmra.mrb[0].mxu0 %v725
        %v809 = vpop.f32.mrb[0].mxu0
        %v810 = vadd.f32 %v705, %v809
        %v811 = vpop.f32.mrb[0].mxu0
        %v812 = vpop.f32.mrb[0].mxu0
        %v813 = vadd.f32 %v705, %v812
        %v814 = vpop.f32.mrb[0].mxu0
        %815 = vmatprep.mubr.bf16.mxu0 0
        %816 = vmatmul.mubr.bf16.gmra.mrb[0].mxu0 %v728
        %v817 = vpop.f32.mrb[0].mxu0
        %v818 = vadd.f32 %v705, %v817
        %v819 = vpop.f32.mrb[0].mxu0
        %v820 = vpop.f32.mrb[0].mxu0
        %v821 = vadd.f32 %v705, %v820
        %v822 = vpop.f32.mrb[0].mxu0
        %823 = vmatprep.mubr.bf16.mxu0 0
        %824 = vmatmul.mubr.bf16.gmra.mrb[0].mxu0 %v731
        %v825 = vpop.f32.mrb[0].mxu0
        %v826 = vadd.f32 %v705, %v825
        %v827 = vpop.f32.mrb[0].mxu0
        %v828 = vpop.f32.mrb[0].mxu0
        %v829 = vadd.f32 %v705, %v828
        %v830 = vpop.f32.mrb[0].mxu0
        %831 = vmatprep.mubr.bf16.mxu0 0
        %832 = vmatmul.mubr.bf16.gmra.mrb[0].mxu0 %v734
        %v833 = vpop.f32.mrb[0].mxu0
        %v834 = vadd.f32 %v705, %v833
        %v835 = vpop.f32.mrb[0].mxu0
        %v836 = vpop.f32.mrb[0].mxu0
        %v837 = vadd.f32 %v705, %v836
        %v838 = vpop.f32.mrb[0].mxu0
        %839 = vdwg.mxu0
        %v840 = vmax.f32 %v778, 0.0
        %v841 = vmax.f32 %v781, 0.0
        %v842 = vmax.f32 %v786, 0.0
        %v843 = vmax.f32 %v789, 0.0
        %v844 = vmax.f32 %v794, 0.0
        %v845 = vmax.f32 %v797, 0.0
        %v846 = vmax.f32 %v802, 0.0
        %v847 = vmax.f32 %v805, 0.0
        %v848 = vmax.f32 %v810, 0.0
        %v849 = vmax.f32 %v813, 0.0
        %v850 = vmax.f32 %v818, 0.0
        %v851 = vmax.f32 %v821, 0.0
        %v852 = vmax.f32 %v826, 0.0
        %v853 = vmax.f32 %v829, 0.0
        %v854 = vmax.f32 %v834, 0.0
        %v855 = vmax.f32 %v837, 0.0
        %v856 = vld [vmem:[%s4] sm:$0xf]
        %v857 = vld [vmem:[%s4 + $0x4] sm:$0xf]
        %v858 = vld [vmem:[%s4 + $0x8] sm:$0xf]
        %v859 = vld [vmem:[%s4 + $0xc] sm:$0xf]
        %v860 = vpack.c.bf16 %v841, %v840
        %v861 = vpack.c.bf16 %v843, %v842
        %v862 = vpack.c.bf16 %v845, %v844
        %v863 = vpack.c.bf16 %v847, %v846
        %v864 = vpack.c.bf16 %v849, %v848
        %v865 = vpack.c.bf16 %v851, %v850
        %v866 = vpack.c.bf16 %v853, %v852
        %v867 = vpack.c.bf16 %v855, %v854
        %v872 = vunpack.c.l.b16 %v856
        %v873 = vunpack.c.l.b16 %v857
        %v874 = vunpack.c.l.b16 %v858
        %v875 = vunpack.c.l.b16 %v859
        %v876 = vpack.c.b16 %v873, %v872
        %v877 = vpack.c.b16 %v875, %v874
        %880 = vmatprep.subr.bf16.mxu0 0
        %881 = vmatpush1.bf16.msra.mxu0 %v860
        %882 = vmatprep.subr.bf16.mxu0 0
        %883 = vmatpush1.bf16.msra.mxu0 %v861
        %884 = vmatprep.subr.bf16.mxu0 0
        %885 = vmatpush1.bf16.msra.mxu0 %v862
        %886 = vmatprep.subr.bf16.mxu0 0
        %887 = vmatpush1.bf16.msra.mxu0 %v863
        %888 = vmatprep.subr.bf16.mxu0 0
        %889 = vmatpush1.bf16.msra.mxu0 %v864
        %890 = vmatprep.subr.bf16.mxu0 0
        %891 = vmatpush1.bf16.msra.mxu0 %v865
        %892 = vmatprep.subr.bf16.mxu0 0
        %893 = vmatpush1.bf16.msra.mxu0 %v866
        %894 = vmatprep.subr.bf16.mxu0 0
        %895 = vmatpush1.bf16.msra.mxu0 %v867
        %896 = vmatprep.subr.bf16.mxu0 0
        %897 = vmatpush1.bf16.msra.mxu0 0
        %898 = vmatprep.subr.bf16.mxu0 0
        %899 = vmatpush1.bf16.msra.mxu0 0
        %900 = vmatprep.subr.bf16.mxu0 0
        %901 = vmatpush1.bf16.msra.mxu0 0
        %902 = vmatprep.subr.bf16.mxu0 0
        %903 = vmatpush1.bf16.msra.mxu0 0
        %904 = vmatprep.subr.bf16.mxu0 0
        %905 = vmatpush1.bf16.msra.mxu0 0
        %906 = vmatprep.subr.bf16.mxu0 0
        %907 = vmatpush1.bf16.msra.mxu0 0
        %908 = vmatprep.subr.bf16.mxu0 0
        %909 = vmatpush1.bf16.msra.mxu0 0
        %910 = vmatprep.subr.bf16.mxu0 0
        %911 = vmatpush1.bf16.msra.mxu0 0
        %912 = vmatprep.mubr.bf16.mxu0 0
        %913 = vmatmul.mubr.bf16.gmra.mrb[0].mxu0 %v876
        %v914 = vpop.f32.mrb[0].mxu0
        %v915 = vadd.f32 0.0, %v914
        %v916 = vpop.f32.mrb[0].mxu0
        %v917 = vpop.f32.mrb[0].mxu0
        %v918 = vadd.f32 0.0, %v917
        %v919 = vpop.f32.mrb[0].mxu0
        %920 = vmatprep.mubr.bf16.mxu0 0
        %921 = vmatmul.mubr.bf16.gmra.mrb[0].mxu0 %v877
        %v922 = vpop.f32.mrb[0].mxu0
        %v923 = vadd.f32 0.0, %v922
        %v924 = vpop.f32.mrb[0].mxu0
        %v925 = vpop.f32.mrb[0].mxu0
        %v926 = vadd.f32 0.0, %v925
        %v927 = vpop.f32.mrb[0].mxu0
        %928 = vdwg.mxu0
        %v929 = vld [vmem:[%s5] sm:$0xf]
        %v930 = vpack.c.bf16 %v918, %v915
        %v931 = vpack.c.bf16 %v926, %v923
        %s932 = scalar_lea.vmem %s4, 16
        %v933 = vld [vmem:[%s932] sm:$0xf]
        %v934 = vld [vmem:[%s932 + $0x4] sm:$0xf]
        %v935 = vld [vmem:[%s932 + $0x8] sm:$0xf]
        %v936 = vld [vmem:[%s932 + $0xc] sm:$0xf]
        %v941 = vunpack.c.l.b16 %v933
        %v942 = vunpack.c.l.b16 %v934
        %v943 = vunpack.c.l.b16 %v935
        %v944 = vunpack.c.l.b16 %v936
        %v945 = vpack.c.b16 %v942, %v941
        %v946 = vpack.c.b16 %v944, %v943
        %949 = vmatprep.subr.bf16.mxu0 0
        %950 = vmatpush1.bf16.msra.mxu0 %v860
        %951 = vmatprep.subr.bf16.mxu0 0
        %952 = vmatpush1.bf16.msra.mxu0 %v861
        %953 = vmatprep.subr.bf16.mxu0 0
        %954 = vmatpush1.bf16.msra.mxu0 %v862
        %955 = vmatprep.subr.bf16.mxu0 0
        %956 = vmatpush1.bf16.msra.mxu0 %v863
        %957 = vmatprep.subr.bf16.mxu0 0
        %958 = vmatpush1.bf16.msra.mxu0 %v864
        %959 = vmatprep.subr.bf16.mxu0 0
        %960 = vmatpush1.bf16.msra.mxu0 %v865
        %961 = vmatprep.subr.bf16.mxu0 0
        %962 = vmatpush1.bf16.msra.mxu0 %v866
        %963 = vmatprep.subr.bf16.mxu0 0
        %964 = vmatpush1.bf16.msra.mxu0 %v867
        %965 = vmatprep.subr.bf16.mxu0 0
        %966 = vmatpush1.bf16.msra.mxu0 0
        %967 = vmatprep.subr.bf16.mxu0 0
        %968 = vmatpush1.bf16.msra.mxu0 0
        %969 = vmatprep.subr.bf16.mxu0 0
        %970 = vmatpush1.bf16.msra.mxu0 0
        %971 = vmatprep.subr.bf16.mxu0 0
        %972 = vmatpush1.bf16.msra.mxu0 0
        %973 = vmatprep.subr.bf16.mxu0 0
        %974 = vmatpush1.bf16.msra.mxu0 0
        %975 = vmatprep.subr.bf16.mxu0 0
        %976 = vmatpush1.bf16.msra.mxu0 0
        %977 = vmatprep.subr.bf16.mxu0 0
        %978 = vmatpush1.bf16.msra.mxu0 0
        %979 = vmatprep.subr.bf16.mxu0 0
        %980 = vmatpush1.bf16.msra.mxu0 0
        %981 = vmatprep.mubr.bf16.mxu0 0
        %982 = vmatmul.mubr.bf16.gmra.mrb[0].mxu0 %v945
        %v983 = vpop.f32.mrb[0].mxu0
        %v984 = vadd.f32 0.0, %v983
        %v985 = vpop.f32.mrb[0].mxu0
        %v986 = vpop.f32.mrb[0].mxu0
        %v987 = vadd.f32 0.0, %v986
        %v988 = vpop.f32.mrb[0].mxu0
        %989 = vmatprep.mubr.bf16.mxu0 0
        %990 = vmatmul.mubr.bf16.gmra.mrb[0].mxu0 %v946
        %v991 = vpop.f32.mrb[0].mxu0
        %v992 = vadd.f32 0.0, %v991
        %v993 = vpop.f32.mrb[0].mxu0
        %v994 = vpop.f32.mrb[0].mxu0
        %v995 = vadd.f32 0.0, %v994
        %v996 = vpop.f32.mrb[0].mxu0
        %997 = vdwg.mxu0
        %s998 = scalar_lea.vmem %s5, 4
        %v999 = vld [vmem:[%s998] sm:$0xf]
        %v1000 = vpack.c.bf16 %v987, %v984
        %v1001 = vpack.c.bf16 %v995, %v992
        %vm1002 = vcmask 64512
        %v1004 = vsel %vm1002, %v1000, 0
        %v1007 = vsel %vm1002, %v1001, 0
        %v1010 = vsel %vm736, %v999, 0
        %1012 = vmatprep.subr.bf16.mxu0 0
        %1013 = vmatpush1.bf16.msra.mxu0 %v1010
        %1014 = vmatprep.subr.bf16.mxu0 0
        %1015 = vmatpush1.bf16.msra.mxu0 0
        %1016 = vmatprep.subr.bf16.mxu0 0
        %1017 = vmatpush1.bf16.msra.mxu0 0
        %1018 = vmatprep.subr.bf16.mxu0 0
        %1019 = vmatpush1.bf16.msra.mxu0 0
        %1020 = vmatprep.subr.bf16.mxu0 0
        %1021 = vmatpush1.bf16.msra.mxu0 0
        %1022 = vmatprep.subr.bf16.mxu0 0
        %1023 = vmatpush1.bf16.msra.mxu0 0
        %1024 = vmatprep.subr.bf16.mxu0 0
        %1025 = vmatpush1.bf16.msra.mxu0 0
        %1026 = vmatprep.subr.bf16.mxu0 0
        %1027 = vmatpush1.bf16.msra.mxu0 0
        %1028 = vmatprep.subr.bf16.mxu0 0
        %1029 = vmatpush1.bf16.msra.mxu0 0
        %1030 = vmatprep.subr.bf16.mxu0 0
        %1031 = vmatpush1.bf16.msra.mxu0 0
        %1032 = vmatprep.subr.bf16.mxu0 0
        %1033 = vmatpush1.bf16.msra.mxu0 0
        %1034 = vmatprep.subr.bf16.mxu0 0
        %1035 = vmatpush1.bf16.msra.mxu0 0
        %1036 = vmatprep.subr.bf16.mxu0 0
        %1037 = vmatpush1.bf16.msra.mxu0 0
        %1038 = vmatprep.subr.bf16.mxu0 0
        %1039 = vmatpush1.bf16.msra.mxu0 0
        %1040 = vmatprep.subr.bf16.mxu0 0
        %1041 = vmatpush1.bf16.msra.mxu0 0
        %1042 = vmatprep.subr.bf16.mxu0 0
        %1043 = vmatpush1.bf16.msra.mxu0 0
        %1044 = vmatprep.mubr.bf16.mxu0 0
        %1045 = vmatmul.mubr.bf16.gmra.mrb[0].mxu0 %v1004
        %v1046 = vpop.f32.mrb[0].mxu0
        %v1047 = vadd.f32 0.0, %v1046
        %v1048 = vpop.f32.mrb[0].mxu0
        %v1049 = vpop.f32.mrb[0].mxu0
        %v1050 = vadd.f32 0.0, %v1049
        %v1051 = vpop.f32.mrb[0].mxu0
        %1052 = vmatprep.mubr.bf16.mxu0 0
        %1053 = vmatmul.mubr.bf16.gmra.mrb[0].mxu0 %v1007
        %v1054 = vpop.f32.mrb[0].mxu0
        %v1055 = vadd.f32 0.0, %v1054
        %v1056 = vpop.f32.mrb[0].mxu0
        %v1057 = vpop.f32.mrb[0].mxu0
        %v1058 = vadd.f32 0.0, %v1057
        %v1059 = vpop.f32.mrb[0].mxu0
        %1060 = vdwg.mxu0
        %v1062 = vsel %vm1002, %v930, 0
        %v1065 = vsel %vm1002, %v931, 0
        %v1068 = vsel %vm736, %v929, 0
        %1070 = vmatprep.subr.bf16.mxu0 0
        %1071 = vmatpush1.bf16.msra.mxu0 %v1068
        %1072 = vmatprep.subr.bf16.mxu0 0
        %1073 = vmatpush1.bf16.msra.mxu0 0
        %1074 = vmatprep.subr.bf16.mxu0 0
        %1075 = vmatpush1.bf16.msra.mxu0 0
        %1076 = vmatprep.subr.bf16.mxu0 0
        %1077 = vmatpush1.bf16.msra.mxu0 0
        %1078 = vmatprep.subr.bf16.mxu0 0
        %1079 = vmatpush1.bf16.msra.mxu0 0
        %1080 = vmatprep.subr.bf16.mxu0 0
        %1081 = vmatpush1.bf16.msra.mxu0 0
        %1082 = vmatprep.subr.bf16.mxu0 0
        %1083 = vmatpush1.bf16.msra.mxu0 0
        %1084 = vmatprep.subr.bf16.mxu0 0
        %1085 = vmatpush1.bf16.msra.mxu0 0
        %1086 = vmatprep.subr.bf16.mxu0 0
        %1087 = vmatpush1.bf16.msra.mxu0 0
        %1088 = vmatprep.subr.bf16.mxu0 0
        %1089 = vmatpush1.bf16.msra.mxu0 0
        %1090 = vmatprep.subr.bf16.mxu0 0
        %1091 = vmatpush1.bf16.msra.mxu0 0
        %1092 = vmatprep.subr.bf16.mxu0 0
        %1093 = vmatpush1.bf16.msra.mxu0 0
        %1094 = vmatprep.subr.bf16.mxu0 0
        %1095 = vmatpush1.bf16.msra.mxu0 0
        %1096 = vmatprep.subr.bf16.mxu0 0
        %1097 = vmatpush1.bf16.msra.mxu0 0
        %1098 = vmatprep.subr.bf16.mxu0 0
        %1099 = vmatpush1.bf16.msra.mxu0 0
        %1100 = vmatprep.subr.bf16.mxu0 0
        %1101 = vmatpush1.bf16.msra.mxu0 0
        %1102 = vmatprep.mubr.bf16.mxu0 0
        %1103 = vmatmul.mubr.bf16.gmra.mrb[0].mxu0 %v1062
        %v1104 = vpop.f32.mrb[0].mxu0
        %v1105 = vadd.f32 %v1047, %v1104
        %v1106 = vpop.f32.mrb[0].mxu0
        %v1107 = vpop.f32.mrb[0].mxu0
        %v1108 = vadd.f32 %v1050, %v1107
        %v1109 = vpop.f32.mrb[0].mxu0
        %1110 = vmatprep.mubr.bf16.mxu0 0
        %1111 = vmatmul.mubr.bf16.gmra.mrb[0].mxu0 %v1065
        %v1112 = vpop.f32.mrb[0].mxu0
        %v1113 = vadd.f32 %v1055, %v1112
        %v1114 = vpop.f32.mrb[0].mxu0
        %v1115 = vpop.f32.mrb[0].mxu0
        %v1116 = vadd.f32 %v1058, %v1115
        %v1117 = vpop.f32.mrb[0].mxu0
        %1118 = vdwg.mxu0
        %s1119 = scalar_lea.vmem %s4, 32
        %v1120 = vld [vmem:[%s1119] sm:$0xf]
        %v1121 = vld [vmem:[%s1119 + $0x4] sm:$0xf]
        %v1122 = vld [vmem:[%s1119 + $0x8] sm:$0xf]
        %v1123 = vld [vmem:[%s1119 + $0xc] sm:$0xf]
        %v1128 = vunpack.c.l.b16 %v1120
        %v1129 = vunpack.c.l.b16 %v1121
        %v1130 = vunpack.c.l.b16 %v1122
        %v1131 = vunpack.c.l.b16 %v1123
        %v1132 = vpack.c.b16 %v1129, %v1128
        %v1133 = vpack.c.b16 %v1131, %v1130
        %1136 = vmatprep.subr.bf16.mxu0 0
        %1137 = vmatpush1.bf16.msra.mxu0 %v860
        %1138 = vmatprep.subr.bf16.mxu0 0
        %1139 = vmatpush1.bf16.msra.mxu0 %v861
        %1140 = vmatprep.subr.bf16.mxu0 0
        %1141 = vmatpush1.bf16.msra.mxu0 %v862
        %1142 = vmatprep.subr.bf16.mxu0 0
        %1143 = vmatpush1.bf16.msra.mxu0 %v863
        %1144 = vmatprep.subr.bf16.mxu0 0
        %1145 = vmatpush1.bf16.msra.mxu0 %v864
        %1146 = vmatprep.subr.bf16.mxu0 0
        %1147 = vmatpush1.bf16.msra.mxu0 %v865
        %1148 = vmatprep.subr.bf16.mxu0 0
        %1149 = vmatpush1.bf16.msra.mxu0 %v866
        %1150 = vmatprep.subr.bf16.mxu0 0
        %1151 = vmatpush1.bf16.msra.mxu0 %v867
        %1152 = vmatprep.subr.bf16.mxu0 0
        %1153 = vmatpush1.bf16.msra.mxu0 0
        %1154 = vmatprep.subr.bf16.mxu0 0
        %1155 = vmatpush1.bf16.msra.mxu0 0
        %1156 = vmatprep.subr.bf16.mxu0 0
        %1157 = vmatpush1.bf16.msra.mxu0 0
        %1158 = vmatprep.subr.bf16.mxu0 0
        %1159 = vmatpush1.bf16.msra.mxu0 0
        %1160 = vmatprep.subr.bf16.mxu0 0
        %1161 = vmatpush1.bf16.msra.mxu0 0
        %1162 = vmatprep.subr.bf16.mxu0 0
        %1163 = vmatpush1.bf16.msra.mxu0 0
        %1164 = vmatprep.subr.bf16.mxu0 0
        %1165 = vmatpush1.bf16.msra.mxu0 0
        %1166 = vmatprep.subr.bf16.mxu0 0
        %1167 = vmatpush1.bf16.msra.mxu0 0
        %1168 = vmatprep.mubr.bf16.mxu0 0
        %1169 = vmatmul.mubr.bf16.gmra.mrb[0].mxu0 %v1132
        %v1170 = vpop.f32.mrb[0].mxu0
        %v1171 = vadd.f32 0.0, %v1170
        %v1172 = vpop.f32.mrb[0].mxu0
        %v1173 = vpop.f32.mrb[0].mxu0
        %v1174 = vadd.f32 0.0, %v1173
        %v1175 = vpop.f32.mrb[0].mxu0
        %1176 = vmatprep.mubr.bf16.mxu0 0
        %1177 = vmatmul.mubr.bf16.gmra.mrb[0].mxu0 %v1133
        %v1178 = vpop.f32.mrb[0].mxu0
        %v1179 = vadd.f32 0.0, %v1178
        %v1180 = vpop.f32.mrb[0].mxu0
        %v1181 = vpop.f32.mrb[0].mxu0
        %v1182 = vadd.f32 0.0, %v1181
        %v1183 = vpop.f32.mrb[0].mxu0
        %1184 = vdwg.mxu0
        %s1185 = scalar_lea.vmem %s5, 8
        %v1186 = vld [vmem:[%s1185] sm:$0xf]
        %v1187 = vpack.c.bf16 %v1174, %v1171
        %v1188 = vpack.c.bf16 %v1182, %v1179
        %v1190 = vsel %vm1002, %v1187, 0
        %v1193 = vsel %vm1002, %v1188, 0
        %v1196 = vsel %vm736, %v1186, 0
        %1198 = vmatprep.subr.bf16.mxu0 0
        %1199 = vmatpush1.bf16.msra.mxu0 %v1196
        %1200 = vmatprep.subr.bf16.mxu0 0
        %1201 = vmatpush1.bf16.msra.mxu0 0
        %1202 = vmatprep.subr.bf16.mxu0 0
        %1203 = vmatpush1.bf16.msra.mxu0 0
        %1204 = vmatprep.subr.bf16.mxu0 0
        %1205 = vmatpush1.bf16.msra.mxu0 0
        %1206 = vmatprep.subr.bf16.mxu0 0
        %1207 = vmatpush1.bf16.msra.mxu0 0
        %1208 = vmatprep.subr.bf16.mxu0 0
        %1209 = vmatpush1.bf16.msra.mxu0 0
        %1210 = vmatprep.subr.bf16.mxu0 0
        %1211 = vmatpush1.bf16.msra.mxu0 0
        %1212 = vmatprep.subr.bf16.mxu0 0
        %1213 = vmatpush1.bf16.msra.mxu0 0
        %1214 = vmatprep.subr.bf16.mxu0 0
        %1215 = vmatpush1.bf16.msra.mxu0 0
        %1216 = vmatprep.subr.bf16.mxu0 0
        %1217 = vmatpush1.bf16.msra.mxu0 0
        %1218 = vmatprep.subr.bf16.mxu0 0
        %1219 = vmatpush1.bf16.msra.mxu0 0
        %1220 = vmatprep.subr.bf16.mxu0 0
        %1221 = vmatpush1.bf16.msra.mxu0 0
        %1222 = vmatprep.subr.bf16.mxu0 0
        %1223 = vmatpush1.bf16.msra.mxu0 0
        %1224 = vmatprep.subr.bf16.mxu0 0
        %1225 = vmatpush1.bf16.msra.mxu0 0
        %1226 = vmatprep.subr.bf16.mxu0 0
        %1227 = vmatpush1.bf16.msra.mxu0 0
        %1228 = vmatprep.subr.bf16.mxu0 0
        %1229 = vmatpush1.bf16.msra.mxu0 0
        %1230 = vmatprep.mubr.bf16.mxu0 0
        %1231 = vmatmul.mubr.bf16.gmra.mrb[0].mxu0 %v1190
        %v1232 = vpop.f32.mrb[0].mxu0
        %v1233 = vadd.f32 0.0, %v1232
        %v1234 = vpop.f32.mrb[0].mxu0
        %v1235 = vpop.f32.mrb[0].mxu0
        %v1236 = vadd.f32 0.0, %v1235
        %v1237 = vpop.f32.mrb[0].mxu0
        %1238 = vmatprep.mubr.bf16.mxu0 0
        %1239 = vmatmul.mubr.bf16.gmra.mrb[0].mxu0 %v1193
        %v1240 = vpop.f32.mrb[0].mxu0
        %v1241 = vadd.f32 0.0, %v1240
        %v1242 = vpop.f32.mrb[0].mxu0
        %v1243 = vpop.f32.mrb[0].mxu0
        %v1244 = vadd.f32 0.0, %v1243
        %v1245 = vpop.f32.mrb[0].mxu0
        %1246 = vdwg.mxu0
        %v1247 = vadd.f32 %v1105, %v1233
        %v1248 = vadd.f32 %v1108, %v1236
        %v1249 = vadd.f32 %v1113, %v1241
        %v1250 = vadd.f32 %v1116, %v1244
        %s1251 = scalar_lea.vmem %s4, 48
        %v1252 = vld [vmem:[%s1251] sm:$0xf]
        %v1253 = vld [vmem:[%s1251 + $0x4] sm:$0xf]
        %v1254 = vld [vmem:[%s1251 + $0x8] sm:$0xf]
        %v1255 = vld [vmem:[%s1251 + $0xc] sm:$0xf]
        %v1260 = vunpack.c.l.b16 %v1252
        %v1261 = vunpack.c.l.b16 %v1253
        %v1262 = vunpack.c.l.b16 %v1254
        %v1263 = vunpack.c.l.b16 %v1255
        %v1264 = vpack.c.b16 %v1261, %v1260
        %v1265 = vpack.c.b16 %v1263, %v1262
        %1268 = vmatprep.subr.bf16.mxu0 0
        %1269 = vmatpush1.bf16.msra.mxu0 %v860
        %1270 = vmatprep.subr.bf16.mxu0 0
        %1271 = vmatpush1.bf16.msra.mxu0 %v861
        %1272 = vmatprep.subr.bf16.mxu0 0
        %1273 = vmatpush1.bf16.msra.mxu0 %v862
        %1274 = vmatprep.subr.bf16.mxu0 0
        %1275 = vmatpush1.bf16.msra.mxu0 %v863
        %1276 = vmatprep.subr.bf16.mxu0 0
        %1277 = vmatpush1.bf16.msra.mxu0 %v864
        %1278 = vmatprep.subr.bf16.mxu0 0
        %1279 = vmatpush1.bf16.msra.mxu0 %v865
        %1280 = vmatprep.subr.bf16.mxu0 0
        %1281 = vmatpush1.bf16.msra.mxu0 %v866
        %1282 = vmatprep.subr.bf16.mxu0 0
        %1283 = vmatpush1.bf16.msra.mxu0 %v867
        %1284 = vmatprep.subr.bf16.mxu0 0
        %1285 = vmatpush1.bf16.msra.mxu0 0
        %1286 = vmatprep.subr.bf16.mxu0 0
        %1287 = vmatpush1.bf16.msra.mxu0 0
        %1288 = vmatprep.subr.bf16.mxu0 0
        %1289 = vmatpush1.bf16.msra.mxu0 0
        %1290 = vmatprep.subr.bf16.mxu0 0
        %1291 = vmatpush1.bf16.msra.mxu0 0
        %1292 = vmatprep.subr.bf16.mxu0 0
        %1293 = vmatpush1.bf16.msra.mxu0 0
        %1294 = vmatprep.subr.bf16.mxu0 0
        %1295 = vmatpush1.bf16.msra.mxu0 0
        %1296 = vmatprep.subr.bf16.mxu0 0
        %1297 = vmatpush1.bf16.msra.mxu0 0
        %1298 = vmatprep.subr.bf16.mxu0 0
        %1299 = vmatpush1.bf16.msra.mxu0 0
        %1300 = vmatprep.mubr.bf16.mxu0 0
        %1301 = vmatmul.mubr.bf16.gmra.mrb[0].mxu0 %v1264
        %v1302 = vpop.f32.mrb[0].mxu0
        %v1303 = vadd.f32 0.0, %v1302
        %v1304 = vpop.f32.mrb[0].mxu0
        %v1305 = vpop.f32.mrb[0].mxu0
        %v1306 = vadd.f32 0.0, %v1305
        %v1307 = vpop.f32.mrb[0].mxu0
        %1308 = vmatprep.mubr.bf16.mxu0 0
        %1309 = vmatmul.mubr.bf16.gmra.mrb[0].mxu0 %v1265
        %v1310 = vpop.f32.mrb[0].mxu0
        %v1311 = vadd.f32 0.0, %v1310
        %v1312 = vpop.f32.mrb[0].mxu0
        %v1313 = vpop.f32.mrb[0].mxu0
        %v1314 = vadd.f32 0.0, %v1313
        %v1315 = vpop.f32.mrb[0].mxu0
        %1316 = vdwg.mxu0
        %s1317 = scalar_lea.vmem %s5, 12
        %v1318 = vld [vmem:[%s1317] sm:$0xf]
        %v1319 = vpack.c.bf16 %v1306, %v1303
        %v1320 = vpack.c.bf16 %v1314, %v1311
        %v1322 = vsel %vm1002, %v1319, 0
        %v1325 = vsel %vm1002, %v1320, 0
        %v1328 = vsel %vm736, %v1318, 0
        %1330 = vmatprep.subr.bf16.mxu0 0
        %1331 = vmatpush1.bf16.msra.mxu0 %v1328
        %1332 = vmatprep.subr.bf16.mxu0 0
        %1333 = vmatpush1.bf16.msra.mxu0 0
        %1334 = vmatprep.subr.bf16.mxu0 0
        %1335 = vmatpush1.bf16.msra.mxu0 0
        %1336 = vmatprep.subr.bf16.mxu0 0
        %1337 = vmatpush1.bf16.msra.mxu0 0
        %1338 = vmatprep.subr.bf16.mxu0 0
        %1339 = vmatpush1.bf16.msra.mxu0 0
        %1340 = vmatprep.subr.bf16.mxu0 0
        %1341 = vmatpush1.bf16.msra.mxu0 0
        %1342 = vmatprep.subr.bf16.mxu0 0
        %1343 = vmatpush1.bf16.msra.mxu0 0
        %1344 = vmatprep.subr.bf16.mxu0 0
        %1345 = vmatpush1.bf16.msra.mxu0 0
        %1346 = vmatprep.subr.bf16.mxu0 0
        %1347 = vmatpush1.bf16.msra.mxu0 0
        %1348 = vmatprep.subr.bf16.mxu0 0
        %1349 = vmatpush1.bf16.msra.mxu0 0
        %1350 = vmatprep.subr.bf16.mxu0 0
        %1351 = vmatpush1.bf16.msra.mxu0 0
        %1352 = vmatprep.subr.bf16.mxu0 0
        %1353 = vmatpush1.bf16.msra.mxu0 0
        %1354 = vmatprep.subr.bf16.mxu0 0
        %1355 = vmatpush1.bf16.msra.mxu0 0
        %1356 = vmatprep.subr.bf16.mxu0 0
        %1357 = vmatpush1.bf16.msra.mxu0 0
        %1358 = vmatprep.subr.bf16.mxu0 0
        %1359 = vmatpush1.bf16.msra.mxu0 0
        %1360 = vmatprep.subr.bf16.mxu0 0
        %1361 = vmatpush1.bf16.msra.mxu0 0
        %1362 = vmatprep.mubr.bf16.mxu0 0
        %1363 = vmatmul.mubr.bf16.gmra.mrb[0].mxu0 %v1322
        %v1364 = vpop.f32.mrb[0].mxu0
        %v1365 = vadd.f32 0.0, %v1364
        %v1366 = vpop.f32.mrb[0].mxu0
        %v1367 = vpop.f32.mrb[0].mxu0
        %v1368 = vadd.f32 0.0, %v1367
        %v1369 = vpop.f32.mrb[0].mxu0
        %1370 = vmatprep.mubr.bf16.mxu0 0
        %1371 = vmatmul.mubr.bf16.gmra.mrb[0].mxu0 %v1325
        %v1372 = vpop.f32.mrb[0].mxu0
        %v1373 = vadd.f32 0.0, %v1372
        %v1374 = vpop.f32.mrb[0].mxu0
        %v1375 = vpop.f32.mrb[0].mxu0
        %v1376 = vadd.f32 0.0, %v1375
        %v1377 = vpop.f32.mrb[0].mxu0
        %1378 = vdwg.mxu0
        %v1379 = vadd.f32 %v1247, %v1365
        %v1380 = vadd.f32 %v1248, %v1368
        %v1381 = vadd.f32 %v1249, %v1373
        %v1382 = vadd.f32 %v1250, %v1376
        %s1383 = scalar_lea.vmem %s4, 64
        %v1384 = vld [vmem:[%s1383] sm:$0xf]
        %v1385 = vld [vmem:[%s1383 + $0x4] sm:$0xf]
        %v1386 = vld [vmem:[%s1383 + $0x8] sm:$0xf]
        %v1387 = vld [vmem:[%s1383 + $0xc] sm:$0xf]
        %v1392 = vunpack.c.l.b16 %v1384
        %v1393 = vunpack.c.l.b16 %v1385
        %v1394 = vunpack.c.l.b16 %v1386
        %v1395 = vunpack.c.l.b16 %v1387
        %v1396 = vpack.c.b16 %v1393, %v1392
        %v1397 = vpack.c.b16 %v1395, %v1394
        %1400 = vmatprep.subr.bf16.mxu0 0
        %1401 = vmatpush1.bf16.msra.mxu0 %v860
        %1402 = vmatprep.subr.bf16.mxu0 0
        %1403 = vmatpush1.bf16.msra.mxu0 %v861
        %1404 = vmatprep.subr.bf16.mxu0 0
        %1405 = vmatpush1.bf16.msra.mxu0 %v862
        %1406 = vmatprep.subr.bf16.mxu0 0
        %1407 = vmatpush1.bf16.msra.mxu0 %v863
        %1408 = vmatprep.subr.bf16.mxu0 0
        %1409 = vmatpush1.bf16.msra.mxu0 %v864
        %1410 = vmatprep.subr.bf16.mxu0 0
        %1411 = vmatpush1.bf16.msra.mxu0 %v865
        %1412 = vmatprep.subr.bf16.mxu0 0
        %1413 = vmatpush1.bf16.msra.mxu0 %v866
        %1414 = vmatprep.subr.bf16.mxu0 0
        %1415 = vmatpush1.bf16.msra.mxu0 %v867
        %1416 = vmatprep.subr.bf16.mxu0 0
        %1417 = vmatpush1.bf16.msra.mxu0 0
        %1418 = vmatprep.subr.bf16.mxu0 0
        %1419 = vmatpush1.bf16.msra.mxu0 0
        %1420 = vmatprep.subr.bf16.mxu0 0
        %1421 = vmatpush1.bf16.msra.mxu0 0
        %1422 = vmatprep.subr.bf16.mxu0 0
        %1423 = vmatpush1.bf16.msra.mxu0 0
        %1424 = vmatprep.subr.bf16.mxu0 0
        %1425 = vmatpush1.bf16.msra.mxu0 0
        %1426 = vmatprep.subr.bf16.mxu0 0
        %1427 = vmatpush1.bf16.msra.mxu0 0
        %1428 = vmatprep.subr.bf16.mxu0 0
        %1429 = vmatpush1.bf16.msra.mxu0 0
        %1430 = vmatprep.subr.bf16.mxu0 0
        %1431 = vmatpush1.bf16.msra.mxu0 0
        %1432 = vmatprep.mubr.bf16.mxu0 0
        %1433 = vmatmul.mubr.bf16.gmra.mrb[0].mxu0 %v1396
        %v1434 = vpop.f32.mrb[0].mxu0
        %v1435 = vadd.f32 0.0, %v1434
        %v1436 = vpop.f32.mrb[0].mxu0
        %v1437 = vpop.f32.mrb[0].mxu0
        %v1438 = vadd.f32 0.0, %v1437
        %v1439 = vpop.f32.mrb[0].mxu0
        %1440 = vmatprep.mubr.bf16.mxu0 0
        %1441 = vmatmul.mubr.bf16.gmra.mrb[0].mxu0 %v1397
        %v1442 = vpop.f32.mrb[0].mxu0
        %v1443 = vadd.f32 0.0, %v1442
        %v1444 = vpop.f32.mrb[0].mxu0
        %v1445 = vpop.f32.mrb[0].mxu0
        %v1446 = vadd.f32 0.0, %v1445
        %v1447 = vpop.f32.mrb[0].mxu0
        %1448 = vdwg.mxu0
        %s1449 = scalar_lea.vmem %s5, 16
        %v1450 = vld [vmem:[%s1449] sm:$0xf]
        %v1451 = vpack.c.bf16 %v1438, %v1435
        %v1452 = vpack.c.bf16 %v1446, %v1443
        %v1454 = vsel %vm1002, %v1451, 0
        %v1457 = vsel %vm1002, %v1452, 0
        %v1460 = vsel %vm736, %v1450, 0
        %1462 = vmatprep.subr.bf16.mxu0 0
        %1463 = vmatpush1.bf16.msra.mxu0 %v1460
        %1464 = vmatprep.subr.bf16.mxu0 0
        %1465 = vmatpush1.bf16.msra.mxu0 0
        %1466 = vmatprep.subr.bf16.mxu0 0
        %1467 = vmatpush1.bf16.msra.mxu0 0
        %1468 = vmatprep.subr.bf16.mxu0 0
        %1469 = vmatpush1.bf16.msra.mxu0 0
        %1470 = vmatprep.subr.bf16.mxu0 0
        %1471 = vmatpush1.bf16.msra.mxu0 0
        %1472 = vmatprep.subr.bf16.mxu0 0
        %1473 = vmatpush1.bf16.msra.mxu0 0
        %1474 = vmatprep.subr.bf16.mxu0 0
        %1475 = vmatpush1.bf16.msra.mxu0 0
        %1476 = vmatprep.subr.bf16.mxu0 0
        %1477 = vmatpush1.bf16.msra.mxu0 0
        %1478 = vmatprep.subr.bf16.mxu0 0
        %1479 = vmatpush1.bf16.msra.mxu0 0
        %1480 = vmatprep.subr.bf16.mxu0 0
        %1481 = vmatpush1.bf16.msra.mxu0 0
        %1482 = vmatprep.subr.bf16.mxu0 0
        %1483 = vmatpush1.bf16.msra.mxu0 0
        %1484 = vmatprep.subr.bf16.mxu0 0
        %1485 = vmatpush1.bf16.msra.mxu0 0
        %1486 = vmatprep.subr.bf16.mxu0 0
        %1487 = vmatpush1.bf16.msra.mxu0 0
        %1488 = vmatprep.subr.bf16.mxu0 0
        %1489 = vmatpush1.bf16.msra.mxu0 0
        %1490 = vmatprep.subr.bf16.mxu0 0
        %1491 = vmatpush1.bf16.msra.mxu0 0
        %1492 = vmatprep.subr.bf16.mxu0 0
        %1493 = vmatpush1.bf16.msra.mxu0 0
        %1494 = vmatprep.mubr.bf16.mxu0 0
        %1495 = vmatmul.mubr.bf16.gmra.mrb[0].mxu0 %v1454
        %v1496 = vpop.f32.mrb[0].mxu0
        %v1497 = vadd.f32 0.0, %v1496
        %v1498 = vpop.f32.mrb[0].mxu0
        %v1499 = vpop.f32.mrb[0].mxu0
        %v1500 = vadd.f32 0.0, %v1499
        %v1501 = vpop.f32.mrb[0].mxu0
        %1502 = vmatprep.mubr.bf16.mxu0 0
        %1503 = vmatmul.mubr.bf16.gmra.mrb[0].mxu0 %v1457
        %v1504 = vpop.f32.mrb[0].mxu0
        %v1505 = vadd.f32 0.0, %v1504
        %v1506 = vpop.f32.mrb[0].mxu0
        %v1507 = vpop.f32.mrb[0].mxu0
        %v1508 = vadd.f32 0.0, %v1507
        %v1509 = vpop.f32.mrb[0].mxu0
        %1510 = vdwg.mxu0
        %v1511 = vadd.f32 %v1379, %v1497
        %v1512 = vadd.f32 %v1380, %v1500
        %v1513 = vadd.f32 %v1381, %v1505
        %v1514 = vadd.f32 %v1382, %v1508
        %s1515 = scalar_lea.vmem %s4, 80
        %v1516 = vld [vmem:[%s1515] sm:$0xf]
        %v1517 = vld [vmem:[%s1515 + $0x4] sm:$0xf]
        %v1518 = vld [vmem:[%s1515 + $0x8] sm:$0xf]
        %v1519 = vld [vmem:[%s1515 + $0xc] sm:$0xf]
        %v1524 = vunpack.c.l.b16 %v1516
        %v1525 = vunpack.c.l.b16 %v1517
        %v1526 = vunpack.c.l.b16 %v1518
        %v1527 = vunpack.c.l.b16 %v1519
        %v1528 = vpack.c.b16 %v1525, %v1524
        %v1529 = vpack.c.b16 %v1527, %v1526
        %1532 = vmatprep.subr.bf16.mxu0 0
        %1533 = vmatpush1.bf16.msra.mxu0 %v860
        %1534 = vmatprep.subr.bf16.mxu0 0
        %1535 = vmatpush1.bf16.msra.mxu0 %v861
        %1536 = vmatprep.subr.bf16.mxu0 0
        %1537 = vmatpush1.bf16.msra.mxu0 %v862
        %1538 = vmatprep.subr.bf16.mxu0 0
        %1539 = vmatpush1.bf16.msra.mxu0 %v863
        %1540 = vmatprep.subr.bf16.mxu0 0
        %1541 = vmatpush1.bf16.msra.mxu0 %v864
        %1542 = vmatprep.subr.bf16.mxu0 0
        %1543 = vmatpush1.bf16.msra.mxu0 %v865
        %1544 = vmatprep.subr.bf16.mxu0 0
        %1545 = vmatpush1.bf16.msra.mxu0 %v866
        %1546 = vmatprep.subr.bf16.mxu0 0
        %1547 = vmatpush1.bf16.msra.mxu0 %v867
        %1548 = vmatprep.subr.bf16.mxu0 0
        %1549 = vmatpush1.bf16.msra.mxu0 0
        %1550 = vmatprep.subr.bf16.mxu0 0
        %1551 = vmatpush1.bf16.msra.mxu0 0
        %1552 = vmatprep.subr.bf16.mxu0 0
        %1553 = vmatpush1.bf16.msra.mxu0 0
        %1554 = vmatprep.subr.bf16.mxu0 0
        %1555 = vmatpush1.bf16.msra.mxu0 0
        %1556 = vmatprep.subr.bf16.mxu0 0
        %1557 = vmatpush1.bf16.msra.mxu0 0
        %1558 = vmatprep.subr.bf16.mxu0 0
        %1559 = vmatpush1.bf16.msra.mxu0 0
        %1560 = vmatprep.subr.bf16.mxu0 0
        %1561 = vmatpush1.bf16.msra.mxu0 0
        %1562 = vmatprep.subr.bf16.mxu0 0
        %1563 = vmatpush1.bf16.msra.mxu0 0
        %1564 = vmatprep.mubr.bf16.mxu0 0
        %1565 = vmatmul.mubr.bf16.gmra.mrb[0].mxu0 %v1528
        %v1566 = vpop.f32.mrb[0].mxu0
        %v1567 = vadd.f32 0.0, %v1566
        %v1568 = vpop.f32.mrb[0].mxu0
        %v1569 = vpop.f32.mrb[0].mxu0
        %v1570 = vadd.f32 0.0, %v1569
        %v1571 = vpop.f32.mrb[0].mxu0
        %1572 = vmatprep.mubr.bf16.mxu0 0
        %1573 = vmatmul.mubr.bf16.gmra.mrb[0].mxu0 %v1529
        %v1574 = vpop.f32.mrb[0].mxu0
        %v1575 = vadd.f32 0.0, %v1574
        %v1576 = vpop.f32.mrb[0].mxu0
        %v1577 = vpop.f32.mrb[0].mxu0
        %v1578 = vadd.f32 0.0, %v1577
        %v1579 = vpop.f32.mrb[0].mxu0
        %1580 = vdwg.mxu0
        %s1581 = scalar_lea.vmem %s5, 20
        %v1582 = vld [vmem:[%s1581] sm:$0xf]
        %v1583 = vpack.c.bf16 %v1570, %v1567
        %v1584 = vpack.c.bf16 %v1578, %v1575
        %v1586 = vsel %vm1002, %v1583, 0
        %v1589 = vsel %vm1002, %v1584, 0
        %v1592 = vsel %vm736, %v1582, 0
        %1594 = vmatprep.subr.bf16.mxu0 0
        %1595 = vmatpush1.bf16.msra.mxu0 %v1592
        %1596 = vmatprep.subr.bf16.mxu0 0
        %1597 = vmatpush1.bf16.msra.mxu0 0
        %1598 = vmatprep.subr.bf16.mxu0 0
        %1599 = vmatpush1.bf16.msra.mxu0 0
        %1600 = vmatprep.subr.bf16.mxu0 0
        %1601 = vmatpush1.bf16.msra.mxu0 0
        %1602 = vmatprep.subr.bf16.mxu0 0
        %1603 = vmatpush1.bf16.msra.mxu0 0
        %1604 = vmatprep.subr.bf16.mxu0 0
        %1605 = vmatpush1.bf16.msra.mxu0 0
        %1606 = vmatprep.subr.bf16.mxu0 0
        %1607 = vmatpush1.bf16.msra.mxu0 0
        %1608 = vmatprep.subr.bf16.mxu0 0
        %1609 = vmatpush1.bf16.msra.mxu0 0
        %1610 = vmatprep.subr.bf16.mxu0 0
        %1611 = vmatpush1.bf16.msra.mxu0 0
        %1612 = vmatprep.subr.bf16.mxu0 0
        %1613 = vmatpush1.bf16.msra.mxu0 0
        %1614 = vmatprep.subr.bf16.mxu0 0
        %1615 = vmatpush1.bf16.msra.mxu0 0
        %1616 = vmatprep.subr.bf16.mxu0 0
        %1617 = vmatpush1.bf16.msra.mxu0 0
        %1618 = vmatprep.subr.bf16.mxu0 0
        %1619 = vmatpush1.bf16.msra.mxu0 0
        %1620 = vmatprep.subr.bf16.mxu0 0
        %1621 = vmatpush1.bf16.msra.mxu0 0
        %1622 = vmatprep.subr.bf16.mxu0 0
        %1623 = vmatpush1.bf16.msra.mxu0 0
        %1624 = vmatprep.subr.bf16.mxu0 0
        %1625 = vmatpush1.bf16.msra.mxu0 0
        %1626 = vmatprep.mubr.bf16.mxu0 0
        %1627 = vmatmul.mubr.bf16.gmra.mrb[0].mxu0 %v1586
        %v1628 = vpop.f32.mrb[0].mxu0
        %v1629 = vadd.f32 0.0, %v1628
        %v1630 = vpop.f32.mrb[0].mxu0
        %v1631 = vpop.f32.mrb[0].mxu0
        %v1632 = vadd.f32 0.0, %v1631
        %v1633 = vpop.f32.mrb[0].mxu0
        %1634 = vmatprep.mubr.bf16.mxu0 0
        %1635 = vmatmul.mubr.bf16.gmra.mrb[0].mxu0 %v1589
        %v1636 = vpop.f32.mrb[0].mxu0
        %v1637 = vadd.f32 0.0, %v1636
        %v1638 = vpop.f32.mrb[0].mxu0
        %v1639 = vpop.f32.mrb[0].mxu0
        %v1640 = vadd.f32 0.0, %v1639
        %v1641 = vpop.f32.mrb[0].mxu0
        %1642 = vdwg.mxu0
        %v1643 = vadd.f32 %v1511, %v1629
        %v1644 = vadd.f32 %v1512, %v1632
        %v1645 = vadd.f32 %v1513, %v1637
        %v1646 = vadd.f32 %v1514, %v1640
        %s1647 = scalar_lea.vmem %s4, 96
        %v1648 = vld [vmem:[%s1647] sm:$0xf]
        %v1649 = vld [vmem:[%s1647 + $0x4] sm:$0xf]
        %v1650 = vld [vmem:[%s1647 + $0x8] sm:$0xf]
        %v1651 = vld [vmem:[%s1647 + $0xc] sm:$0xf]
        %v1656 = vunpack.c.l.b16 %v1648
        %v1657 = vunpack.c.l.b16 %v1649
        %v1658 = vunpack.c.l.b16 %v1650
        %v1659 = vunpack.c.l.b16 %v1651
        %v1660 = vpack.c.b16 %v1657, %v1656
        %v1661 = vpack.c.b16 %v1659, %v1658
        %1664 = vmatprep.subr.bf16.mxu0 0
        %1665 = vmatpush1.bf16.msra.mxu0 %v860
        %1666 = vmatprep.subr.bf16.mxu0 0
        %1667 = vmatpush1.bf16.msra.mxu0 %v861
        %1668 = vmatprep.subr.bf16.mxu0 0
        %1669 = vmatpush1.bf16.msra.mxu0 %v862
        %1670 = vmatprep.subr.bf16.mxu0 0
        %1671 = vmatpush1.bf16.msra.mxu0 %v863
        %1672 = vmatprep.subr.bf16.mxu0 0
        %1673 = vmatpush1.bf16.msra.mxu0 %v864
        %1674 = vmatprep.subr.bf16.mxu0 0
        %1675 = vmatpush1.bf16.msra.mxu0 %v865
        %1676 = vmatprep.subr.bf16.mxu0 0
        %1677 = vmatpush1.bf16.msra.mxu0 %v866
        %1678 = vmatprep.subr.bf16.mxu0 0
        %1679 = vmatpush1.bf16.msra.mxu0 %v867
        %1680 = vmatprep.subr.bf16.mxu0 0
        %1681 = vmatpush1.bf16.msra.mxu0 0
        %1682 = vmatprep.subr.bf16.mxu0 0
        %1683 = vmatpush1.bf16.msra.mxu0 0
        %1684 = vmatprep.subr.bf16.mxu0 0
        %1685 = vmatpush1.bf16.msra.mxu0 0
        %1686 = vmatprep.subr.bf16.mxu0 0
        %1687 = vmatpush1.bf16.msra.mxu0 0
        %1688 = vmatprep.subr.bf16.mxu0 0
        %1689 = vmatpush1.bf16.msra.mxu0 0
        %1690 = vmatprep.subr.bf16.mxu0 0
        %1691 = vmatpush1.bf16.msra.mxu0 0
        %1692 = vmatprep.subr.bf16.mxu0 0
        %1693 = vmatpush1.bf16.msra.mxu0 0
        %1694 = vmatprep.subr.bf16.mxu0 0
        %1695 = vmatpush1.bf16.msra.mxu0 0
        %1696 = vmatprep.mubr.bf16.mxu0 0
        %1697 = vmatmul.mubr.bf16.gmra.mrb[0].mxu0 %v1660
        %v1698 = vpop.f32.mrb[0].mxu0
        %v1699 = vadd.f32 0.0, %v1698
        %v1700 = vpop.f32.mrb[0].mxu0
        %v1701 = vpop.f32.mrb[0].mxu0
        %v1702 = vadd.f32 0.0, %v1701
        %v1703 = vpop.f32.mrb[0].mxu0
        %1704 = vmatprep.mubr.bf16.mxu0 0
        %1705 = vmatmul.mubr.bf16.gmra.mrb[0].mxu0 %v1661
        %v1706 = vpop.f32.mrb[0].mxu0
        %v1707 = vadd.f32 0.0, %v1706
        %v1708 = vpop.f32.mrb[0].mxu0
        %v1709 = vpop.f32.mrb[0].mxu0
        %v1710 = vadd.f32 0.0, %v1709
        %v1711 = vpop.f32.mrb[0].mxu0
        %1712 = vdwg.mxu0
        %s1713 = scalar_lea.vmem %s5, 24
        %v1714 = vld [vmem:[%s1713] sm:$0xf]
        %v1715 = vpack.c.bf16 %v1702, %v1699
        %v1716 = vpack.c.bf16 %v1710, %v1707
        %v1718 = vsel %vm1002, %v1715, 0
        %v1721 = vsel %vm1002, %v1716, 0
        %v1724 = vsel %vm736, %v1714, 0
        %1726 = vmatprep.subr.bf16.mxu0 0
        %1727 = vmatpush1.bf16.msra.mxu0 %v1724
        %1728 = vmatprep.subr.bf16.mxu0 0
        %1729 = vmatpush1.bf16.msra.mxu0 0
        %1730 = vmatprep.subr.bf16.mxu0 0
        %1731 = vmatpush1.bf16.msra.mxu0 0
        %1732 = vmatprep.subr.bf16.mxu0 0
        %1733 = vmatpush1.bf16.msra.mxu0 0
        %1734 = vmatprep.subr.bf16.mxu0 0
        %1735 = vmatpush1.bf16.msra.mxu0 0
        %1736 = vmatprep.subr.bf16.mxu0 0
        %1737 = vmatpush1.bf16.msra.mxu0 0
        %1738 = vmatprep.subr.bf16.mxu0 0
        %1739 = vmatpush1.bf16.msra.mxu0 0
        %1740 = vmatprep.subr.bf16.mxu0 0
        %1741 = vmatpush1.bf16.msra.mxu0 0
        %1742 = vmatprep.subr.bf16.mxu0 0
        %1743 = vmatpush1.bf16.msra.mxu0 0
        %1744 = vmatprep.subr.bf16.mxu0 0
        %1745 = vmatpush1.bf16.msra.mxu0 0
        %1746 = vmatprep.subr.bf16.mxu0 0
        %1747 = vmatpush1.bf16.msra.mxu0 0
        %1748 = vmatprep.subr.bf16.mxu0 0
        %1749 = vmatpush1.bf16.msra.mxu0 0
        %1750 = vmatprep.subr.bf16.mxu0 0
        %1751 = vmatpush1.bf16.msra.mxu0 0
        %1752 = vmatprep.subr.bf16.mxu0 0
        %1753 = vmatpush1.bf16.msra.mxu0 0
        %1754 = vmatprep.subr.bf16.mxu0 0
        %1755 = vmatpush1.bf16.msra.mxu0 0
        %1756 = vmatprep.subr.bf16.mxu0 0
        %1757 = vmatpush1.bf16.msra.mxu0 0
        %1758 = vmatprep.mubr.bf16.mxu0 0
        %1759 = vmatmul.mubr.bf16.gmra.mrb[0].mxu0 %v1718
        %v1760 = vpop.f32.mrb[0].mxu0
        %v1761 = vadd.f32 0.0, %v1760
        %v1762 = vpop.f32.mrb[0].mxu0
        %v1763 = vpop.f32.mrb[0].mxu0
        %v1764 = vadd.f32 0.0, %v1763
        %v1765 = vpop.f32.mrb[0].mxu0
        %1766 = vmatprep.mubr.bf16.mxu0 0
        %1767 = vmatmul.mubr.bf16.gmra.mrb[0].mxu0 %v1721
        %v1768 = vpop.f32.mrb[0].mxu0
        %v1769 = vadd.f32 0.0, %v1768
        %v1770 = vpop.f32.mrb[0].mxu0
        %v1771 = vpop.f32.mrb[0].mxu0
        %v1772 = vadd.f32 0.0, %v1771
        %v1773 = vpop.f32.mrb[0].mxu0
        %1774 = vdwg.mxu0
        %v1775 = vadd.f32 %v1643, %v1761
        %v1776 = vadd.f32 %v1644, %v1764
        %v1777 = vadd.f32 %v1645, %v1769
        %v1778 = vadd.f32 %v1646, %v1772
        %s1779 = scalar_lea.vmem %s4, 112
        %v1780 = vld [vmem:[%s1779] sm:$0xf]
        %v1781 = vld [vmem:[%s1779 + $0x4] sm:$0xf]
        %v1782 = vld [vmem:[%s1779 + $0x8] sm:$0xf]
        %v1783 = vld [vmem:[%s1779 + $0xc] sm:$0xf]
        %v1788 = vunpack.c.l.b16 %v1780
        %v1789 = vunpack.c.l.b16 %v1781
        %v1790 = vunpack.c.l.b16 %v1782
        %v1791 = vunpack.c.l.b16 %v1783
        %v1792 = vpack.c.b16 %v1789, %v1788
        %v1793 = vpack.c.b16 %v1791, %v1790
        %1796 = vmatprep.subr.bf16.mxu0 0
        %1797 = vmatpush1.bf16.msra.mxu0 %v860
        %1798 = vmatprep.subr.bf16.mxu0 0
        %1799 = vmatpush1.bf16.msra.mxu0 %v861
        %1800 = vmatprep.subr.bf16.mxu0 0
        %1801 = vmatpush1.bf16.msra.mxu0 %v862
        %1802 = vmatprep.subr.bf16.mxu0 0
        %1803 = vmatpush1.bf16.msra.mxu0 %v863
        %1804 = vmatprep.subr.bf16.mxu0 0
        %1805 = vmatpush1.bf16.msra.mxu0 %v864
        %1806 = vmatprep.subr.bf16.mxu0 0
        %1807 = vmatpush1.bf16.msra.mxu0 %v865
        %1808 = vmatprep.subr.bf16.mxu0 0
        %1809 = vmatpush1.bf16.msra.mxu0 %v866
        %1810 = vmatprep.subr.bf16.mxu0 0
        %1811 = vmatpush1.bf16.msra.mxu0 %v867
        %1812 = vmatprep.subr.bf16.mxu0 0
        %1813 = vmatpush1.bf16.msra.mxu0 0
        %1814 = vmatprep.subr.bf16.mxu0 0
        %1815 = vmatpush1.bf16.msra.mxu0 0
        %1816 = vmatprep.subr.bf16.mxu0 0
        %1817 = vmatpush1.bf16.msra.mxu0 0
        %1818 = vmatprep.subr.bf16.mxu0 0
        %1819 = vmatpush1.bf16.msra.mxu0 0
        %1820 = vmatprep.subr.bf16.mxu0 0
        %1821 = vmatpush1.bf16.msra.mxu0 0
        %1822 = vmatprep.subr.bf16.mxu0 0
        %1823 = vmatpush1.bf16.msra.mxu0 0
        %1824 = vmatprep.subr.bf16.mxu0 0
        %1825 = vmatpush1.bf16.msra.mxu0 0
        %1826 = vmatprep.subr.bf16.mxu0 0
        %1827 = vmatpush1.bf16.msra.mxu0 0
        %1828 = vmatprep.mubr.bf16.mxu0 0
        %1829 = vmatmul.mubr.bf16.gmra.mrb[0].mxu0 %v1792
        %v1830 = vpop.f32.mrb[0].mxu0
        %v1831 = vadd.f32 0.0, %v1830
        %v1832 = vpop.f32.mrb[0].mxu0
        %v1833 = vpop.f32.mrb[0].mxu0
        %v1834 = vadd.f32 0.0, %v1833
        %v1835 = vpop.f32.mrb[0].mxu0
        %1836 = vmatprep.mubr.bf16.mxu0 0
        %1837 = vmatmul.mubr.bf16.gmra.mrb[0].mxu0 %v1793
        %v1838 = vpop.f32.mrb[0].mxu0
        %v1839 = vadd.f32 0.0, %v1838
        %v1840 = vpop.f32.mrb[0].mxu0
        %v1841 = vpop.f32.mrb[0].mxu0
        %v1842 = vadd.f32 0.0, %v1841
        %v1843 = vpop.f32.mrb[0].mxu0
        %1844 = vdwg.mxu0
        %s1845 = scalar_lea.vmem %s5, 28
        %v1846 = vld [vmem:[%s1845] sm:$0xf]
        %v1847 = vpack.c.bf16 %v1834, %v1831
        %v1848 = vpack.c.bf16 %v1842, %v1839
        %v1850 = vsel %vm1002, %v1847, 0
        %v1853 = vsel %vm1002, %v1848, 0
        %v1856 = vsel %vm736, %v1846, 0
        %1858 = vmatprep.subr.bf16.mxu0 0
        %1859 = vmatpush1.bf16.msra.mxu0 %v1856
        %1860 = vmatprep.subr.bf16.mxu0 0
        %1861 = vmatpush1.bf16.msra.mxu0 0
        %1862 = vmatprep.subr.bf16.mxu0 0
        %1863 = vmatpush1.bf16.msra.mxu0 0
        %1864 = vmatprep.subr.bf16.mxu0 0
        %1865 = vmatpush1.bf16.msra.mxu0 0
        %1866 = vmatprep.subr.bf16.mxu0 0
        %1867 = vmatpush1.bf16.msra.mxu0 0
        %1868 = vmatprep.subr.bf16.mxu0 0
        %1869 = vmatpush1.bf16.msra.mxu0 0
        %1870 = vmatprep.subr.bf16.mxu0 0
        %1871 = vmatpush1.bf16.msra.mxu0 0
        %1872 = vmatprep.subr.bf16.mxu0 0
        %1873 = vmatpush1.bf16.msra.mxu0 0
        %1874 = vmatprep.subr.bf16.mxu0 0
        %1875 = vmatpush1.bf16.msra.mxu0 0
        %1876 = vmatprep.subr.bf16.mxu0 0
        %1877 = vmatpush1.bf16.msra.mxu0 0
        %1878 = vmatprep.subr.bf16.mxu0 0
        %1879 = vmatpush1.bf16.msra.mxu0 0
        %1880 = vmatprep.subr.bf16.mxu0 0
        %1881 = vmatpush1.bf16.msra.mxu0 0
        %1882 = vmatprep.subr.bf16.mxu0 0
        %1883 = vmatpush1.bf16.msra.mxu0 0
        %1884 = vmatprep.subr.bf16.mxu0 0
        %1885 = vmatpush1.bf16.msra.mxu0 0
        %1886 = vmatprep.subr.bf16.mxu0 0
        %1887 = vmatpush1.bf16.msra.mxu0 0
        %1888 = vmatprep.subr.bf16.mxu0 0
        %1889 = vmatpush1.bf16.msra.mxu0 0
        %1890 = vmatprep.mubr.bf16.mxu0 0
        %1891 = vmatmul.mubr.bf16.gmra.mrb[0].mxu0 %v1850
        %v1892 = vpop.f32.mrb[0].mxu0
        %v1893 = vadd.f32 0.0, %v1892
        %v1894 = vpop.f32.mrb[0].mxu0
        %v1895 = vpop.f32.mrb[0].mxu0
        %v1896 = vadd.f32 0.0, %v1895
        %v1897 = vpop.f32.mrb[0].mxu0
        %1898 = vmatprep.mubr.bf16.mxu0 0
        %1899 = vmatmul.mubr.bf16.gmra.mrb[0].mxu0 %v1853
        %v1900 = vpop.f32.mrb[0].mxu0
        %v1901 = vadd.f32 0.0, %v1900
        %v1902 = vpop.f32.mrb[0].mxu0
        %v1903 = vpop.f32.mrb[0].mxu0
        %v1904 = vadd.f32 0.0, %v1903
        %v1905 = vpop.f32.mrb[0].mxu0
        %1906 = vdwg.mxu0
        %v1907 = vadd.f32 %v1775, %v1893
        %v1908 = vadd.f32 %v1776, %v1896
        %v1909 = vadd.f32 %v1777, %v1901
        %v1910 = vadd.f32 %v1778, %v1904
        %s1911 = scalar_lea.vmem %s4, 128
        %v1912 = vld [vmem:[%s1911] sm:$0xf]
        %v1913 = vld [vmem:[%s1911 + $0x4] sm:$0xf]
        %v1914 = vld [vmem:[%s1911 + $0x8] sm:$0xf]
        %v1915 = vld [vmem:[%s1911 + $0xc] sm:$0xf]
        %v1920 = vunpack.c.l.b16 %v1912
        %v1921 = vunpack.c.l.b16 %v1913
        %v1922 = vunpack.c.l.b16 %v1914
        %v1923 = vunpack.c.l.b16 %v1915
        %v1924 = vpack.c.b16 %v1921, %v1920
        %v1925 = vpack.c.b16 %v1923, %v1922
        %1928 = vmatprep.subr.bf16.mxu0 0
        %1929 = vmatpush1.bf16.msra.mxu0 %v860
        %1930 = vmatprep.subr.bf16.mxu0 0
        %1931 = vmatpush1.bf16.msra.mxu0 %v861
        %1932 = vmatprep.subr.bf16.mxu0 0
        %1933 = vmatpush1.bf16.msra.mxu0 %v862
        %1934 = vmatprep.subr.bf16.mxu0 0
        %1935 = vmatpush1.bf16.msra.mxu0 %v863
        %1936 = vmatprep.subr.bf16.mxu0 0
        %1937 = vmatpush1.bf16.msra.mxu0 %v864
        %1938 = vmatprep.subr.bf16.mxu0 0
        %1939 = vmatpush1.bf16.msra.mxu0 %v865
        %1940 = vmatprep.subr.bf16.mxu0 0
        %1941 = vmatpush1.bf16.msra.mxu0 %v866
        %1942 = vmatprep.subr.bf16.mxu0 0
        %1943 = vmatpush1.bf16.msra.mxu0 %v867
        %1944 = vmatprep.subr.bf16.mxu0 0
        %1945 = vmatpush1.bf16.msra.mxu0 0
        %1946 = vmatprep.subr.bf16.mxu0 0
        %1947 = vmatpush1.bf16.msra.mxu0 0
        %1948 = vmatprep.subr.bf16.mxu0 0
        %1949 = vmatpush1.bf16.msra.mxu0 0
        %1950 = vmatprep.subr.bf16.mxu0 0
        %1951 = vmatpush1.bf16.msra.mxu0 0
        %1952 = vmatprep.subr.bf16.mxu0 0
        %1953 = vmatpush1.bf16.msra.mxu0 0
        %1954 = vmatprep.subr.bf16.mxu0 0
        %1955 = vmatpush1.bf16.msra.mxu0 0
        %1956 = vmatprep.subr.bf16.mxu0 0
        %1957 = vmatpush1.bf16.msra.mxu0 0
        %1958 = vmatprep.subr.bf16.mxu0 0
        %1959 = vmatpush1.bf16.msra.mxu0 0
        %1960 = vmatprep.mubr.bf16.mxu0 0
        %1961 = vmatmul.mubr.bf16.gmra.mrb[0].mxu0 %v1924
        %v1962 = vpop.f32.mrb[0].mxu0
        %v1963 = vadd.f32 0.0, %v1962
        %v1964 = vpop.f32.mrb[0].mxu0
        %v1965 = vpop.f32.mrb[0].mxu0
        %v1966 = vadd.f32 0.0, %v1965
        %v1967 = vpop.f32.mrb[0].mxu0
        %1968 = vmatprep.mubr.bf16.mxu0 0
        %1969 = vmatmul.mubr.bf16.gmra.mrb[0].mxu0 %v1925
        %v1970 = vpop.f32.mrb[0].mxu0
        %v1971 = vadd.f32 0.0, %v1970
        %v1972 = vpop.f32.mrb[0].mxu0
        %v1973 = vpop.f32.mrb[0].mxu0
        %v1974 = vadd.f32 0.0, %v1973
        %v1975 = vpop.f32.mrb[0].mxu0
        %1976 = vdwg.mxu0
        %s1977 = scalar_lea.vmem %s5, 32
        %v1978 = vld [vmem:[%s1977] sm:$0xf]
        %v1979 = vpack.c.bf16 %v1966, %v1963
        %v1980 = vpack.c.bf16 %v1974, %v1971
        %v1982 = vsel %vm1002, %v1979, 0
        %v1985 = vsel %vm1002, %v1980, 0
        %v1988 = vsel %vm736, %v1978, 0
        %1990 = vmatprep.subr.bf16.mxu0 0
        %1991 = vmatpush1.bf16.msra.mxu0 %v1988
        %1992 = vmatprep.subr.bf16.mxu0 0
        %1993 = vmatpush1.bf16.msra.mxu0 0
        %1994 = vmatprep.subr.bf16.mxu0 0
        %1995 = vmatpush1.bf16.msra.mxu0 0
        %1996 = vmatprep.subr.bf16.mxu0 0
        %1997 = vmatpush1.bf16.msra.mxu0 0
        %1998 = vmatprep.subr.bf16.mxu0 0
        %1999 = vmatpush1.bf16.msra.mxu0 0
        %2000 = vmatprep.subr.bf16.mxu0 0
        %2001 = vmatpush1.bf16.msra.mxu0 0
        %2002 = vmatprep.subr.bf16.mxu0 0
        %2003 = vmatpush1.bf16.msra.mxu0 0
        %2004 = vmatprep.subr.bf16.mxu0 0
        %2005 = vmatpush1.bf16.msra.mxu0 0
        %2006 = vmatprep.subr.bf16.mxu0 0
        %2007 = vmatpush1.bf16.msra.mxu0 0
        %2008 = vmatprep.subr.bf16.mxu0 0
        %2009 = vmatpush1.bf16.msra.mxu0 0
        %2010 = vmatprep.subr.bf16.mxu0 0
        %2011 = vmatpush1.bf16.msra.mxu0 0
        %2012 = vmatprep.subr.bf16.mxu0 0
        %2013 = vmatpush1.bf16.msra.mxu0 0
        %2014 = vmatprep.subr.bf16.mxu0 0
        %2015 = vmatpush1.bf16.msra.mxu0 0
        %2016 = vmatprep.subr.bf16.mxu0 0
        %2017 = vmatpush1.bf16.msra.mxu0 0
        %2018 = vmatprep.subr.bf16.mxu0 0
        %2019 = vmatpush1.bf16.msra.mxu0 0
        %2020 = vmatprep.subr.bf16.mxu0 0
        %2021 = vmatpush1.bf16.msra.mxu0 0
        %2022 = vmatprep.mubr.bf16.mxu0 0
        %2023 = vmatmul.mubr.bf16.gmra.mrb[0].mxu0 %v1982
        %v2024 = vpop.f32.mrb[0].mxu0
        %v2025 = vadd.f32 0.0, %v2024
        %v2026 = vpop.f32.mrb[0].mxu0
        %v2027 = vpop.f32.mrb[0].mxu0
        %v2028 = vadd.f32 0.0, %v2027
        %v2029 = vpop.f32.mrb[0].mxu0
        %2030 = vmatprep.mubr.bf16.mxu0 0
        %2031 = vmatmul.mubr.bf16.gmra.mrb[0].mxu0 %v1985
        %v2032 = vpop.f32.mrb[0].mxu0
        %v2033 = vadd.f32 0.0, %v2032
        %v2034 = vpop.f32.mrb[0].mxu0
        %v2035 = vpop.f32.mrb[0].mxu0
        %v2036 = vadd.f32 0.0, %v2035
        %v2037 = vpop.f32.mrb[0].mxu0
        %2038 = vdwg.mxu0
        %v2039 = vadd.f32 %v1907, %v2025
        %v2040 = vadd.f32 %v1908, %v2028
        %v2041 = vadd.f32 %v1909, %v2033
        %v2042 = vadd.f32 %v1910, %v2036
        %v2043 = vld [vmem:[%s3 + $0x1] sm:$0x1]
        %v2044 = vlaneseq
        %v2045 = vshrl.u32 %v2044, 7
        %v2046 = vsub.s32 0, %v2045
        %v2047 = vrot.slane %v2043, %v2046
        %v2048 = vadd.f32 %v2039, %v2047
        %v2049 = vadd.f32 %v2040, %v2047
        %v2050 = vadd.f32 %v2041, %v2047
        %v2051 = vadd.f32 %v2042, %v2047
        %v2052 = vmax.f32 %v2048, 0.0
        %v2053 = vmax.f32 %v2049, 0.0
        %v2054 = vmax.f32 %v2050, 0.0
        %v2055 = vmax.f32 %v2051, 0.0
        %v2056 = vld [vmem:[%s6] sm:$0xf]
        %v2057 = vld [vmem:[%s6 + $0x4] sm:$0xf]
        %v2058 = vpack.c.bf16 %v2053, %v2052
        %v2059 = vpack.c.bf16 %v2055, %v2054
        %v2062 = vunpack.c.l.b16 %v2056
        %v2063 = vunpack.c.l.b16 %v2057
        %v2064 = vpack.c.b16 %v2063, %v2062
        %vm2065 = vcmask 261120
        %v2067 = vsel %vm2065, %v2064, 0
        %2069 = vmatprep.subr.bf16.mxu0 0
        %2070 = vmatpush1.bf16.msra.mxu0 %v2058
        %2071 = vmatprep.subr.bf16.mxu0 0
        %2072 = vmatpush1.bf16.msra.mxu0 %v2059
        %2073 = vmatprep.subr.bf16.mxu0 0
        %2074 = vmatpush1.bf16.msra.mxu0 0
        %2075 = vmatprep.subr.bf16.mxu0 0
        %2076 = vmatpush1.bf16.msra.mxu0 0
        %2077 = vmatprep.subr.bf16.mxu0 0
        %2078 = vmatpush1.bf16.msra.mxu0 0
        %2079 = vmatprep.subr.bf16.mxu0 0
        %2080 = vmatpush1.bf16.msra.mxu0 0
        %2081 = vmatprep.subr.bf16.mxu0 0
        %2082 = vmatpush1.bf16.msra.mxu0 0
        %2083 = vmatprep.subr.bf16.mxu0 0
        %2084 = vmatpush1.bf16.msra.mxu0 0
        %2085 = vmatprep.subr.bf16.mxu0 0
        %2086 = vmatpush1.bf16.msra.mxu0 0
        %2087 = vmatprep.subr.bf16.mxu0 0
        %2088 = vmatpush1.bf16.msra.mxu0 0
        %2089 = vmatprep.subr.bf16.mxu0 0
        %2090 = vmatpush1.bf16.msra.mxu0 0
        %2091 = vmatprep.subr.bf16.mxu0 0
        %2092 = vmatpush1.bf16.msra.mxu0 0
        %2093 = vmatprep.subr.bf16.mxu0 0
        %2094 = vmatpush1.bf16.msra.mxu0 0
        %2095 = vmatprep.subr.bf16.mxu0 0
        %2096 = vmatpush1.bf16.msra.mxu0 0
        %2097 = vmatprep.subr.bf16.mxu0 0
        %2098 = vmatpush1.bf16.msra.mxu0 0
        %2099 = vmatprep.subr.bf16.mxu0 0
        %2100 = vmatpush1.bf16.msra.mxu0 0
        %2101 = vmatprep.mubr.bf16.mxu0 0
        %2102 = vmatmul.mubr.bf16.gmra.mrb[0].mxu0 %v2067
        %v2103 = vpop.f32.mrb[0].mxu0
        %v2104 = vadd.f32 0.0, %v2103
        %v2105 = vpop.f32.mrb[0].mxu0
        %v2106 = vpop.f32.mrb[0].mxu0
        %v2107 = vadd.f32 0.0, %v2106
        %v2108 = vpop.f32.mrb[0].mxu0
        %2109 = vdwg.mxu0
        %v2110 = vld [vmem:[%s7] sm:$0xf]
        %v2111 = vpack.c.bf16 %v2107, %v2104
        %s2112 = scalar_lea.vmem %s6, 8
        %v2113 = vld [vmem:[%s2112] sm:$0xf]
        %v2114 = vld [vmem:[%s2112 + $0x4] sm:$0xf]
        %v2117 = vunpack.c.l.b16 %v2113
        %v2118 = vunpack.c.l.b16 %v2114
        %v2119 = vpack.c.b16 %v2118, %v2117
        %v2121 = vsel %vm2065, %v2119, 0
        %2123 = vmatprep.subr.bf16.mxu0 0
        %2124 = vmatpush1.bf16.msra.mxu0 %v2058
        %2125 = vmatprep.subr.bf16.mxu0 0
        %2126 = vmatpush1.bf16.msra.mxu0 %v2059
        %2127 = vmatprep.subr.bf16.mxu0 0
        %2128 = vmatpush1.bf16.msra.mxu0 0
        %2129 = vmatprep.subr.bf16.mxu0 0
        %2130 = vmatpush1.bf16.msra.mxu0 0
        %2131 = vmatprep.subr.bf16.mxu0 0
        %2132 = vmatpush1.bf16.msra.mxu0 0
        %2133 = vmatprep.subr.bf16.mxu0 0
        %2134 = vmatpush1.bf16.msra.mxu0 0
        %2135 = vmatprep.subr.bf16.mxu0 0
        %2136 = vmatpush1.bf16.msra.mxu0 0
        %2137 = vmatprep.subr.bf16.mxu0 0
        %2138 = vmatpush1.bf16.msra.mxu0 0
        %2139 = vmatprep.subr.bf16.mxu0 0
        %2140 = vmatpush1.bf16.msra.mxu0 0
        %2141 = vmatprep.subr.bf16.mxu0 0
        %2142 = vmatpush1.bf16.msra.mxu0 0
        %2143 = vmatprep.subr.bf16.mxu0 0
        %2144 = vmatpush1.bf16.msra.mxu0 0
        %2145 = vmatprep.subr.bf16.mxu0 0
        %2146 = vmatpush1.bf16.msra.mxu0 0
        %2147 = vmatprep.subr.bf16.mxu0 0
        %2148 = vmatpush1.bf16.msra.mxu0 0
        %2149 = vmatprep.subr.bf16.mxu0 0
        %2150 = vmatpush1.bf16.msra.mxu0 0
        %2151 = vmatprep.subr.bf16.mxu0 0
        %2152 = vmatpush1.bf16.msra.mxu0 0
        %2153 = vmatprep.subr.bf16.mxu0 0
        %2154 = vmatpush1.bf16.msra.mxu0 0
        %2155 = vmatprep.mubr.bf16.mxu0 0
        %2156 = vmatmul.mubr.bf16.gmra.mrb[0].mxu0 %v2121
        %v2157 = vpop.f32.mrb[0].mxu0
        %v2158 = vadd.f32 0.0, %v2157
        %v2159 = vpop.f32.mrb[0].mxu0
        %v2160 = vpop.f32.mrb[0].mxu0
        %v2161 = vadd.f32 0.0, %v2160
        %v2162 = vpop.f32.mrb[0].mxu0
        %2163 = vdwg.mxu0
        %s2164 = scalar_lea.vmem %s7, 4
        %v2165 = vld [vmem:[%s2164] sm:$0xf]
        %v2166 = vpack.c.bf16 %v2161, %v2158
        %v2168 = vsel %vm1002, %v2166, 0
        %v2171 = vsel %vm736, %v2165, 0
        %2173 = vmatprep.subr.bf16.mxu0 0
        %2174 = vmatpush1.bf16.msra.mxu0 %v2171
        %2175 = vmatprep.subr.bf16.mxu0 0
        %2176 = vmatpush1.bf16.msra.mxu0 0
        %2177 = vmatprep.subr.bf16.mxu0 0
        %2178 = vmatpush1.bf16.msra.mxu0 0
        %2179 = vmatprep.subr.bf16.mxu0 0
        %2180 = vmatpush1.bf16.msra.mxu0 0
        %2181 = vmatprep.subr.bf16.mxu0 0
        %2182 = vmatpush1.bf16.msra.mxu0 0
        %2183 = vmatprep.subr.bf16.mxu0 0
        %2184 = vmatpush1.bf16.msra.mxu0 0
        %2185 = vmatprep.subr.bf16.mxu0 0
        %2186 = vmatpush1.bf16.msra.mxu0 0
        %2187 = vmatprep.subr.bf16.mxu0 0
        %2188 = vmatpush1.bf16.msra.mxu0 0
        %2189 = vmatprep.subr.bf16.mxu0 0
        %2190 = vmatpush1.bf16.msra.mxu0 0
        %2191 = vmatprep.subr.bf16.mxu0 0
        %2192 = vmatpush1.bf16.msra.mxu0 0
        %2193 = vmatprep.subr.bf16.mxu0 0
        %2194 = vmatpush1.bf16.msra.mxu0 0
        %2195 = vmatprep.subr.bf16.mxu0 0
        %2196 = vmatpush1.bf16.msra.mxu0 0
        %2197 = vmatprep.subr.bf16.mxu0 0
        %2198 = vmatpush1.bf16.msra.mxu0 0
        %2199 = vmatprep.subr.bf16.mxu0 0
        %2200 = vmatpush1.bf16.msra.mxu0 0
        %2201 = vmatprep.subr.bf16.mxu0 0
        %2202 = vmatpush1.bf16.msra.mxu0 0
        %2203 = vmatprep.subr.bf16.mxu0 0
        %2204 = vmatpush1.bf16.msra.mxu0 0
        %2205 = vmatprep.mubr.bf16.mxu0 0
        %2206 = vmatmul.mubr.bf16.gmra.mrb[0].mxu0 %v2168
        %v2207 = vpop.f32.mrb[0].mxu0
        %v2208 = vadd.f32 0.0, %v2207
        %v2209 = vpop.f32.mrb[0].mxu0
        %v2210 = vpop.f32.mrb[0].mxu0
        %v2211 = vadd.f32 0.0, %v2210
        %v2212 = vpop.f32.mrb[0].mxu0
        %2213 = vdwg.mxu0
        %v2215 = vsel %vm1002, %v2111, 0
        %v2218 = vsel %vm736, %v2110, 0
        %2220 = vmatprep.subr.bf16.mxu0 0
        %2221 = vmatpush1.bf16.msra.mxu0 %v2218
        %2222 = vmatprep.subr.bf16.mxu0 0
        %2223 = vmatpush1.bf16.msra.mxu0 0
        %2224 = vmatprep.subr.bf16.mxu0 0
        %2225 = vmatpush1.bf16.msra.mxu0 0
        %2226 = vmatprep.subr.bf16.mxu0 0
        %2227 = vmatpush1.bf16.msra.mxu0 0
        %2228 = vmatprep.subr.bf16.mxu0 0
        %2229 = vmatpush1.bf16.msra.mxu0 0
        %2230 = vmatprep.subr.bf16.mxu0 0
        %2231 = vmatpush1.bf16.msra.mxu0 0
        %2232 = vmatprep.subr.bf16.mxu0 0
        %2233 = vmatpush1.bf16.msra.mxu0 0
        %2234 = vmatprep.subr.bf16.mxu0 0
        %2235 = vmatpush1.bf16.msra.mxu0 0
        %2236 = vmatprep.subr.bf16.mxu0 0
        %2237 = vmatpush1.bf16.msra.mxu0 0
        %2238 = vmatprep.subr.bf16.mxu0 0
        %2239 = vmatpush1.bf16.msra.mxu0 0
        %2240 = vmatprep.subr.bf16.mxu0 0
        %2241 = vmatpush1.bf16.msra.mxu0 0
        %2242 = vmatprep.subr.bf16.mxu0 0
        %2243 = vmatpush1.bf16.msra.mxu0 0
        %2244 = vmatprep.subr.bf16.mxu0 0
        %2245 = vmatpush1.bf16.msra.mxu0 0
        %2246 = vmatprep.subr.bf16.mxu0 0
        %2247 = vmatpush1.bf16.msra.mxu0 0
        %2248 = vmatprep.subr.bf16.mxu0 0
        %2249 = vmatpush1.bf16.msra.mxu0 0
        %2250 = vmatprep.subr.bf16.mxu0 0
        %2251 = vmatpush1.bf16.msra.mxu0 0
        %2252 = vmatprep.mubr.bf16.mxu0 0
        %2253 = vmatmul.mubr.bf16.gmra.mrb[0].mxu0 %v2215
        %v2254 = vpop.f32.mrb[0].mxu0
        %v2255 = vadd.f32 %v2208, %v2254
        %v2256 = vpop.f32.mrb[0].mxu0
        %v2257 = vpop.f32.mrb[0].mxu0
        %v2258 = vadd.f32 %v2211, %v2257
        %v2259 = vpop.f32.mrb[0].mxu0
        %2260 = vdwg.mxu0
        %s2261 = scalar_lea.vmem %s6, 16
        %v2262 = vld [vmem:[%s2261] sm:$0xf]
        %v2263 = vld [vmem:[%s2261 + $0x4] sm:$0xf]
        %v2266 = vunpack.c.l.b16 %v2262
        %v2267 = vunpack.c.l.b16 %v2263
        %v2268 = vpack.c.b16 %v2267, %v2266
        %v2270 = vsel %vm2065, %v2268, 0
        %2272 = vmatprep.subr.bf16.mxu0 0
        %2273 = vmatpush1.bf16.msra.mxu0 %v2058
        %2274 = vmatprep.subr.bf16.mxu0 0
        %2275 = vmatpush1.bf16.msra.mxu0 %v2059
        %2276 = vmatprep.subr.bf16.mxu0 0
        %2277 = vmatpush1.bf16.msra.mxu0 0
        %2278 = vmatprep.subr.bf16.mxu0 0
        %2279 = vmatpush1.bf16.msra.mxu0 0
        %2280 = vmatprep.subr.bf16.mxu0 0
        %2281 = vmatpush1.bf16.msra.mxu0 0
        %2282 = vmatprep.subr.bf16.mxu0 0
        %2283 = vmatpush1.bf16.msra.mxu0 0
        %2284 = vmatprep.subr.bf16.mxu0 0
        %2285 = vmatpush1.bf16.msra.mxu0 0
        %2286 = vmatprep.subr.bf16.mxu0 0
        %2287 = vmatpush1.bf16.msra.mxu0 0
        %2288 = vmatprep.subr.bf16.mxu0 0
        %2289 = vmatpush1.bf16.msra.mxu0 0
        %2290 = vmatprep.subr.bf16.mxu0 0
        %2291 = vmatpush1.bf16.msra.mxu0 0
        %2292 = vmatprep.subr.bf16.mxu0 0
        %2293 = vmatpush1.bf16.msra.mxu0 0
        %2294 = vmatprep.subr.bf16.mxu0 0
        %2295 = vmatpush1.bf16.msra.mxu0 0
        %2296 = vmatprep.subr.bf16.mxu0 0
        %2297 = vmatpush1.bf16.msra.mxu0 0
        %2298 = vmatprep.subr.bf16.mxu0 0
        %2299 = vmatpush1.bf16.msra.mxu0 0
        %2300 = vmatprep.subr.bf16.mxu0 0
        %2301 = vmatpush1.bf16.msra.mxu0 0
        %2302 = vmatprep.subr.bf16.mxu0 0
        %2303 = vmatpush1.bf16.msra.mxu0 0
        %2304 = vmatprep.mubr.bf16.mxu0 0
        %2305 = vmatmul.mubr.bf16.gmra.mrb[0].mxu0 %v2270
        %v2306 = vpop.f32.mrb[0].mxu0
        %v2307 = vadd.f32 0.0, %v2306
        %v2308 = vpop.f32.mrb[0].mxu0
        %v2309 = vpop.f32.mrb[0].mxu0
        %v2310 = vadd.f32 0.0, %v2309
        %v2311 = vpop.f32.mrb[0].mxu0
        %2312 = vdwg.mxu0
        %s2313 = scalar_lea.vmem %s7, 8
        %v2314 = vld [vmem:[%s2313] sm:$0xf]
        %v2315 = vpack.c.bf16 %v2310, %v2307
        %v2317 = vsel %vm1002, %v2315, 0
        %v2320 = vsel %vm736, %v2314, 0
        %2322 = vmatprep.subr.bf16.mxu0 0
        %2323 = vmatpush1.bf16.msra.mxu0 %v2320
        %2324 = vmatprep.subr.bf16.mxu0 0
        %2325 = vmatpush1.bf16.msra.mxu0 0
        %2326 = vmatprep.subr.bf16.mxu0 0
        %2327 = vmatpush1.bf16.msra.mxu0 0
        %2328 = vmatprep.subr.bf16.mxu0 0
        %2329 = vmatpush1.bf16.msra.mxu0 0
        %2330 = vmatprep.subr.bf16.mxu0 0
        %2331 = vmatpush1.bf16.msra.mxu0 0
        %2332 = vmatprep.subr.bf16.mxu0 0
        %2333 = vmatpush1.bf16.msra.mxu0 0
        %2334 = vmatprep.subr.bf16.mxu0 0
        %2335 = vmatpush1.bf16.msra.mxu0 0
        %2336 = vmatprep.subr.bf16.mxu0 0
        %2337 = vmatpush1.bf16.msra.mxu0 0
        %2338 = vmatprep.subr.bf16.mxu0 0
        %2339 = vmatpush1.bf16.msra.mxu0 0
        %2340 = vmatprep.subr.bf16.mxu0 0
        %2341 = vmatpush1.bf16.msra.mxu0 0
        %2342 = vmatprep.subr.bf16.mxu0 0
        %2343 = vmatpush1.bf16.msra.mxu0 0
        %2344 = vmatprep.subr.bf16.mxu0 0
        %2345 = vmatpush1.bf16.msra.mxu0 0
        %2346 = vmatprep.subr.bf16.mxu0 0
        %2347 = vmatpush1.bf16.msra.mxu0 0
        %2348 = vmatprep.subr.bf16.mxu0 0
        %2349 = vmatpush1.bf16.msra.mxu0 0
        %2350 = vmatprep.subr.bf16.mxu0 0
        %2351 = vmatpush1.bf16.msra.mxu0 0
        %2352 = vmatprep.subr.bf16.mxu0 0
        %2353 = vmatpush1.bf16.msra.mxu0 0
        %2354 = vmatprep.mubr.bf16.mxu0 0
        %2355 = vmatmul.mubr.bf16.gmra.mrb[0].mxu0 %v2317
        %v2356 = vpop.f32.mrb[0].mxu0
        %v2357 = vadd.f32 0.0, %v2356
        %v2358 = vpop.f32.mrb[0].mxu0
        %v2359 = vpop.f32.mrb[0].mxu0
        %v2360 = vadd.f32 0.0, %v2359
        %v2361 = vpop.f32.mrb[0].mxu0
        %2362 = vdwg.mxu0
        %v2363 = vadd.f32 %v2255, %v2357
        %v2364 = vadd.f32 %v2258, %v2360
        %s2365 = scalar_lea.vmem %s6, 24
        %v2366 = vld [vmem:[%s2365] sm:$0xf]
        %v2367 = vld [vmem:[%s2365 + $0x4] sm:$0xf]
        %v2370 = vunpack.c.l.b16 %v2366
        %v2371 = vunpack.c.l.b16 %v2367
        %v2372 = vpack.c.b16 %v2371, %v2370
        %v2374 = vsel %vm2065, %v2372, 0
        %2376 = vmatprep.subr.bf16.mxu0 0
        %2377 = vmatpush1.bf16.msra.mxu0 %v2058
        %2378 = vmatprep.subr.bf16.mxu0 0
        %2379 = vmatpush1.bf16.msra.mxu0 %v2059
        %2380 = vmatprep.subr.bf16.mxu0 0
        %2381 = vmatpush1.bf16.msra.mxu0 0
        %2382 = vmatprep.subr.bf16.mxu0 0
        %2383 = vmatpush1.bf16.msra.mxu0 0
        %2384 = vmatprep.subr.bf16.mxu0 0
        %2385 = vmatpush1.bf16.msra.mxu0 0
        %2386 = vmatprep.subr.bf16.mxu0 0
        %2387 = vmatpush1.bf16.msra.mxu0 0
        %2388 = vmatprep.subr.bf16.mxu0 0
        %2389 = vmatpush1.bf16.msra.mxu0 0
        %2390 = vmatprep.subr.bf16.mxu0 0
        %2391 = vmatpush1.bf16.msra.mxu0 0
        %2392 = vmatprep.subr.bf16.mxu0 0
        %2393 = vmatpush1.bf16.msra.mxu0 0
        %2394 = vmatprep.subr.bf16.mxu0 0
        %2395 = vmatpush1.bf16.msra.mxu0 0
        %2396 = vmatprep.subr.bf16.mxu0 0
        %2397 = vmatpush1.bf16.msra.mxu0 0
        %2398 = vmatprep.subr.bf16.mxu0 0
        %2399 = vmatpush1.bf16.msra.mxu0 0
        %2400 = vmatprep.subr.bf16.mxu0 0
        %2401 = vmatpush1.bf16.msra.mxu0 0
        %2402 = vmatprep.subr.bf16.mxu0 0
        %2403 = vmatpush1.bf16.msra.mxu0 0
        %2404 = vmatprep.subr.bf16.mxu0 0
        %2405 = vmatpush1.bf16.msra.mxu0 0
        %2406 = vmatprep.subr.bf16.mxu0 0
        %2407 = vmatpush1.bf16.msra.mxu0 0
        %2408 = vmatprep.mubr.bf16.mxu0 0
        %2409 = vmatmul.mubr.bf16.gmra.mrb[0].mxu0 %v2374
        %v2410 = vpop.f32.mrb[0].mxu0
        %v2411 = vadd.f32 0.0, %v2410
        %v2412 = vpop.f32.mrb[0].mxu0
        %v2413 = vpop.f32.mrb[0].mxu0
        %v2414 = vadd.f32 0.0, %v2413
        %v2415 = vpop.f32.mrb[0].mxu0
        %2416 = vdwg.mxu0
        %s2417 = scalar_lea.vmem %s7, 12
        %v2418 = vld [vmem:[%s2417] sm:$0xf]
        %v2419 = vpack.c.bf16 %v2414, %v2411
        %v2421 = vsel %vm1002, %v2419, 0
        %v2424 = vsel %vm736, %v2418, 0
        %2426 = vmatprep.subr.bf16.mxu0 0
        %2427 = vmatpush1.bf16.msra.mxu0 %v2424
        %2428 = vmatprep.subr.bf16.mxu0 0
        %2429 = vmatpush1.bf16.msra.mxu0 0
        %2430 = vmatprep.subr.bf16.mxu0 0
        %2431 = vmatpush1.bf16.msra.mxu0 0
        %2432 = vmatprep.subr.bf16.mxu0 0
        %2433 = vmatpush1.bf16.msra.mxu0 0
        %2434 = vmatprep.subr.bf16.mxu0 0
        %2435 = vmatpush1.bf16.msra.mxu0 0
        %2436 = vmatprep.subr.bf16.mxu0 0
        %2437 = vmatpush1.bf16.msra.mxu0 0
        %2438 = vmatprep.subr.bf16.mxu0 0
        %2439 = vmatpush1.bf16.msra.mxu0 0
        %2440 = vmatprep.subr.bf16.mxu0 0
        %2441 = vmatpush1.bf16.msra.mxu0 0
        %2442 = vmatprep.subr.bf16.mxu0 0
        %2443 = vmatpush1.bf16.msra.mxu0 0
        %2444 = vmatprep.subr.bf16.mxu0 0
        %2445 = vmatpush1.bf16.msra.mxu0 0
        %2446 = vmatprep.subr.bf16.mxu0 0
        %2447 = vmatpush1.bf16.msra.mxu0 0
        %2448 = vmatprep.subr.bf16.mxu0 0
        %2449 = vmatpush1.bf16.msra.mxu0 0
        %2450 = vmatprep.subr.bf16.mxu0 0
        %2451 = vmatpush1.bf16.msra.mxu0 0
        %2452 = vmatprep.subr.bf16.mxu0 0
        %2453 = vmatpush1.bf16.msra.mxu0 0
        %2454 = vmatprep.subr.bf16.mxu0 0
        %2455 = vmatpush1.bf16.msra.mxu0 0
        %2456 = vmatprep.subr.bf16.mxu0 0
        %2457 = vmatpush1.bf16.msra.mxu0 0
        %2458 = vmatprep.mubr.bf16.mxu0 0
        %2459 = vmatmul.mubr.bf16.gmra.mrb[0].mxu0 %v2421
        %v2460 = vpop.f32.mrb[0].mxu0
        %v2461 = vadd.f32 0.0, %v2460
        %v2462 = vpop.f32.mrb[0].mxu0
        %v2463 = vpop.f32.mrb[0].mxu0
        %v2464 = vadd.f32 0.0, %v2463
        %v2465 = vpop.f32.mrb[0].mxu0
        %2466 = vdwg.mxu0
        %v2467 = vadd.f32 %v2363, %v2461
        %v2468 = vadd.f32 %v2364, %v2464
        %v2469 = vld [vmem:[%s8] sm:$0xf]
        %v2470 = vld [vmem:[%s8 + $0x4] sm:$0xf]
        %v2471 = vld [vmem:[%s673] sm:$0xff]
        %v2472 = vpack.c.bf16 %v2471, %v2471
        %v2475 = vunpack.c.l.b16 %v2469
        %v2476 = vunpack.c.l.b16 %v2470
        %v2477 = vpack.c.b16 %v2476, %v2475
        %v2479 = vsel %vm1002, %v2477, 0
        %v2482 = vsel %vm736, %v2472, 0
        %2484 = vmatprep.subr.bf16.mxu0 0
        %2485 = vmatpush1.bf16.msra.mxu0 %v2482
        %2486 = vmatprep.subr.bf16.mxu0 0
        %2487 = vmatpush1.bf16.msra.mxu0 0
        %2488 = vmatprep.subr.bf16.mxu0 0
        %2489 = vmatpush1.bf16.msra.mxu0 0
        %2490 = vmatprep.subr.bf16.mxu0 0
        %2491 = vmatpush1.bf16.msra.mxu0 0
        %2492 = vmatprep.subr.bf16.mxu0 0
        %2493 = vmatpush1.bf16.msra.mxu0 0
        %2494 = vmatprep.subr.bf16.mxu0 0
        %2495 = vmatpush1.bf16.msra.mxu0 0
        %2496 = vmatprep.subr.bf16.mxu0 0
        %2497 = vmatpush1.bf16.msra.mxu0 0
        %2498 = vmatprep.subr.bf16.mxu0 0
        %2499 = vmatpush1.bf16.msra.mxu0 0
        %2500 = vmatprep.subr.bf16.mxu0 0
        %2501 = vmatpush1.bf16.msra.mxu0 0
        %2502 = vmatprep.subr.bf16.mxu0 0
        %2503 = vmatpush1.bf16.msra.mxu0 0
        %2504 = vmatprep.subr.bf16.mxu0 0
        %2505 = vmatpush1.bf16.msra.mxu0 0
        %2506 = vmatprep.subr.bf16.mxu0 0
        %2507 = vmatpush1.bf16.msra.mxu0 0
        %2508 = vmatprep.subr.bf16.mxu0 0
        %2509 = vmatpush1.bf16.msra.mxu0 0
        %2510 = vmatprep.subr.bf16.mxu0 0
        %2511 = vmatpush1.bf16.msra.mxu0 0
        %2512 = vmatprep.subr.bf16.mxu0 0
        %2513 = vmatpush1.bf16.msra.mxu0 0
        %2514 = vmatprep.subr.bf16.mxu0 0
        %2515 = vmatpush1.bf16.msra.mxu0 0
        %2516 = vmatprep.mubr.bf16.mxu0 0
        %2517 = vmatmul.mubr.bf16.gmra.mrb[0].mxu0 %v2479
        %v2518 = vpop.f32.mrb[0].mxu0
        %v2519 = vadd.f32 0.0, %v2518
        %v2520 = vpop.f32.mrb[0].mxu0
        %v2521 = vpop.f32.mrb[0].mxu0
        %v2522 = vadd.f32 0.0, %v2521
        %v2523 = vpop.f32.mrb[0].mxu0
        %2524 = vdwg.mxu0
        %v2525 = vadd.f32 %v2467, %v2519
        %v2526 = vadd.f32 %v2468, %v2522
        %v2527 = vld [vmem:[%s9] sm:$0xff]
        %v2528 = vld [vmem:[%s9 + $0x8] sm:$0xff]
        %v2529 = vadd.f32 %v2525, %v2527
        %v2530 = vadd.f32 %v2526, %v2528
        %v2531 = vld [vmem:[%s10] sm:$0xff]
        %v2532 = vld [vmem:[%s10 + $0x8] sm:$0xff]
        %v2533 = vld [vmem:[%s10 + $0x10] sm:$0xff]
        %v2534 = vld [vmem:[%s10 + $0x18] sm:$0xff]
        %v2535 = vld [vmem:[%s10 + $0x20] sm:$0xff]
        %v2536 = vld [vmem:[%s10 + $0x28] sm:$0xff]
        %v2537 = vld [vmem:[%s10 + $0x30] sm:$0xff]
        %v2538 = vld [vmem:[%s10 + $0x38] sm:$0xff]
        %v2539 = vld [vmem:[%s11] sm:$0xff]
        %v2540 = vld [vmem:[%s11 + $0x8] sm:$0xff]
        %v2541 = vld [vmem:[%s11 + $0x10] sm:$0xff]
        %v2542 = vld [vmem:[%s11 + $0x18] sm:$0xff]
        %v2543 = vld [vmem:[%s11 + $0x20] sm:$0xff]
        %v2544 = vld [vmem:[%s11 + $0x28] sm:$0xff]
        %v2545 = vld [vmem:[%s11 + $0x30] sm:$0xff]
        %v2546 = vld [vmem:[%s11 + $0x38] sm:$0xff]
        %v2547 = vld [vmem:[%s16] sm:$0xff]
        %v2548 = vld [vmem:[%s12] sm:$0xf]
        %v2549 = vld [vmem:[%s12 + $0x4] sm:$0xf]
        %v2550 = vld [vmem:[%s12 + $0x8] sm:$0xf]
        %v2551 = vld [vmem:[%s12 + $0xc] sm:$0xf]
        %v2552 = vpack.c.bf16 %v2530, %v2529
        %v2553 = vlaneseq
        %v2554 = vshrl.u32 %v2553, 7
        %v2555 = vsub.s32 0, %v2554
        %v2556 = vrot.slane %v2547, %v2555
        %v2561 = vunpack.c.l.b16 %v2548
        %v2562 = vunpack.c.l.b16 %v2549
        %v2563 = vunpack.c.l.b16 %v2550
        %v2564 = vunpack.c.l.b16 %v2551
        %v2565 = vpack.c.b16 %v2562, %v2561
        %v2566 = vpack.c.b16 %v2564, %v2563
        %v2570 = vsel %vm2065, %v2552, 0
        %2572 = vmatprep.subr.bf16.mxu0 0
        %2573 = vmatpush1.bf16.msra.mxu0 %v2565
        %2574 = vmatprep.subr.bf16.mxu0 0
        %2575 = vmatpush1.bf16.msra.mxu0 %v2566
        %2576 = vmatprep.subr.bf16.mxu0 0
        %2577 = vmatpush1.bf16.msra.mxu0 0
        %2578 = vmatprep.subr.bf16.mxu0 0
        %2579 = vmatpush1.bf16.msra.mxu0 0
        %2580 = vmatprep.subr.bf16.mxu0 0
        %2581 = vmatpush1.bf16.msra.mxu0 0
        %2582 = vmatprep.subr.bf16.mxu0 0
        %2583 = vmatpush1.bf16.msra.mxu0 0
        %2584 = vmatprep.subr.bf16.mxu0 0
        %2585 = vmatpush1.bf16.msra.mxu0 0
        %2586 = vmatprep.subr.bf16.mxu0 0
        %2587 = vmatpush1.bf16.msra.mxu0 0
        %2588 = vmatprep.subr.bf16.mxu0 0
        %2589 = vmatpush1.bf16.msra.mxu0 0
        %2590 = vmatprep.subr.bf16.mxu0 0
        %2591 = vmatpush1.bf16.msra.mxu0 0
        %2592 = vmatprep.subr.bf16.mxu0 0
        %2593 = vmatpush1.bf16.msra.mxu0 0
        %2594 = vmatprep.subr.bf16.mxu0 0
        %2595 = vmatpush1.bf16.msra.mxu0 0
        %2596 = vmatprep.subr.bf16.mxu0 0
        %2597 = vmatpush1.bf16.msra.mxu0 0
        %2598 = vmatprep.subr.bf16.mxu0 0
        %2599 = vmatpush1.bf16.msra.mxu0 0
        %2600 = vmatprep.subr.bf16.mxu0 0
        %2601 = vmatpush1.bf16.msra.mxu0 0
        %2602 = vmatprep.subr.bf16.mxu0 0
        %2603 = vmatpush1.bf16.msra.mxu0 0
        %2604 = vmatprep.mubr.bf16.mxu0 0
        %2605 = vmatmul.mubr.bf16.gmra.mrb[0].mxu0 %v2570
        %v2606 = vpop.f32.mrb[0].mxu0
        %v2607 = vadd.f32 %v2556, %v2606
        %v2608 = vpop.f32.mrb[0].mxu0
        %v2609 = vpop.f32.mrb[0].mxu0
        %v2610 = vadd.f32 %v2556, %v2609
        %v2611 = vpop.f32.mrb[0].mxu0
        %2612 = vdwg.mxu0
        %v2613 = vmul.f32 %v2607, %v2531
        %v2614 = vmul.f32 %v2610, %v2532
        %v2615 = vmul.f32 %v2607, %v2533
        %v2616 = vmul.f32 %v2610, %v2534
        %v2617 = vmul.f32 %v2607, %v2535
        %v2618 = vmul.f32 %v2610, %v2536
        %v2619 = vmul.f32 %v2607, %v2537
        %v2620 = vmul.f32 %v2610, %v2538
        %v2621 = vpack.c.bf16 %v2614, %v2613
        %v2622 = vpack.c.bf16 %v2616, %v2615
        %v2623 = vpack.c.bf16 %v2618, %v2617
        %v2624 = vpack.c.bf16 %v2620, %v2619
        %v2625 = vpack.c.bf16 %v2610, %v2607
        %2627 = vrot.lane.b32.xlu0 %v2625, 96
        %v2628 = vpop.permute.xlu0 %2627
        %v2630 = vsel %vm2065, %v2621, 0
        %v2633 = vsel %vm2065, %v2622, 0
        %v2636 = vsel %vm2065, %v2623, 0
        %v2639 = vsel %vm2065, %v2624, 0
        %v2642 = vsel %vm2065, %v2628, 0
        %2644 = vmatprep.subr.bf16.mxu0 0
        %2645 = vmatpush1.bf16.xpose.msra.mxu0 %v2642
        %2646 = vmatprep.subr.bf16.mxu0 0
        %2647 = vmatpush1.bf16.xpose.msra.mxu0 0
        %2648 = vmatprep.subr.bf16.mxu0 0
        %2649 = vmatpush1.bf16.xpose.msra.mxu0 0
        %2650 = vmatprep.subr.bf16.mxu0 0
        %2651 = vmatpush1.bf16.xpose.msra.mxu0 0
        %2652 = vmatprep.subr.bf16.mxu0 0
        %2653 = vmatpush1.bf16.xpose.msra.mxu0 0
        %2654 = vmatprep.subr.bf16.mxu0 0
        %2655 = vmatpush1.bf16.xpose.msra.mxu0 0
        %2656 = vmatprep.subr.bf16.mxu0 0
        %2657 = vmatpush1.bf16.xpose.msra.mxu0 0
        %2658 = vmatprep.subr.bf16.mxu0 0
        %2659 = vmatpush1.bf16.xpose.msra.mxu0 0
        %2660 = vmatprep.subr.bf16.mxu0 0
        %2661 = vmatpush1.bf16.xpose.msra.mxu0 0
        %2662 = vmatprep.subr.bf16.mxu0 0
        %2663 = vmatpush1.bf16.xpose.msra.mxu0 0
        %2664 = vmatprep.subr.bf16.mxu0 0
        %2665 = vmatpush1.bf16.xpose.msra.mxu0 0
        %2666 = vmatprep.subr.bf16.mxu0 0
        %2667 = vmatpush1.bf16.xpose.msra.mxu0 0
        %2668 = vmatprep.subr.bf16.mxu0 0
        %2669 = vmatpush1.bf16.xpose.msra.mxu0 0
        %2670 = vmatprep.subr.bf16.mxu0 0
        %2671 = vmatpush1.bf16.xpose.msra.mxu0 0
        %2672 = vmatprep.subr.bf16.mxu0 0
        %2673 = vmatpush1.bf16.xpose.msra.mxu0 0
        %2674 = vmatprep.subr.bf16.mxu0 0
        %2675 = vmatpush1.bf16.xpose.msra.mxu0 0
        %2676 = vmatprep.mubr.bf16.mxu0 0
        %2677 = vmatmul.mubr.bf16.gmra.mrb[0].mxu0 %v2630
        %v2678 = vpop.f32.mrb[0].mxu0
        %v2679 = vadd.f32 0.0, %v2678
        %v2680 = vpop.f32.mrb[0].mxu0
        %v2681 = vpop.f32.mrb[0].mxu0
        %v2682 = vadd.f32 0.0, %v2681
        %v2683 = vpop.f32.mrb[0].mxu0
        %2684 = vmatprep.mubr.bf16.mxu0 0
        %2685 = vmatmul.mubr.bf16.gmra.mrb[0].mxu0 %v2633
        %v2686 = vpop.f32.mrb[0].mxu0
        %v2687 = vadd.f32 0.0, %v2686
        %v2688 = vpop.f32.mrb[0].mxu0
        %v2689 = vpop.f32.mrb[0].mxu0
        %v2690 = vadd.f32 0.0, %v2689
        %v2691 = vpop.f32.mrb[0].mxu0
        %2692 = vmatprep.mubr.bf16.mxu0 0
        %2693 = vmatmul.mubr.bf16.gmra.mrb[0].mxu0 %v2636
        %v2694 = vpop.f32.mrb[0].mxu0
        %v2695 = vadd.f32 0.0, %v2694
        %v2696 = vpop.f32.mrb[0].mxu0
        %v2697 = vpop.f32.mrb[0].mxu0
        %v2698 = vadd.f32 0.0, %v2697
        %v2699 = vpop.f32.mrb[0].mxu0
        %2700 = vmatprep.mubr.bf16.mxu0 0
        %2701 = vmatmul.mubr.bf16.gmra.mrb[0].mxu0 %v2639
        %v2702 = vpop.f32.mrb[0].mxu0
        %v2703 = vadd.f32 0.0, %v2702
        %v2704 = vpop.f32.mrb[0].mxu0
        %v2705 = vpop.f32.mrb[0].mxu0
        %v2706 = vadd.f32 0.0, %v2705
        %v2707 = vpop.f32.mrb[0].mxu0
        %2708 = vdwg.mxu0
        %v2709 = vmul.f32 %v2679, 0.35355338
        %v2710 = vmul.f32 %v2682, 0.35355338
        %v2711 = vmul.f32 %v2687, 0.35355338
        %v2712 = vmul.f32 %v2690, 0.35355338
        %v2713 = vmul.f32 %v2695, 0.35355338
        %v2714 = vmul.f32 %v2698, 0.35355338
        %v2715 = vmul.f32 %v2703, 0.35355338
        %v2716 = vmul.f32 %v2706, 0.35355338
        %v2717 = vadd.f32 %v2709, %v2539
        %v2718 = vadd.f32 %v2710, %v2540
        %v2719 = vadd.f32 %v2711, %v2541
        %v2720 = vadd.f32 %v2712, %v2542
        %v2721 = vadd.f32 %v2713, %v2543
        %v2722 = vadd.f32 %v2714, %v2544
        %v2723 = vadd.f32 %v2715, %v2545
        %v2724 = vadd.f32 %v2716, %v2546
        %vm2725 = vcmask 130048
        %v2726 = vsel %vm2725, %v2717, -inf
        %2727 = vmax.xlane.f32.xlu0 %v2726
        %v2728 = vpop.xlane.xlu0 %2727
        %v2729 = vsel %vm2725, %v2718, -inf
        %2730 = vmax.xlane.f32.xlu0 %v2729
        %v2731 = vpop.xlane.xlu0 %2730
        %v2732 = vsel %vm2725, %v2719, -inf
        %2733 = vmax.xlane.f32.xlu0 %v2732
        %v2734 = vpop.xlane.xlu0 %2733
        %v2735 = vsel %vm2725, %v2720, -inf
        %2736 = vmax.xlane.f32.xlu0 %v2735
        %v2737 = vpop.xlane.xlu0 %2736
        %v2738 = vsel %vm2725, %v2721, -inf
        %2739 = vmax.xlane.f32.xlu0 %v2738
        %v2740 = vpop.xlane.xlu0 %2739
        %v2741 = vsel %vm2725, %v2722, -inf
        %2742 = vmax.xlane.f32.xlu0 %v2741
        %v2743 = vpop.xlane.xlu0 %2742
        %v2744 = vsel %vm2725, %v2723, -inf
        %2745 = vmax.xlane.f32.xlu0 %v2744
        %v2746 = vpop.xlane.xlu0 %2745
        %v2747 = vsel %vm2725, %v2724, -inf
        %2748 = vmax.xlane.f32.xlu0 %v2747
        %v2749 = vpop.xlane.xlu0 %2748
        %v2750 = vsub.f32 %v2717, %v2728
        %v2751 = vsub.f32 %v2718, %v2731
        %v2752 = vsub.f32 %v2719, %v2734
        %v2753 = vsub.f32 %v2720, %v2737
        %v2754 = vsub.f32 %v2721, %v2740
        %v2755 = vsub.f32 %v2722, %v2743
        %v2756 = vsub.f32 %v2723, %v2746
        %v2757 = vsub.f32 %v2724, %v2749
        %v2758 = vmul.f32 %v2750, 1.442695
        %v2759 = vpow.pop %v2758
        %v2760 = vmul.f32 %v2751, 1.442695
        %v2761 = vpow.pop %v2760
        %v2762 = vmul.f32 %v2752, 1.442695
        %v2763 = vpow.pop %v2762
        %v2764 = vmul.f32 %v2753, 1.442695
        %v2765 = vpow.pop %v2764
        %v2766 = vmul.f32 %v2754, 1.442695
        %v2767 = vpow.pop %v2766
        %v2768 = vmul.f32 %v2755, 1.442695
        %v2769 = vpow.pop %v2768
        %v2770 = vmul.f32 %v2756, 1.442695
        %v2771 = vpow.pop %v2770
        %v2772 = vmul.f32 %v2757, 1.442695
        %v2773 = vpow.pop %v2772
        %v2774 = vsel %vm2725, %v2759, 0.0
        %2775 = vadd.xlane.f32.xlu0 %v2774
        %v2776 = vpop.xlane.xlu0 %2775
        %v2777 = vsel %vm2725, %v2761, 0.0
        %2778 = vadd.xlane.f32.xlu0 %v2777
        %v2779 = vpop.xlane.xlu0 %2778
        %v2780 = vsel %vm2725, %v2763, 0.0
        %2781 = vadd.xlane.f32.xlu0 %v2780
        %v2782 = vpop.xlane.xlu0 %2781
        %v2783 = vsel %vm2725, %v2765, 0.0
        %2784 = vadd.xlane.f32.xlu0 %v2783
        %v2785 = vpop.xlane.xlu0 %2784
        %v2786 = vsel %vm2725, %v2767, 0.0
        %2787 = vadd.xlane.f32.xlu0 %v2786
        %v2788 = vpop.xlane.xlu0 %2787
        %v2789 = vsel %vm2725, %v2769, 0.0
        %2790 = vadd.xlane.f32.xlu0 %v2789
        %v2791 = vpop.xlane.xlu0 %2790
        %v2792 = vsel %vm2725, %v2771, 0.0
        %2793 = vadd.xlane.f32.xlu0 %v2792
        %v2794 = vpop.xlane.xlu0 %2793
        %v2795 = vsel %vm2725, %v2773, 0.0
        %2796 = vadd.xlane.f32.xlu0 %v2795
        %v2797 = vpop.xlane.xlu0 %2796
        %v2798 = vrcp.pop %v2776
        %v2799 = vrcp.pop %v2779
        %v2800 = vrcp.pop %v2782
        %v2801 = vrcp.pop %v2785
        %v2802 = vrcp.pop %v2788
        %v2803 = vrcp.pop %v2791
        %v2804 = vrcp.pop %v2794
        %v2805 = vrcp.pop %v2797
        %v2806 = vmul.f32 %v2759, %v2798
        %v2807 = vmul.f32 %v2761, %v2799
        %v2808 = vmul.f32 %v2763, %v2800
        %v2809 = vmul.f32 %v2765, %v2801
        %v2810 = vmul.f32 %v2767, %v2802
        %v2811 = vmul.f32 %v2769, %v2803
        %v2812 = vmul.f32 %v2771, %v2804
        %v2813 = vmul.f32 %v2773, %v2805
        %v2814 = vpack.c.bf16 %v2807, %v2806
        %v2815 = vpack.c.bf16 %v2809, %v2808
        %v2816 = vpack.c.bf16 %v2811, %v2810
        %v2817 = vpack.c.bf16 %v2813, %v2812
        %2818 = vrot.lane.b32.xlu0 %v2625, 64
        %v2819 = vpop.permute.xlu0 %2818
        %v2822 = vsel %vm2725, %v2814, 0
        %v2825 = vsel %vm2725, %v2815, 0
        %v2828 = vsel %vm2725, %v2816, 0
        %v2831 = vsel %vm2725, %v2817, 0
        %2833 = vmatprep.subr.bf16.mxu0 0
        %2834 = vmatpush1.bf16.msra.mxu0 %v2819
        %2835 = vmatprep.subr.bf16.mxu0 0
        %2836 = vmatpush1.bf16.msra.mxu0 0
        %2837 = vmatprep.subr.bf16.mxu0 0
        %2838 = vmatpush1.bf16.msra.mxu0 0
        %2839 = vmatprep.subr.bf16.mxu0 0
        %2840 = vmatpush1.bf16.msra.mxu0 0
        %2841 = vmatprep.subr.bf16.mxu0 0
        %2842 = vmatpush1.bf16.msra.mxu0 0
        %2843 = vmatprep.subr.bf16.mxu0 0
        %2844 = vmatpush1.bf16.msra.mxu0 0
        %2845 = vmatprep.subr.bf16.mxu0 0
        %2846 = vmatpush1.bf16.msra.mxu0 0
        %2847 = vmatprep.subr.bf16.mxu0 0
        %2848 = vmatpush1.bf16.msra.mxu0 0
        %2849 = vmatprep.subr.bf16.mxu0 0
        %2850 = vmatpush1.bf16.msra.mxu0 0
        %2851 = vmatprep.subr.bf16.mxu0 0
        %2852 = vmatpush1.bf16.msra.mxu0 0
        %2853 = vmatprep.subr.bf16.mxu0 0
        %2854 = vmatpush1.bf16.msra.mxu0 0
        %2855 = vmatprep.subr.bf16.mxu0 0
        %2856 = vmatpush1.bf16.msra.mxu0 0
        %2857 = vmatprep.subr.bf16.mxu0 0
        %2858 = vmatpush1.bf16.msra.mxu0 0
        %2859 = vmatprep.subr.bf16.mxu0 0
        %2860 = vmatpush1.bf16.msra.mxu0 0
        %2861 = vmatprep.subr.bf16.mxu0 0
        %2862 = vmatpush1.bf16.msra.mxu0 0
        %2863 = vmatprep.subr.bf16.mxu0 0
        %2864 = vmatpush1.bf16.msra.mxu0 0
        %2865 = vmatprep.mubr.bf16.mxu0 0
        %2866 = vmatmul.mubr.bf16.gmra.mrb[0].mxu0 %v2822
        %v2867 = vpop.f32.mrb[0].mxu0
        %v2868 = vadd.f32 0.0, %v2867
        %v2869 = vpop.f32.mrb[0].mxu0
        %v2870 = vpop.f32.mrb[0].mxu0
        %v2871 = vadd.f32 0.0, %v2870
        %v2872 = vpop.f32.mrb[0].mxu0
        %2873 = vmatprep.mubr.bf16.mxu0 0
        %2874 = vmatmul.mubr.bf16.gmra.mrb[0].mxu0 %v2825
        %v2875 = vpop.f32.mrb[0].mxu0
        %v2876 = vadd.f32 0.0, %v2875
        %v2877 = vpop.f32.mrb[0].mxu0
        %v2878 = vpop.f32.mrb[0].mxu0
        %v2879 = vadd.f32 0.0, %v2878
        %v2880 = vpop.f32.mrb[0].mxu0
        %2881 = vmatprep.mubr.bf16.mxu0 0
        %2882 = vmatmul.mubr.bf16.gmra.mrb[0].mxu0 %v2828
        %v2883 = vpop.f32.mrb[0].mxu0
        %v2884 = vadd.f32 0.0, %v2883
        %v2885 = vpop.f32.mrb[0].mxu0
        %v2886 = vpop.f32.mrb[0].mxu0
        %v2887 = vadd.f32 0.0, %v2886
        %v2888 = vpop.f32.mrb[0].mxu0
        %2889 = vmatprep.mubr.bf16.mxu0 0
        %2890 = vmatmul.mubr.bf16.gmra.mrb[0].mxu0 %v2831
        %v2891 = vpop.f32.mrb[0].mxu0
        %v2892 = vadd.f32 0.0, %v2891
        %v2893 = vpop.f32.mrb[0].mxu0
        %v2894 = vpop.f32.mrb[0].mxu0
        %v2895 = vadd.f32 0.0, %v2894
        %v2896 = vpop.f32.mrb[0].mxu0
        %2897 = vdwg.mxu0
        %v2898 = vmul.f32 %v2868, %v2531
        %v2899 = vmul.f32 %v2871, %v2532
        %v2900 = vmul.f32 %v2876, %v2533
        %v2901 = vmul.f32 %v2879, %v2534
        %v2902 = vmul.f32 %v2884, %v2535
        %v2903 = vmul.f32 %v2887, %v2536
        %v2904 = vmul.f32 %v2892, %v2537
        %v2905 = vmul.f32 %v2895, %v2538
        %v2906 = vadd.f32 %v2898, %v2900
        %v2907 = vadd.f32 %v2899, %v2901
        %v2908 = vadd.f32 %v2906, %v2902
        %v2909 = vadd.f32 %v2907, %v2903
        %v2910 = vadd.f32 %v2908, %v2904
        %v2911 = vadd.f32 %v2909, %v2905
        %v2912 = vld [vmem:[%s13] sm:$0xf]
        %v2913 = vld [vmem:[%s13 + $0x4] sm:$0xf]
        %v2914 = vld [vmem:[%s13 + $0x8] sm:$0xf]
        %v2915 = vld [vmem:[%s13 + $0xc] sm:$0xf]
        %v2916 = vpack.c.bf16 %v2911, %v2910
        %v2917 = vlaneseq
        %v2918 = vshrl.u32 %v2917, 7
        %v2919 = vsub.s32 1, %v2918
        %v2920 = vrot.slane %v2547, %v2919
        %v2925 = vunpack.c.l.b16 %v2912
        %v2926 = vunpack.c.l.b16 %v2913
        %v2927 = vunpack.c.l.b16 %v2914
        %v2928 = vunpack.c.l.b16 %v2915
        %v2929 = vpack.c.b16 %v2926, %v2925
        %v2930 = vpack.c.b16 %v2928, %v2927
        %v2934 = vsel %vm2065, %v2916, 0
        %2936 = vmatprep.subr.bf16.mxu0 0
        %2937 = vmatpush1.bf16.msra.mxu0 %v2929
        %2938 = vmatprep.subr.bf16.mxu0 0
        %2939 = vmatpush1.bf16.msra.mxu0 %v2930
        %2940 = vmatprep.subr.bf16.mxu0 0
        %2941 = vmatpush1.bf16.msra.mxu0 0
        %2942 = vmatprep.subr.bf16.mxu0 0
        %2943 = vmatpush1.bf16.msra.mxu0 0
        %2944 = vmatprep.subr.bf16.mxu0 0
        %2945 = vmatpush1.bf16.msra.mxu0 0
        %2946 = vmatprep.subr.bf16.mxu0 0
        %2947 = vmatpush1.bf16.msra.mxu0 0
        %2948 = vmatprep.subr.bf16.mxu0 0
        %2949 = vmatpush1.bf16.msra.mxu0 0
        %2950 = vmatprep.subr.bf16.mxu0 0
        %2951 = vmatpush1.bf16.msra.mxu0 0
        %2952 = vmatprep.subr.bf16.mxu0 0
        %2953 = vmatpush1.bf16.msra.mxu0 0
        %2954 = vmatprep.subr.bf16.mxu0 0
        %2955 = vmatpush1.bf16.msra.mxu0 0
        %2956 = vmatprep.subr.bf16.mxu0 0
        %2957 = vmatpush1.bf16.msra.mxu0 0
        %2958 = vmatprep.subr.bf16.mxu0 0
        %2959 = vmatpush1.bf16.msra.mxu0 0
        %2960 = vmatprep.subr.bf16.mxu0 0
        %2961 = vmatpush1.bf16.msra.mxu0 0
        %2962 = vmatprep.subr.bf16.mxu0 0
        %2963 = vmatpush1.bf16.msra.mxu0 0
        %2964 = vmatprep.subr.bf16.mxu0 0
        %2965 = vmatpush1.bf16.msra.mxu0 0
        %2966 = vmatprep.subr.bf16.mxu0 0
        %2967 = vmatpush1.bf16.msra.mxu0 0
        %2968 = vmatprep.mubr.bf16.mxu0 0
        %2969 = vmatmul.mubr.bf16.gmra.mrb[0].mxu0 %v2934
        %v2970 = vpop.f32.mrb[0].mxu0
        %v2971 = vadd.f32 %v2920, %v2970
        %v2972 = vpop.f32.mrb[0].mxu0
        %v2973 = vpop.f32.mrb[0].mxu0
        %v2974 = vadd.f32 %v2920, %v2973
        %v2975 = vpop.f32.mrb[0].mxu0
        %2976 = vdwg.mxu0
        %v2977 = vadd.f32 %v2529, %v2971
        %v2978 = vadd.f32 %v2530, %v2974
        %v2979 = vsel %vm2065, %v2977, 0.0
        %2980 = vadd.xlane.f32.xlu0 %v2979
        %v2981 = vpop.xlane.xlu0 %2980
        %v2982 = vsel %vm2065, %v2978, 0.0
        %2983 = vadd.xlane.f32.xlu0 %v2982
        %v2984 = vpop.xlane.xlu0 %2983
        %v2985 = vrcp.pop 32.0
        %v2986 = vmul.f32 %v2981, %v2985
        %v2987 = vmul.f32 %v2984, %v2985
        %v2988 = vsub.f32 %v2977, %v2986
        %v2989 = vsub.f32 %v2978, %v2987
        %v2990 = vmul.f32 %v2988, %v2988
        %v2991 = vmul.f32 %v2989, %v2989
        %v2992 = vsel %vm2065, %v2990, 0.0
        %2993 = vadd.xlane.f32.xlu0 %v2992
        %v2994 = vpop.xlane.xlu0 %2993
        %v2995 = vsel %vm2065, %v2991, 0.0
        %2996 = vadd.xlane.f32.xlu0 %v2995
        %v2997 = vpop.xlane.xlu0 %2996
        %v2998 = vmul.f32 %v2994, %v2985
        %v2999 = vmul.f32 %v2997, %v2985
        %v3000 = vadd.f32 %v2998, 1e-05
        %v3001 = vadd.f32 %v2999, 1e-05
        %v3002 = vrsqrt.pop %v3000
        %v3003 = vrsqrt.pop %v3001
        %v3004 = vmul.f32 %v2988, %v3002
        %v3005 = vmul.f32 %v2989, %v3003
        %v3006 = vlaneseq
        %v3007 = vshrl.u32 %v3006, 7
        %v3008 = vsub.s32 2, %v3007
        %v3009 = vrot.slane %v2547, %v3008
        %v3010 = vmul.f32 %v3004, %v3009
        %v3011 = vmul.f32 %v3005, %v3009
        %v3012 = vlaneseq
        %v3013 = vshrl.u32 %v3012, 7
        %v3014 = vsub.s32 3, %v3013
        %v3015 = vrot.slane %v2547, %v3014
        %v3016 = vadd.f32 %v3010, %v3015
        %v3017 = vadd.f32 %v3011, %v3015
        %v3018 = vld [vmem:[%s14] sm:$0xf]
        %v3019 = vld [vmem:[%s14 + $0x4] sm:$0xf]
        %v3020 = vld [vmem:[%s14 + $0x8] sm:$0xf]
        %v3021 = vld [vmem:[%s14 + $0xc] sm:$0xf]
        %v3022 = vpack.c.bf16 %v3017, %v3016
        %v3023 = vlaneseq
        %v3024 = vshrl.u32 %v3023, 7
        %v3025 = vsub.s32 4, %v3024
        %v3026 = vrot.slane %v2547, %v3025
        %v3031 = vunpack.c.l.b16 %v3018
        %v3032 = vunpack.c.l.b16 %v3019
        %v3033 = vunpack.c.l.b16 %v3020
        %v3034 = vunpack.c.l.b16 %v3021
        %v3035 = vpack.c.b16 %v3032, %v3031
        %v3036 = vpack.c.b16 %v3034, %v3033
        %v3040 = vsel %vm2065, %v3022, 0
        %3042 = vmatprep.subr.bf16.mxu0 0
        %3043 = vmatpush1.bf16.msra.mxu0 %v3035
        %3044 = vmatprep.subr.bf16.mxu0 0
        %3045 = vmatpush1.bf16.msra.mxu0 %v3036
        %3046 = vmatprep.subr.bf16.mxu0 0
        %3047 = vmatpush1.bf16.msra.mxu0 0
        %3048 = vmatprep.subr.bf16.mxu0 0
        %3049 = vmatpush1.bf16.msra.mxu0 0
        %3050 = vmatprep.subr.bf16.mxu0 0
        %3051 = vmatpush1.bf16.msra.mxu0 0
        %3052 = vmatprep.subr.bf16.mxu0 0
        %3053 = vmatpush1.bf16.msra.mxu0 0
        %3054 = vmatprep.subr.bf16.mxu0 0
        %3055 = vmatpush1.bf16.msra.mxu0 0
        %3056 = vmatprep.subr.bf16.mxu0 0
        %3057 = vmatpush1.bf16.msra.mxu0 0
        %3058 = vmatprep.subr.bf16.mxu0 0
        %3059 = vmatpush1.bf16.msra.mxu0 0
        %3060 = vmatprep.subr.bf16.mxu0 0
        %3061 = vmatpush1.bf16.msra.mxu0 0
        %3062 = vmatprep.subr.bf16.mxu0 0
        %3063 = vmatpush1.bf16.msra.mxu0 0
        %3064 = vmatprep.subr.bf16.mxu0 0
        %3065 = vmatpush1.bf16.msra.mxu0 0
        %3066 = vmatprep.subr.bf16.mxu0 0
        %3067 = vmatpush1.bf16.msra.mxu0 0
        %3068 = vmatprep.subr.bf16.mxu0 0
        %3069 = vmatpush1.bf16.msra.mxu0 0
        %3070 = vmatprep.subr.bf16.mxu0 0
        %3071 = vmatpush1.bf16.msra.mxu0 0
        %3072 = vmatprep.subr.bf16.mxu0 0
        %3073 = vmatpush1.bf16.msra.mxu0 0
        %3074 = vmatprep.mubr.bf16.mxu0 0
        %3075 = vmatmul.mubr.bf16.gmra.mrb[0].mxu0 %v3040
        %v3076 = vpop.f32.mrb[0].mxu0
        %v3077 = vadd.f32 %v3026, %v3076
        %v3078 = vpop.f32.mrb[0].mxu0
        %v3079 = vpop.f32.mrb[0].mxu0
        %v3080 = vadd.f32 %v3026, %v3079
        %v3081 = vpop.f32.mrb[0].mxu0
        %3082 = vdwg.mxu0
        %v3083 = vmax.f32 %v3077, 0.0
        %v3084 = vmax.f32 %v3080, 0.0
        %v3085 = vld [vmem:[%s15] sm:$0xf]
        %v3086 = vld [vmem:[%s15 + $0x4] sm:$0xf]
        %v3087 = vld [vmem:[%s15 + $0x8] sm:$0xf]
        %v3088 = vld [vmem:[%s15 + $0xc] sm:$0xf]
        %v3089 = vld [vmem:[%s15 + $0x10] sm:$0xf]
        %v3090 = vld [vmem:[%s15 + $0x14] sm:$0xf]
        %v3091 = vld [vmem:[%s15 + $0x18] sm:$0xf]
        %v3092 = vld [vmem:[%s15 + $0x1c] sm:$0xf]
        %v3093 = vpack.c.bf16 %v3084, %v3083
        %v3094 = vlaneseq
        %v3095 = vshrl.u32 %v3094, 7
        %v3096 = vsub.s32 5, %v3095
        %v3097 = vrot.slane %v2547, %v3096
        %v3106 = vunpack.c.l.b16 %v3085
        %v3107 = vunpack.c.l.b16 %v3086
        %v3108 = vunpack.c.l.b16 %v3087
        %v3109 = vunpack.c.l.b16 %v3088
        %v3110 = vunpack.c.l.b16 %v3089
        %v3111 = vunpack.c.l.b16 %v3090
        %v3112 = vunpack.c.l.b16 %v3091
        %v3113 = vunpack.c.l.b16 %v3092
        %v3114 = vpack.c.b16 %v3107, %v3106
        %v3115 = vpack.c.b16 %v3109, %v3108
        %v3116 = vpack.c.b16 %v3111, %v3110
        %v3117 = vpack.c.b16 %v3113, %v3112
        %vm3122 = vcmask 523264
        %v3124 = vsel %vm3122, %v3093, 0
        %3126 = vmatprep.subr.bf16.mxu0 0
        %3127 = vmatpush1.bf16.msra.mxu0 %v3114
        %3128 = vmatprep.subr.bf16.mxu0 0
        %3129 = vmatpush1.bf16.msra.mxu0 %v3115
        %3130 = vmatprep.subr.bf16.mxu0 0
        %3131 = vmatpush1.bf16.msra.mxu0 %v3116
        %3132 = vmatprep.subr.bf16.mxu0 0
        %3133 = vmatpush1.bf16.msra.mxu0 %v3117
        %3134 = vmatprep.subr.bf16.mxu0 0
        %3135 = vmatpush1.bf16.msra.mxu0 0
        %3136 = vmatprep.subr.bf16.mxu0 0
        %3137 = vmatpush1.bf16.msra.mxu0 0
        %3138 = vmatprep.subr.bf16.mxu0 0
        %3139 = vmatpush1.bf16.msra.mxu0 0
        %3140 = vmatprep.subr.bf16.mxu0 0
        %3141 = vmatpush1.bf16.msra.mxu0 0
        %3142 = vmatprep.subr.bf16.mxu0 0
        %3143 = vmatpush1.bf16.msra.mxu0 0
        %3144 = vmatprep.subr.bf16.mxu0 0
        %3145 = vmatpush1.bf16.msra.mxu0 0
        %3146 = vmatprep.subr.bf16.mxu0 0
        %3147 = vmatpush1.bf16.msra.mxu0 0
        %3148 = vmatprep.subr.bf16.mxu0 0
        %3149 = vmatpush1.bf16.msra.mxu0 0
        %3150 = vmatprep.subr.bf16.mxu0 0
        %3151 = vmatpush1.bf16.msra.mxu0 0
        %3152 = vmatprep.subr.bf16.mxu0 0
        %3153 = vmatpush1.bf16.msra.mxu0 0
        %3154 = vmatprep.subr.bf16.mxu0 0
        %3155 = vmatpush1.bf16.msra.mxu0 0
        %3156 = vmatprep.subr.bf16.mxu0 0
        %3157 = vmatpush1.bf16.msra.mxu0 0
        %3158 = vmatprep.mubr.bf16.mxu0 0
        %3159 = vmatmul.mubr.bf16.gmra.mrb[0].mxu0 %v3124
        %v3160 = vpop.f32.mrb[0].mxu0
        %v3161 = vadd.f32 %v3097, %v3160
        %v3162 = vpop.f32.mrb[0].mxu0
        %v3163 = vpop.f32.mrb[0].mxu0
        %v3164 = vadd.f32 %v3097, %v3163
        %v3165 = vpop.f32.mrb[0].mxu0
        %3166 = vdwg.mxu0
        %v3167 = vadd.f32 %v3016, %v3161
        %v3168 = vadd.f32 %v3017, %v3164
        %v3169 = vsel %vm2065, %v3167, 0.0
        %3170 = vadd.xlane.f32.xlu0 %v3169
        %v3171 = vpop.xlane.xlu0 %3170
        %v3172 = vsel %vm2065, %v3168, 0.0
        %3173 = vadd.xlane.f32.xlu0 %v3172
        %v3174 = vpop.xlane.xlu0 %3173
        %v3175 = vmul.f32 %v3171, %v2985
        %v3176 = vmul.f32 %v3174, %v2985
        %v3177 = vsub.f32 %v3167, %v3175
        %v3178 = vsub.f32 %v3168, %v3176
        %v3179 = vmul.f32 %v3177, %v3177
        %v3180 = vmul.f32 %v3178, %v3178
        %v3181 = vsel %vm2065, %v3179, 0.0
        %3182 = vadd.xlane.f32.xlu0 %v3181
        %v3183 = vpop.xlane.xlu0 %3182
        %v3184 = vsel %vm2065, %v3180, 0.0
        %3185 = vadd.xlane.f32.xlu0 %v3184
        %v3186 = vpop.xlane.xlu0 %3185
        %v3187 = vmul.f32 %v3183, %v2985
        %v3188 = vmul.f32 %v3186, %v2985
        %v3189 = vadd.f32 %v3187, 1e-05
        %v3190 = vadd.f32 %v3188, 1e-05
        %v3191 = vrsqrt.pop %v3189
        %v3192 = vrsqrt.pop %v3190
        %v3193 = vmul.f32 %v3177, %v3191
        %v3194 = vmul.f32 %v3178, %v3192
        %v3195 = vlaneseq
        %v3196 = vshrl.u32 %v3195, 7
        %v3197 = vsub.s32 6, %v3196
        %v3198 = vrot.slane %v2547, %v3197
        %v3199 = vmul.f32 %v3193, %v3198
        %v3200 = vmul.f32 %v3194, %v3198
        %v3201 = vlaneseq
        %v3202 = vshrl.u32 %v3201, 7
        %v3203 = vsub.s32 7, %v3202
        %v3204 = vrot.slane %v2547, %v3203
        %v3205 = vadd.f32 %v3199, %v3204
        %v3206 = vadd.f32 %v3200, %v3204
        %s3207 = scalar_lea.vmem %s16, 8
        %v3208 = vld [vmem:[%s3207] sm:$0xff]
        %s3209 = scalar_lea.vmem %s12, 16
        %v3210 = vld [vmem:[%s3209] sm:$0xf]
        %v3211 = vld [vmem:[%s3209 + $0x4] sm:$0xf]
        %v3212 = vld [vmem:[%s3209 + $0x8] sm:$0xf]
        %v3213 = vld [vmem:[%s3209 + $0xc] sm:$0xf]
        %v3214 = vpack.c.bf16 %v3206, %v3205
        %v3215 = vlaneseq
        %v3216 = vshrl.u32 %v3215, 7
        %v3217 = vsub.s32 0, %v3216
        %v3218 = vrot.slane %v3208, %v3217
        %v3223 = vunpack.c.l.b16 %v3210
        %v3224 = vunpack.c.l.b16 %v3211
        %v3225 = vunpack.c.l.b16 %v3212
        %v3226 = vunpack.c.l.b16 %v3213
        %v3227 = vpack.c.b16 %v3224, %v3223
        %v3228 = vpack.c.b16 %v3226, %v3225
        %v3232 = vsel %vm2065, %v3214, 0
        %3234 = vmatprep.subr.bf16.mxu0 0
        %3235 = vmatpush1.bf16.msra.mxu0 %v3227
        %3236 = vmatprep.subr.bf16.mxu0 0
        %3237 = vmatpush1.bf16.msra.mxu0 %v3228
        %3238 = vmatprep.subr.bf16.mxu0 0
        %3239 = vmatpush1.bf16.msra.mxu0 0
        %3240 = vmatprep.subr.bf16.mxu0 0
        %3241 = vmatpush1.bf16.msra.mxu0 0
        %3242 = vmatprep.subr.bf16.mxu0 0
        %3243 = vmatpush1.bf16.msra.mxu0 0
        %3244 = vmatprep.subr.bf16.mxu0 0
        %3245 = vmatpush1.bf16.msra.mxu0 0
        %3246 = vmatprep.subr.bf16.mxu0 0
        %3247 = vmatpush1.bf16.msra.mxu0 0
        %3248 = vmatprep.subr.bf16.mxu0 0
        %3249 = vmatpush1.bf16.msra.mxu0 0
        %3250 = vmatprep.subr.bf16.mxu0 0
        %3251 = vmatpush1.bf16.msra.mxu0 0
        %3252 = vmatprep.subr.bf16.mxu0 0
        %3253 = vmatpush1.bf16.msra.mxu0 0
        %3254 = vmatprep.subr.bf16.mxu0 0
        %3255 = vmatpush1.bf16.msra.mxu0 0
        %3256 = vmatprep.subr.bf16.mxu0 0
        %3257 = vmatpush1.bf16.msra.mxu0 0
        %3258 = vmatprep.subr.bf16.mxu0 0
        %3259 = vmatpush1.bf16.msra.mxu0 0
        %3260 = vmatprep.subr.bf16.mxu0 0
        %3261 = vmatpush1.bf16.msra.mxu0 0
        %3262 = vmatprep.subr.bf16.mxu0 0
        %3263 = vmatpush1.bf16.msra.mxu0 0
        %3264 = vmatprep.subr.bf16.mxu0 0
        %3265 = vmatpush1.bf16.msra.mxu0 0
        %3266 = vmatprep.mubr.bf16.mxu0 0
        %3267 = vmatmul.mubr.bf16.gmra.mrb[0].mxu0 %v3232
        %v3268 = vpop.f32.mrb[0].mxu0
        %v3269 = vadd.f32 %v3218, %v3268
        %v3270 = vpop.f32.mrb[0].mxu0
        %v3271 = vpop.f32.mrb[0].mxu0
        %v3272 = vadd.f32 %v3218, %v3271
        %v3273 = vpop.f32.mrb[0].mxu0
        %3274 = vdwg.mxu0
        %v3275 = vmul.f32 %v3269, %v2531
        %v3276 = vmul.f32 %v3272, %v2532
        %v3277 = vmul.f32 %v3269, %v2533
        %v3278 = vmul.f32 %v3272, %v2534
        %v3279 = vmul.f32 %v3269, %v2535
        %v3280 = vmul.f32 %v3272, %v2536
        %v3281 = vmul.f32 %v3269, %v2537
        %v3282 = vmul.f32 %v3272, %v2538
        %v3283 = vpack.c.bf16 %v3276, %v3275
        %v3284 = vpack.c.bf16 %v3278, %v3277
        %v3285 = vpack.c.bf16 %v3280, %v3279
        %v3286 = vpack.c.bf16 %v3282, %v3281
        %v3287 = vpack.c.bf16 %v3272, %v3269
        %3289 = vrot.lane.b32.xlu0 %v3287, 96
        %v3290 = vpop.permute.xlu0 %3289
        %v3292 = vsel %vm2065, %v3283, 0
        %v3295 = vsel %vm2065, %v3284, 0
        %v3298 = vsel %vm2065, %v3285, 0
        %v3301 = vsel %vm2065, %v3286, 0
        %v3304 = vsel %vm2065, %v3290, 0
        %3306 = vmatprep.subr.bf16.mxu0 0
        %3307 = vmatpush1.bf16.xpose.msra.mxu0 %v3304
        %3308 = vmatprep.subr.bf16.mxu0 0
        %3309 = vmatpush1.bf16.xpose.msra.mxu0 0
        %3310 = vmatprep.subr.bf16.mxu0 0
        %3311 = vmatpush1.bf16.xpose.msra.mxu0 0
        %3312 = vmatprep.subr.bf16.mxu0 0
        %3313 = vmatpush1.bf16.xpose.msra.mxu0 0
        %3314 = vmatprep.subr.bf16.mxu0 0
        %3315 = vmatpush1.bf16.xpose.msra.mxu0 0
        %3316 = vmatprep.subr.bf16.mxu0 0
        %3317 = vmatpush1.bf16.xpose.msra.mxu0 0
        %3318 = vmatprep.subr.bf16.mxu0 0
        %3319 = vmatpush1.bf16.xpose.msra.mxu0 0
        %3320 = vmatprep.subr.bf16.mxu0 0
        %3321 = vmatpush1.bf16.xpose.msra.mxu0 0
        %3322 = vmatprep.subr.bf16.mxu0 0
        %3323 = vmatpush1.bf16.xpose.msra.mxu0 0
        %3324 = vmatprep.subr.bf16.mxu0 0
        %3325 = vmatpush1.bf16.xpose.msra.mxu0 0
        %3326 = vmatprep.subr.bf16.mxu0 0
        %3327 = vmatpush1.bf16.xpose.msra.mxu0 0
        %3328 = vmatprep.subr.bf16.mxu0 0
        %3329 = vmatpush1.bf16.xpose.msra.mxu0 0
        %3330 = vmatprep.subr.bf16.mxu0 0
        %3331 = vmatpush1.bf16.xpose.msra.mxu0 0
        %3332 = vmatprep.subr.bf16.mxu0 0
        %3333 = vmatpush1.bf16.xpose.msra.mxu0 0
        %3334 = vmatprep.subr.bf16.mxu0 0
        %3335 = vmatpush1.bf16.xpose.msra.mxu0 0
        %3336 = vmatprep.subr.bf16.mxu0 0
        %3337 = vmatpush1.bf16.xpose.msra.mxu0 0
        %3338 = vmatprep.mubr.bf16.mxu0 0
        %3339 = vmatmul.mubr.bf16.gmra.mrb[0].mxu0 %v3292
        %v3340 = vpop.f32.mrb[0].mxu0
        %v3341 = vadd.f32 0.0, %v3340
        %v3342 = vpop.f32.mrb[0].mxu0
        %v3343 = vpop.f32.mrb[0].mxu0
        %v3344 = vadd.f32 0.0, %v3343
        %v3345 = vpop.f32.mrb[0].mxu0
        %3346 = vmatprep.mubr.bf16.mxu0 0
        %3347 = vmatmul.mubr.bf16.gmra.mrb[0].mxu0 %v3295
        %v3348 = vpop.f32.mrb[0].mxu0
        %v3349 = vadd.f32 0.0, %v3348
        %v3350 = vpop.f32.mrb[0].mxu0
        %v3351 = vpop.f32.mrb[0].mxu0
        %v3352 = vadd.f32 0.0, %v3351
        %v3353 = vpop.f32.mrb[0].mxu0
        %3354 = vmatprep.mubr.bf16.mxu0 0
        %3355 = vmatmul.mubr.bf16.gmra.mrb[0].mxu0 %v3298
        %v3356 = vpop.f32.mrb[0].mxu0
        %v3357 = vadd.f32 0.0, %v3356
        %v3358 = vpop.f32.mrb[0].mxu0
        %v3359 = vpop.f32.mrb[0].mxu0
        %v3360 = vadd.f32 0.0, %v3359
        %v3361 = vpop.f32.mrb[0].mxu0
        %3362 = vmatprep.mubr.bf16.mxu0 0
        %3363 = vmatmul.mubr.bf16.gmra.mrb[0].mxu0 %v3301
        %v3364 = vpop.f32.mrb[0].mxu0
        %v3365 = vadd.f32 0.0, %v3364
        %v3366 = vpop.f32.mrb[0].mxu0
        %v3367 = vpop.f32.mrb[0].mxu0
        %v3368 = vadd.f32 0.0, %v3367
        %v3369 = vpop.f32.mrb[0].mxu0
        %3370 = vdwg.mxu0
        %v3371 = vmul.f32 %v3341, 0.35355338
        %v3372 = vmul.f32 %v3344, 0.35355338
        %v3373 = vmul.f32 %v3349, 0.35355338
        %v3374 = vmul.f32 %v3352, 0.35355338
        %v3375 = vmul.f32 %v3357, 0.35355338
        %v3376 = vmul.f32 %v3360, 0.35355338
        %v3377 = vmul.f32 %v3365, 0.35355338
        %v3378 = vmul.f32 %v3368, 0.35355338
        %v3379 = vadd.f32 %v3371, %v2539
        %v3380 = vadd.f32 %v3372, %v2540
        %v3381 = vadd.f32 %v3373, %v2541
        %v3382 = vadd.f32 %v3374, %v2542
        %v3383 = vadd.f32 %v3375, %v2543
        %v3384 = vadd.f32 %v3376, %v2544
        %v3385 = vadd.f32 %v3377, %v2545
        %v3386 = vadd.f32 %v3378, %v2546
        %v3387 = vsel %vm2725, %v3379, -inf
        %3388 = vmax.xlane.f32.xlu0 %v3387
        %v3389 = vpop.xlane.xlu0 %3388
        %v3390 = vsel %vm2725, %v3380, -inf
        %3391 = vmax.xlane.f32.xlu0 %v3390
        %v3392 = vpop.xlane.xlu0 %3391
        %v3393 = vsel %vm2725, %v3381, -inf
        %3394 = vmax.xlane.f32.xlu0 %v3393
        %v3395 = vpop.xlane.xlu0 %3394
        %v3396 = vsel %vm2725, %v3382, -inf
        %3397 = vmax.xlane.f32.xlu0 %v3396
        %v3398 = vpop.xlane.xlu0 %3397
        %v3399 = vsel %vm2725, %v3383, -inf
        %3400 = vmax.xlane.f32.xlu0 %v3399
        %v3401 = vpop.xlane.xlu0 %3400
        %v3402 = vsel %vm2725, %v3384, -inf
        %3403 = vmax.xlane.f32.xlu0 %v3402
        %v3404 = vpop.xlane.xlu0 %3403
        %v3405 = vsel %vm2725, %v3385, -inf
        %3406 = vmax.xlane.f32.xlu0 %v3405
        %v3407 = vpop.xlane.xlu0 %3406
        %v3408 = vsel %vm2725, %v3386, -inf
        %3409 = vmax.xlane.f32.xlu0 %v3408
        %v3410 = vpop.xlane.xlu0 %3409
        %v3411 = vsub.f32 %v3379, %v3389
        %v3412 = vsub.f32 %v3380, %v3392
        %v3413 = vsub.f32 %v3381, %v3395
        %v3414 = vsub.f32 %v3382, %v3398
        %v3415 = vsub.f32 %v3383, %v3401
        %v3416 = vsub.f32 %v3384, %v3404
        %v3417 = vsub.f32 %v3385, %v3407
        %v3418 = vsub.f32 %v3386, %v3410
        %v3419 = vmul.f32 %v3411, 1.442695
        %v3420 = vpow.pop %v3419
        %v3421 = vmul.f32 %v3412, 1.442695
        %v3422 = vpow.pop %v3421
        %v3423 = vmul.f32 %v3413, 1.442695
        %v3424 = vpow.pop %v3423
        %v3425 = vmul.f32 %v3414, 1.442695
        %v3426 = vpow.pop %v3425
        %v3427 = vmul.f32 %v3415, 1.442695
        %v3428 = vpow.pop %v3427
        %v3429 = vmul.f32 %v3416, 1.442695
        %v3430 = vpow.pop %v3429
        %v3431 = vmul.f32 %v3417, 1.442695
        %v3432 = vpow.pop %v3431
        %v3433 = vmul.f32 %v3418, 1.442695
        %v3434 = vpow.pop %v3433
        %v3435 = vsel %vm2725, %v3420, 0.0
        %3436 = vadd.xlane.f32.xlu0 %v3435
        %v3437 = vpop.xlane.xlu0 %3436
        %v3438 = vsel %vm2725, %v3422, 0.0
        %3439 = vadd.xlane.f32.xlu0 %v3438
        %v3440 = vpop.xlane.xlu0 %3439
        %v3441 = vsel %vm2725, %v3424, 0.0
        %3442 = vadd.xlane.f32.xlu0 %v3441
        %v3443 = vpop.xlane.xlu0 %3442
        %v3444 = vsel %vm2725, %v3426, 0.0
        %3445 = vadd.xlane.f32.xlu0 %v3444
        %v3446 = vpop.xlane.xlu0 %3445
        %v3447 = vsel %vm2725, %v3428, 0.0
        %3448 = vadd.xlane.f32.xlu0 %v3447
        %v3449 = vpop.xlane.xlu0 %3448
        %v3450 = vsel %vm2725, %v3430, 0.0
        %3451 = vadd.xlane.f32.xlu0 %v3450
        %v3452 = vpop.xlane.xlu0 %3451
        %v3453 = vsel %vm2725, %v3432, 0.0
        %3454 = vadd.xlane.f32.xlu0 %v3453
        %v3455 = vpop.xlane.xlu0 %3454
        %v3456 = vsel %vm2725, %v3434, 0.0
        %3457 = vadd.xlane.f32.xlu0 %v3456
        %v3458 = vpop.xlane.xlu0 %3457
        %v3459 = vrcp.pop %v3437
        %v3460 = vrcp.pop %v3440
        %v3461 = vrcp.pop %v3443
        %v3462 = vrcp.pop %v3446
        %v3463 = vrcp.pop %v3449
        %v3464 = vrcp.pop %v3452
        %v3465 = vrcp.pop %v3455
        %v3466 = vrcp.pop %v3458
        %v3467 = vmul.f32 %v3420, %v3459
        %v3468 = vmul.f32 %v3422, %v3460
        %v3469 = vmul.f32 %v3424, %v3461
        %v3470 = vmul.f32 %v3426, %v3462
        %v3471 = vmul.f32 %v3428, %v3463
        %v3472 = vmul.f32 %v3430, %v3464
        %v3473 = vmul.f32 %v3432, %v3465
        %v3474 = vmul.f32 %v3434, %v3466
        %v3475 = vpack.c.bf16 %v3468, %v3467
        %v3476 = vpack.c.bf16 %v3470, %v3469
        %v3477 = vpack.c.bf16 %v3472, %v3471
        %v3478 = vpack.c.bf16 %v3474, %v3473
        %3479 = vrot.lane.b32.xlu0 %v3287, 64
        %v3480 = vpop.permute.xlu0 %3479
        %v3483 = vsel %vm2725, %v3475, 0
        %v3486 = vsel %vm2725, %v3476, 0
        %v3489 = vsel %vm2725, %v3477, 0
        %v3492 = vsel %vm2725, %v3478, 0
        %3494 = vmatprep.subr.bf16.mxu0 0
        %3495 = vmatpush1.bf16.msra.mxu0 %v3480
        %3496 = vmatprep.subr.bf16.mxu0 0
        %3497 = vmatpush1.bf16.msra.mxu0 0
        %3498 = vmatprep.subr.bf16.mxu0 0
        %3499 = vmatpush1.bf16.msra.mxu0 0
        %3500 = vmatprep.subr.bf16.mxu0 0
        %3501 = vmatpush1.bf16.msra.mxu0 0
        %3502 = vmatprep.subr.bf16.mxu0 0
        %3503 = vmatpush1.bf16.msra.mxu0 0
        %3504 = vmatprep.subr.bf16.mxu0 0
        %3505 = vmatpush1.bf16.msra.mxu0 0
        %3506 = vmatprep.subr.bf16.mxu0 0
        %3507 = vmatpush1.bf16.msra.mxu0 0
        %3508 = vmatprep.subr.bf16.mxu0 0
        %3509 = vmatpush1.bf16.msra.mxu0 0
        %3510 = vmatprep.subr.bf16.mxu0 0
        %3511 = vmatpush1.bf16.msra.mxu0 0
        %3512 = vmatprep.subr.bf16.mxu0 0
        %3513 = vmatpush1.bf16.msra.mxu0 0
        %3514 = vmatprep.subr.bf16.mxu0 0
        %3515 = vmatpush1.bf16.msra.mxu0 0
        %3516 = vmatprep.subr.bf16.mxu0 0
        %3517 = vmatpush1.bf16.msra.mxu0 0
        %3518 = vmatprep.subr.bf16.mxu0 0
        %3519 = vmatpush1.bf16.msra.mxu0 0
        %3520 = vmatprep.subr.bf16.mxu0 0
        %3521 = vmatpush1.bf16.msra.mxu0 0
        %3522 = vmatprep.subr.bf16.mxu0 0
        %3523 = vmatpush1.bf16.msra.mxu0 0
        %3524 = vmatprep.subr.bf16.mxu0 0
        %3525 = vmatpush1.bf16.msra.mxu0 0
        %3526 = vmatprep.mubr.bf16.mxu0 0
        %3527 = vmatmul.mubr.bf16.gmra.mrb[0].mxu0 %v3483
        %v3528 = vpop.f32.mrb[0].mxu0
        %v3529 = vadd.f32 0.0, %v3528
        %v3530 = vpop.f32.mrb[0].mxu0
        %v3531 = vpop.f32.mrb[0].mxu0
        %v3532 = vadd.f32 0.0, %v3531
        %v3533 = vpop.f32.mrb[0].mxu0
        %3534 = vmatprep.mubr.bf16.mxu0 0
        %3535 = vmatmul.mubr.bf16.gmra.mrb[0].mxu0 %v3486
        %v3536 = vpop.f32.mrb[0].mxu0
        %v3537 = vadd.f32 0.0, %v3536
        %v3538 = vpop.f32.mrb[0].mxu0
        %v3539 = vpop.f32.mrb[0].mxu0
        %v3540 = vadd.f32 0.0, %v3539
        %v3541 = vpop.f32.mrb[0].mxu0
        %3542 = vmatprep.mubr.bf16.mxu0 0
        %3543 = vmatmul.mubr.bf16.gmra.mrb[0].mxu0 %v3489
        %v3544 = vpop.f32.mrb[0].mxu0
        %v3545 = vadd.f32 0.0, %v3544
        %v3546 = vpop.f32.mrb[0].mxu0
        %v3547 = vpop.f32.mrb[0].mxu0
        %v3548 = vadd.f32 0.0, %v3547
        %v3549 = vpop.f32.mrb[0].mxu0
        %3550 = vmatprep.mubr.bf16.mxu0 0
        %3551 = vmatmul.mubr.bf16.gmra.mrb[0].mxu0 %v3492
        %v3552 = vpop.f32.mrb[0].mxu0
        %v3553 = vadd.f32 0.0, %v3552
        %v3554 = vpop.f32.mrb[0].mxu0
        %v3555 = vpop.f32.mrb[0].mxu0
        %v3556 = vadd.f32 0.0, %v3555
        %v3557 = vpop.f32.mrb[0].mxu0
        %3558 = vdwg.mxu0
        %v3559 = vmul.f32 %v3529, %v2531
        %v3560 = vmul.f32 %v3532, %v2532
        %v3561 = vmul.f32 %v3537, %v2533
        %v3562 = vmul.f32 %v3540, %v2534
        %v3563 = vmul.f32 %v3545, %v2535
        %v3564 = vmul.f32 %v3548, %v2536
        %v3565 = vmul.f32 %v3553, %v2537
        %v3566 = vmul.f32 %v3556, %v2538
        %v3567 = vadd.f32 %v3559, %v3561
        %v3568 = vadd.f32 %v3560, %v3562
        %v3569 = vadd.f32 %v3567, %v3563
        %v3570 = vadd.f32 %v3568, %v3564
        %v3571 = vadd.f32 %v3569, %v3565
        %v3572 = vadd.f32 %v3570, %v3566
        %s3573 = scalar_lea.vmem %s13, 16
        %v3574 = vld [vmem:[%s3573] sm:$0xf]
        %v3575 = vld [vmem:[%s3573 + $0x4] sm:$0xf]
        %v3576 = vld [vmem:[%s3573 + $0x8] sm:$0xf]
        %v3577 = vld [vmem:[%s3573 + $0xc] sm:$0xf]
        %v3578 = vpack.c.bf16 %v3572, %v3571
        %v3579 = vlaneseq
        %v3580 = vshrl.u32 %v3579, 7
        %v3581 = vsub.s32 1, %v3580
        %v3582 = vrot.slane %v3208, %v3581
        %v3587 = vunpack.c.l.b16 %v3574
        %v3588 = vunpack.c.l.b16 %v3575
        %v3589 = vunpack.c.l.b16 %v3576
        %v3590 = vunpack.c.l.b16 %v3577
        %v3591 = vpack.c.b16 %v3588, %v3587
        %v3592 = vpack.c.b16 %v3590, %v3589
        %v3596 = vsel %vm2065, %v3578, 0
        %3598 = vmatprep.subr.bf16.mxu0 0
        %3599 = vmatpush1.bf16.msra.mxu0 %v3591
        %3600 = vmatprep.subr.bf16.mxu0 0
        %3601 = vmatpush1.bf16.msra.mxu0 %v3592
        %3602 = vmatprep.subr.bf16.mxu0 0
        %3603 = vmatpush1.bf16.msra.mxu0 0
        %3604 = vmatprep.subr.bf16.mxu0 0
        %3605 = vmatpush1.bf16.msra.mxu0 0
        %3606 = vmatprep.subr.bf16.mxu0 0
        %3607 = vmatpush1.bf16.msra.mxu0 0
        %3608 = vmatprep.subr.bf16.mxu0 0
        %3609 = vmatpush1.bf16.msra.mxu0 0
        %3610 = vmatprep.subr.bf16.mxu0 0
        %3611 = vmatpush1.bf16.msra.mxu0 0
        %3612 = vmatprep.subr.bf16.mxu0 0
        %3613 = vmatpush1.bf16.msra.mxu0 0
        %3614 = vmatprep.subr.bf16.mxu0 0
        %3615 = vmatpush1.bf16.msra.mxu0 0
        %3616 = vmatprep.subr.bf16.mxu0 0
        %3617 = vmatpush1.bf16.msra.mxu0 0
        %3618 = vmatprep.subr.bf16.mxu0 0
        %3619 = vmatpush1.bf16.msra.mxu0 0
        %3620 = vmatprep.subr.bf16.mxu0 0
        %3621 = vmatpush1.bf16.msra.mxu0 0
        %3622 = vmatprep.subr.bf16.mxu0 0
        %3623 = vmatpush1.bf16.msra.mxu0 0
        %3624 = vmatprep.subr.bf16.mxu0 0
        %3625 = vmatpush1.bf16.msra.mxu0 0
        %3626 = vmatprep.subr.bf16.mxu0 0
        %3627 = vmatpush1.bf16.msra.mxu0 0
        %3628 = vmatprep.subr.bf16.mxu0 0
        %3629 = vmatpush1.bf16.msra.mxu0 0
        %3630 = vmatprep.mubr.bf16.mxu0 0
        %3631 = vmatmul.mubr.bf16.gmra.mrb[0].mxu0 %v3596
        %v3632 = vpop.f32.mrb[0].mxu0
        %v3633 = vadd.f32 %v3582, %v3632
        %v3634 = vpop.f32.mrb[0].mxu0
        %v3635 = vpop.f32.mrb[0].mxu0
        %v3636 = vadd.f32 %v3582, %v3635
        %v3637 = vpop.f32.mrb[0].mxu0
        %3638 = vdwg.mxu0
        %v3639 = vadd.f32 %v3205, %v3633
        %v3640 = vadd.f32 %v3206, %v3636
        %v3641 = vsel %vm2065, %v3639, 0.0
        %3642 = vadd.xlane.f32.xlu0 %v3641
        %v3643 = vpop.xlane.xlu0 %3642
        %v3644 = vsel %vm2065, %v3640, 0.0
        %3645 = vadd.xlane.f32.xlu0 %v3644
        %v3646 = vpop.xlane.xlu0 %3645
        %v3647 = vmul.f32 %v3643, %v2985
        %v3648 = vmul.f32 %v3646, %v2985
        %v3649 = vsub.f32 %v3639, %v3647
        %v3650 = vsub.f32 %v3640, %v3648
        %v3651 = vmul.f32 %v3649, %v3649
        %v3652 = vmul.f32 %v3650, %v3650
        %v3653 = vsel %vm2065, %v3651, 0.0
        %3654 = vadd.xlane.f32.xlu0 %v3653
        %v3655 = vpop.xlane.xlu0 %3654
        %v3656 = vsel %vm2065, %v3652, 0.0
        %3657 = vadd.xlane.f32.xlu0 %v3656
        %v3658 = vpop.xlane.xlu0 %3657
        %v3659 = vmul.f32 %v3655, %v2985
        %v3660 = vmul.f32 %v3658, %v2985
        %v3661 = vadd.f32 %v3659, 1e-05
        %v3662 = vadd.f32 %v3660, 1e-05
        %v3663 = vrsqrt.pop %v3661
        %v3664 = vrsqrt.pop %v3662
        %v3665 = vmul.f32 %v3649, %v3663
        %v3666 = vmul.f32 %v3650, %v3664
        %v3667 = vlaneseq
        %v3668 = vshrl.u32 %v3667, 7
        %v3669 = vsub.s32 2, %v3668
        %v3670 = vrot.slane %v3208, %v3669
        %v3671 = vmul.f32 %v3665, %v3670
        %v3672 = vmul.f32 %v3666, %v3670
        %v3673 = vlaneseq
        %v3674 = vshrl.u32 %v3673, 7
        %v3675 = vsub.s32 3, %v3674
        %v3676 = vrot.slane %v3208, %v3675
        %v3677 = vadd.f32 %v3671, %v3676
        %v3678 = vadd.f32 %v3672, %v3676
        %s3679 = scalar_lea.vmem %s14, 16
        %v3680 = vld [vmem:[%s3679] sm:$0xf]
        %v3681 = vld [vmem:[%s3679 + $0x4] sm:$0xf]
        %v3682 = vld [vmem:[%s3679 + $0x8] sm:$0xf]
        %v3683 = vld [vmem:[%s3679 + $0xc] sm:$0xf]
        %v3684 = vpack.c.bf16 %v3678, %v3677
        %v3685 = vlaneseq
        %v3686 = vshrl.u32 %v3685, 7
        %v3687 = vsub.s32 4, %v3686
        %v3688 = vrot.slane %v3208, %v3687
        %v3693 = vunpack.c.l.b16 %v3680
        %v3694 = vunpack.c.l.b16 %v3681
        %v3695 = vunpack.c.l.b16 %v3682
        %v3696 = vunpack.c.l.b16 %v3683
        %v3697 = vpack.c.b16 %v3694, %v3693
        %v3698 = vpack.c.b16 %v3696, %v3695
        %v3702 = vsel %vm2065, %v3684, 0
        %3704 = vmatprep.subr.bf16.mxu0 0
        %3705 = vmatpush1.bf16.msra.mxu0 %v3697
        %3706 = vmatprep.subr.bf16.mxu0 0
        %3707 = vmatpush1.bf16.msra.mxu0 %v3698
        %3708 = vmatprep.subr.bf16.mxu0 0
        %3709 = vmatpush1.bf16.msra.mxu0 0
        %3710 = vmatprep.subr.bf16.mxu0 0
        %3711 = vmatpush1.bf16.msra.mxu0 0
        %3712 = vmatprep.subr.bf16.mxu0 0
        %3713 = vmatpush1.bf16.msra.mxu0 0
        %3714 = vmatprep.subr.bf16.mxu0 0
        %3715 = vmatpush1.bf16.msra.mxu0 0
        %3716 = vmatprep.subr.bf16.mxu0 0
        %3717 = vmatpush1.bf16.msra.mxu0 0
        %3718 = vmatprep.subr.bf16.mxu0 0
        %3719 = vmatpush1.bf16.msra.mxu0 0
        %3720 = vmatprep.subr.bf16.mxu0 0
        %3721 = vmatpush1.bf16.msra.mxu0 0
        %3722 = vmatprep.subr.bf16.mxu0 0
        %3723 = vmatpush1.bf16.msra.mxu0 0
        %3724 = vmatprep.subr.bf16.mxu0 0
        %3725 = vmatpush1.bf16.msra.mxu0 0
        %3726 = vmatprep.subr.bf16.mxu0 0
        %3727 = vmatpush1.bf16.msra.mxu0 0
        %3728 = vmatprep.subr.bf16.mxu0 0
        %3729 = vmatpush1.bf16.msra.mxu0 0
        %3730 = vmatprep.subr.bf16.mxu0 0
        %3731 = vmatpush1.bf16.msra.mxu0 0
        %3732 = vmatprep.subr.bf16.mxu0 0
        %3733 = vmatpush1.bf16.msra.mxu0 0
        %3734 = vmatprep.subr.bf16.mxu0 0
        %3735 = vmatpush1.bf16.msra.mxu0 0
        %3736 = vmatprep.mubr.bf16.mxu0 0
        %3737 = vmatmul.mubr.bf16.gmra.mrb[0].mxu0 %v3702
        %v3738 = vpop.f32.mrb[0].mxu0
        %v3739 = vadd.f32 %v3688, %v3738
        %v3740 = vpop.f32.mrb[0].mxu0
        %v3741 = vpop.f32.mrb[0].mxu0
        %v3742 = vadd.f32 %v3688, %v3741
        %v3743 = vpop.f32.mrb[0].mxu0
        %3744 = vdwg.mxu0
        %v3745 = vmax.f32 %v3739, 0.0
        %v3746 = vmax.f32 %v3742, 0.0
        %s3747 = scalar_lea.vmem %s15, 32
        %v3748 = vld [vmem:[%s3747] sm:$0xf]
        %v3749 = vld [vmem:[%s3747 + $0x4] sm:$0xf]
        %v3750 = vld [vmem:[%s3747 + $0x8] sm:$0xf]
        %v3751 = vld [vmem:[%s3747 + $0xc] sm:$0xf]
        %v3752 = vld [vmem:[%s3747 + $0x10] sm:$0xf]
        %v3753 = vld [vmem:[%s3747 + $0x14] sm:$0xf]
        %v3754 = vld [vmem:[%s3747 + $0x18] sm:$0xf]
        %v3755 = vld [vmem:[%s3747 + $0x1c] sm:$0xf]
        %v3756 = vpack.c.bf16 %v3746, %v3745
        %v3757 = vlaneseq
        %v3758 = vshrl.u32 %v3757, 7
        %v3759 = vsub.s32 5, %v3758
        %v3760 = vrot.slane %v3208, %v3759
        %v3769 = vunpack.c.l.b16 %v3748
        %v3770 = vunpack.c.l.b16 %v3749
        %v3771 = vunpack.c.l.b16 %v3750
        %v3772 = vunpack.c.l.b16 %v3751
        %v3773 = vunpack.c.l.b16 %v3752
        %v3774 = vunpack.c.l.b16 %v3753
        %v3775 = vunpack.c.l.b16 %v3754
        %v3776 = vunpack.c.l.b16 %v3755
        %v3777 = vpack.c.b16 %v3770, %v3769
        %v3778 = vpack.c.b16 %v3772, %v3771
        %v3779 = vpack.c.b16 %v3774, %v3773
        %v3780 = vpack.c.b16 %v3776, %v3775
        %v3786 = vsel %vm3122, %v3756, 0
        %3788 = vmatprep.subr.bf16.mxu0 0
        %3789 = vmatpush1.bf16.msra.mxu0 %v3777
        %3790 = vmatprep.subr.bf16.mxu0 0
        %3791 = vmatpush1.bf16.msra.mxu0 %v3778
        %3792 = vmatprep.subr.bf16.mxu0 0
        %3793 = vmatpush1.bf16.msra.mxu0 %v3779
        %3794 = vmatprep.subr.bf16.mxu0 0
        %3795 = vmatpush1.bf16.msra.mxu0 %v3780
        %3796 = vmatprep.subr.bf16.mxu0 0
        %3797 = vmatpush1.bf16.msra.mxu0 0
        %3798 = vmatprep.subr.bf16.mxu0 0
        %3799 = vmatpush1.bf16.msra.mxu0 0
        %3800 = vmatprep.subr.bf16.mxu0 0
        %3801 = vmatpush1.bf16.msra.mxu0 0
        %3802 = vmatprep.subr.bf16.mxu0 0
        %3803 = vmatpush1.bf16.msra.mxu0 0
        %3804 = vmatprep.subr.bf16.mxu0 0
        %3805 = vmatpush1.bf16.msra.mxu0 0
        %3806 = vmatprep.subr.bf16.mxu0 0
        %3807 = vmatpush1.bf16.msra.mxu0 0
        %3808 = vmatprep.subr.bf16.mxu0 0
        %3809 = vmatpush1.bf16.msra.mxu0 0
        %3810 = vmatprep.subr.bf16.mxu0 0
        %3811 = vmatpush1.bf16.msra.mxu0 0
        %3812 = vmatprep.subr.bf16.mxu0 0
        %3813 = vmatpush1.bf16.msra.mxu0 0
        %3814 = vmatprep.subr.bf16.mxu0 0
        %3815 = vmatpush1.bf16.msra.mxu0 0
        %3816 = vmatprep.subr.bf16.mxu0 0
        %3817 = vmatpush1.bf16.msra.mxu0 0
        %3818 = vmatprep.subr.bf16.mxu0 0
        %3819 = vmatpush1.bf16.msra.mxu0 0
        %3820 = vmatprep.mubr.bf16.mxu0 0
        %3821 = vmatmul.mubr.bf16.gmra.mrb[0].mxu0 %v3786
        %v3822 = vpop.f32.mrb[0].mxu0
        %v3823 = vadd.f32 %v3760, %v3822
        %v3824 = vpop.f32.mrb[0].mxu0
        %v3825 = vpop.f32.mrb[0].mxu0
        %v3826 = vadd.f32 %v3760, %v3825
        %v3827 = vpop.f32.mrb[0].mxu0
        %3828 = vdwg.mxu0
        %v3829 = vadd.f32 %v3677, %v3823
        %v3830 = vadd.f32 %v3678, %v3826
        %v3831 = vsel %vm2065, %v3829, 0.0
        %3832 = vadd.xlane.f32.xlu0 %v3831
        %v3833 = vpop.xlane.xlu0 %3832
        %v3834 = vsel %vm2065, %v3830, 0.0
        %3835 = vadd.xlane.f32.xlu0 %v3834
        %v3836 = vpop.xlane.xlu0 %3835
        %v3837 = vmul.f32 %v3833, %v2985
        %v3838 = vmul.f32 %v3836, %v2985
        %v3839 = vsub.f32 %v3829, %v3837
        %v3840 = vsub.f32 %v3830, %v3838
        %v3841 = vmul.f32 %v3839, %v3839
        %v3842 = vmul.f32 %v3840, %v3840
        %v3843 = vsel %vm2065, %v3841, 0.0
        %3844 = vadd.xlane.f32.xlu0 %v3843
        %v3845 = vpop.xlane.xlu0 %3844
        %v3846 = vsel %vm2065, %v3842, 0.0
        %3847 = vadd.xlane.f32.xlu0 %v3846
        %v3848 = vpop.xlane.xlu0 %3847
        %v3849 = vmul.f32 %v3845, %v2985
        %v3850 = vmul.f32 %v3848, %v2985
        %v3851 = vadd.f32 %v3849, 1e-05
        %v3852 = vadd.f32 %v3850, 1e-05
        %v3853 = vrsqrt.pop %v3851
        %v3854 = vrsqrt.pop %v3852
        %v3855 = vmul.f32 %v3839, %v3853
        %v3856 = vmul.f32 %v3840, %v3854
        %v3857 = vlaneseq
        %v3858 = vshrl.u32 %v3857, 7
        %v3859 = vsub.s32 6, %v3858
        %v3860 = vrot.slane %v3208, %v3859
        %v3861 = vmul.f32 %v3855, %v3860
        %v3862 = vmul.f32 %v3856, %v3860
        %v3863 = vlaneseq
        %v3864 = vshrl.u32 %v3863, 7
        %v3865 = vsub.s32 7, %v3864
        %v3866 = vrot.slane %v3208, %v3865
        %v3867 = vadd.f32 %v3861, %v3866
        %v3868 = vadd.f32 %v3862, %v3866
        %v3869 = vld [vmem:[%s17] sm:$0xf]
        %v3870 = vpack.c.bf16 %v3868, %v3867
        %v3872 = vsel %vm2725, %v3869, 0
        %3874 = vmatprep.subr.bf16.mxu0 0
        %3875 = vmatpush1.bf16.msra.mxu0 %v3870
        %3876 = vmatprep.subr.bf16.mxu0 0
        %3877 = vmatpush1.bf16.msra.mxu0 0
        %3878 = vmatprep.subr.bf16.mxu0 0
        %3879 = vmatpush1.bf16.msra.mxu0 0
        %3880 = vmatprep.subr.bf16.mxu0 0
        %3881 = vmatpush1.bf16.msra.mxu0 0
        %3882 = vmatprep.subr.bf16.mxu0 0
        %3883 = vmatpush1.bf16.msra.mxu0 0
        %3884 = vmatprep.subr.bf16.mxu0 0
        %3885 = vmatpush1.bf16.msra.mxu0 0
        %3886 = vmatprep.subr.bf16.mxu0 0
        %3887 = vmatpush1.bf16.msra.mxu0 0
        %3888 = vmatprep.subr.bf16.mxu0 0
        %3889 = vmatpush1.bf16.msra.mxu0 0
        %3890 = vmatprep.subr.bf16.mxu0 0
        %3891 = vmatpush1.bf16.msra.mxu0 0
        %3892 = vmatprep.subr.bf16.mxu0 0
        %3893 = vmatpush1.bf16.msra.mxu0 0
        %3894 = vmatprep.subr.bf16.mxu0 0
        %3895 = vmatpush1.bf16.msra.mxu0 0
        %3896 = vmatprep.subr.bf16.mxu0 0
        %3897 = vmatpush1.bf16.msra.mxu0 0
        %3898 = vmatprep.subr.bf16.mxu0 0
        %3899 = vmatpush1.bf16.msra.mxu0 0
        %3900 = vmatprep.subr.bf16.mxu0 0
        %3901 = vmatpush1.bf16.msra.mxu0 0
        %3902 = vmatprep.subr.bf16.mxu0 0
        %3903 = vmatpush1.bf16.msra.mxu0 0
        %3904 = vmatprep.subr.bf16.mxu0 0
        %3905 = vmatpush1.bf16.msra.mxu0 0
        %3906 = vmatprep.mubr.bf16.mxu0 0
        %3907 = vmatmul.mubr.bf16.gmra.mrb[0].mxu0 %v3872
        %v3908 = vpop.f32.mrb[0].mxu0
        %v3909 = vadd.f32 0.0, %v3908
        %v3910 = vpop.f32.mrb[0].mxu0
        %v3911 = vpop.f32.mrb[0].mxu0
        %v3912 = vpop.f32.mrb[0].mxu0
        %3913 = vdwg.mxu0
        %v3914 = vld [vmem:[%s18] sm:$0xf]
        %v3916 = vsel %vm2725, %v3914, 0
        %3918 = vmatprep.subr.bf16.mxu0 0
        %3919 = vmatpush1.bf16.msra.mxu0 %v3870
        %3920 = vmatprep.subr.bf16.mxu0 0
        %3921 = vmatpush1.bf16.msra.mxu0 0
        %3922 = vmatprep.subr.bf16.mxu0 0
        %3923 = vmatpush1.bf16.msra.mxu0 0
        %3924 = vmatprep.subr.bf16.mxu0 0
        %3925 = vmatpush1.bf16.msra.mxu0 0
        %3926 = vmatprep.subr.bf16.mxu0 0
        %3927 = vmatpush1.bf16.msra.mxu0 0
        %3928 = vmatprep.subr.bf16.mxu0 0
        %3929 = vmatpush1.bf16.msra.mxu0 0
        %3930 = vmatprep.subr.bf16.mxu0 0
        %3931 = vmatpush1.bf16.msra.mxu0 0
        %3932 = vmatprep.subr.bf16.mxu0 0
        %3933 = vmatpush1.bf16.msra.mxu0 0
        %3934 = vmatprep.subr.bf16.mxu0 0
        %3935 = vmatpush1.bf16.msra.mxu0 0
        %3936 = vmatprep.subr.bf16.mxu0 0
        %3937 = vmatpush1.bf16.msra.mxu0 0
        %3938 = vmatprep.subr.bf16.mxu0 0
        %3939 = vmatpush1.bf16.msra.mxu0 0
        %3940 = vmatprep.subr.bf16.mxu0 0
        %3941 = vmatpush1.bf16.msra.mxu0 0
        %3942 = vmatprep.subr.bf16.mxu0 0
        %3943 = vmatpush1.bf16.msra.mxu0 0
        %3944 = vmatprep.subr.bf16.mxu0 0
        %3945 = vmatpush1.bf16.msra.mxu0 0
        %3946 = vmatprep.subr.bf16.mxu0 0
        %3947 = vmatpush1.bf16.msra.mxu0 0
        %3948 = vmatprep.subr.bf16.mxu0 0
        %3949 = vmatpush1.bf16.msra.mxu0 0
        %3950 = vmatprep.mubr.bf16.mxu0 0
        %3951 = vmatmul.mubr.bf16.gmra.mrb[0].mxu0 %v3916
        %v3952 = vpop.f32.mrb[0].mxu0
        %v3953 = vadd.f32 0.0, %v3952
        %v3954 = vpop.f32.mrb[0].mxu0
        %v3955 = vpop.f32.mrb[0].mxu0
        %v3956 = vpop.f32.mrb[0].mxu0
        %3957 = vdwg.mxu0
        %v3958 = vpack.c.bf16 %v3909, %v3909
        %v3959 = vpack.c.bf16 %v3953, %v3953
        %v3961 = vsel %vm2065, %v3958, 0
        %v3964 = vsel %vm2065, %v3959, 0
        %3966 = vmatprep.subr.bf16.mxu0 0
        %3967 = vmatpush1.bf16.xpose.msra.mxu0 %v3964
        %3968 = vmatprep.subr.bf16.mxu0 0
        %3969 = vmatpush1.bf16.xpose.msra.mxu0 0
        %3970 = vmatprep.subr.bf16.mxu0 0
        %3971 = vmatpush1.bf16.xpose.msra.mxu0 0
        %3972 = vmatprep.subr.bf16.mxu0 0
        %3973 = vmatpush1.bf16.xpose.msra.mxu0 0
        %3974 = vmatprep.subr.bf16.mxu0 0
        %3975 = vmatpush1.bf16.xpose.msra.mxu0 0
        %3976 = vmatprep.subr.bf16.mxu0 0
        %3977 = vmatpush1.bf16.xpose.msra.mxu0 0
        %3978 = vmatprep.subr.bf16.mxu0 0
        %3979 = vmatpush1.bf16.xpose.msra.mxu0 0
        %3980 = vmatprep.subr.bf16.mxu0 0
        %3981 = vmatpush1.bf16.xpose.msra.mxu0 0
        %3982 = vmatprep.subr.bf16.mxu0 0
        %3983 = vmatpush1.bf16.xpose.msra.mxu0 0
        %3984 = vmatprep.subr.bf16.mxu0 0
        %3985 = vmatpush1.bf16.xpose.msra.mxu0 0
        %3986 = vmatprep.subr.bf16.mxu0 0
        %3987 = vmatpush1.bf16.xpose.msra.mxu0 0
        %3988 = vmatprep.subr.bf16.mxu0 0
        %3989 = vmatpush1.bf16.xpose.msra.mxu0 0
        %3990 = vmatprep.subr.bf16.mxu0 0
        %3991 = vmatpush1.bf16.xpose.msra.mxu0 0
        %3992 = vmatprep.subr.bf16.mxu0 0
        %3993 = vmatpush1.bf16.xpose.msra.mxu0 0
        %3994 = vmatprep.subr.bf16.mxu0 0
        %3995 = vmatpush1.bf16.xpose.msra.mxu0 0
        %3996 = vmatprep.subr.bf16.mxu0 0
        %3997 = vmatpush1.bf16.xpose.msra.mxu0 0
        %3998 = vmatprep.mubr.bf16.mxu0 0
        %3999 = vmatmul.mubr.bf16.gmra.mrb[0].mxu0 %v3961
        %v4000 = vpop.f32.mrb[0].mxu0
        %v4001 = vadd.f32 0.0, %v4000
        %v4002 = vpop.f32.mrb[0].mxu0
        %v4003 = vpop.f32.mrb[0].mxu0
        %v4004 = vpop.f32.mrb[0].mxu0
        %4005 = vdwg.mxu0
        %v4006 = vmul.f32 %v4001, 0.17677669
        %v4007 = vld [vmem:[%s19] sm:$0xff]
        %v4008 = vadd.f32 %v4006, %v4007
        %v4009 = vsel %vm1002, %v4008, -inf
        %4010 = vmax.xlane.f32.xlu0 %v4009
        %v4011 = vpop.xlane.xlu0 %4010
        %v4012 = vsub.f32 %v4008, %v4011
        %v4013 = vmul.f32 %v4012, 1.442695
        %v4014 = vpow.pop %v4013
        %v4015 = vsel %vm1002, %v4014, 0.0
        %4016 = vadd.xlane.f32.xlu0 %v4015
        %v4017 = vpop.xlane.xlu0 %4016
        %v4018 = vrcp.pop %v4017
        %v4019 = vmul.f32 %v4014, %v4018
        %v4020 = vld [vmem:[%s20] sm:$0xff]
        %v4022 = vsel %vm1002, %v4019, 0
        %4024 = vmatprep.subr.mxu0 0.0
        %4025 = vmatpush1.msra.mxu0 %v4020
        %4026 = vmatprep.subr.mxu0 0.0
        %4027 = vmatpush1.msra.mxu0 0.0
        %4028 = vmatprep.subr.mxu0 0.0
        %4029 = vmatpush1.msra.mxu0 0.0
        %4030 = vmatprep.subr.mxu0 0.0
        %4031 = vmatpush1.msra.mxu0 0.0
        %4032 = vmatprep.subr.mxu0 0.0
        %4033 = vmatpush1.msra.mxu0 0.0
        %4034 = vmatprep.subr.mxu0 0.0
        %4035 = vmatpush1.msra.mxu0 0.0
        %4036 = vmatprep.subr.mxu0 0.0
        %4037 = vmatpush1.msra.mxu0 0.0
        %4038 = vmatprep.subr.mxu0 0.0
        %4039 = vmatpush1.msra.mxu0 0.0
        %4040 = vmatprep.subr.mxu0 0.0
        %4041 = vmatpush1.msra.mxu0 0.0
        %4042 = vmatprep.subr.mxu0 0.0
        %4043 = vmatpush1.msra.mxu0 0.0
        %4044 = vmatprep.subr.mxu0 0.0
        %4045 = vmatpush1.msra.mxu0 0.0
        %4046 = vmatprep.subr.mxu0 0.0
        %4047 = vmatpush1.msra.mxu0 0.0
        %4048 = vmatprep.subr.mxu0 0.0
        %4049 = vmatpush1.msra.mxu0 0.0
        %4050 = vmatprep.subr.mxu0 0.0
        %4051 = vmatpush1.msra.mxu0 0.0
        %4052 = vmatprep.subr.mxu0 0.0
        %4053 = vmatpush1.msra.mxu0 0.0
        %4054 = vmatprep.subr.mxu0 0.0
        %4055 = vmatpush1.msra.mxu0 0.0
        %4056 = vmatprep.subr.mxu0 0.0
        %4057 = vmatpush1.msra.mxu0 0.0
        %4058 = vmatprep.subr.mxu0 0.0
        %4059 = vmatpush1.msra.mxu0 0.0
        %4060 = vmatprep.subr.mxu0 0.0
        %4061 = vmatpush1.msra.mxu0 0.0
        %4062 = vmatprep.subr.mxu0 0.0
        %4063 = vmatpush1.msra.mxu0 0.0
        %4064 = vmatprep.subr.mxu0 0.0
        %4065 = vmatpush1.msra.mxu0 0.0
        %4066 = vmatprep.subr.mxu0 0.0
        %4067 = vmatpush1.msra.mxu0 0.0
        %4068 = vmatprep.subr.mxu0 0.0
        %4069 = vmatpush1.msra.mxu0 0.0
        %4070 = vmatprep.subr.mxu0 0.0
        %4071 = vmatpush1.msra.mxu0 0.0
        %4072 = vmatprep.subr.mxu0 0.0
        %4073 = vmatpush1.msra.mxu0 0.0
        %4074 = vmatprep.subr.mxu0 0.0
        %4075 = vmatpush1.msra.mxu0 0.0
        %4076 = vmatprep.subr.mxu0 0.0
        %4077 = vmatpush1.msra.mxu0 0.0
        %4078 = vmatprep.subr.mxu0 0.0
        %4079 = vmatpush1.msra.mxu0 0.0
        %4080 = vmatprep.subr.mxu0 0.0
        %4081 = vmatpush1.msra.mxu0 0.0
        %4082 = vmatprep.subr.mxu0 0.0
        %4083 = vmatpush1.msra.mxu0 0.0
        %4084 = vmatprep.subr.mxu0 0.0
        %4085 = vmatpush1.msra.mxu0 0.0
        %4086 = vmatprep.subr.mxu0 0.0
        %4087 = vmatpush1.msra.mxu0 0.0
        %4088 = vmatprep.mubr.f32.mxu0 0.0
        %4089 = vmatmul.mubr.f32.gmra.mrb[0].mxu0 %v4022
        %v4090 = vpop.f32.mrb[0].mxu0
        %v4091 = vadd.f32 0.0, %v4090
        %v4092 = vpop.f32.mrb[0].mxu0
        %4093 = vdwg.mxu0
        %4094 = vst [vmem:[%s663] sm:$0xff] %v4091
        %s4095 = sand.u32 %s494, 1
        %s4096 = scalar_lea.sflag [#allocation3], %s4095
        %s4097 = sand.u32 %s494, 1
        %s4098 = smul.addr %s4097, 8
        %s4099 = scalar_lea.vmem [#allocation2], %s4098
        // Predicated region
        $region105: #{tpu_custom_call.1} parent=103 // pred_check
          %p4100 = pneg %p504
        $region106: #{tpu_custom_call.1} parent=103 // pred_check_branch
          %4102 = sbr.rel (%p4100) target = $region108
        $region107: #{tpu_custom_call.1} parent=103 // pred_region
          %s4104 = ssub.s32 128, 128
          %4105 = vsyncadd %s4096, %s4104
          %s4106 = smul.addr %s35, 128
          %s4107 = scalar_lea.hbm %s21, %s4106
          %s4109 = sshll.u32 %s4099, 4
          %s4110 = int_to_ptr.vmem [resolvable:$true] %s4109
          %4112 = dma.vmem_to_hbm [thread:$0]  %s4110, 128, %s4107, %s4096
        $region108: #{tpu_custom_call.1} parent=103 // pred_fallthru
          _
      $region104: #{tpu_custom_call.1} parent=5 // pred_fallthru
        _
      %p4113 = scmp.le.s32.totalorder 2, %s30
      // Predicated region
      $region109: #{tpu_custom_call.1} parent=5 // pred_check
        %p4114 = pneg %p4113
      $region110: #{tpu_custom_call.1} parent=5 // pred_check_branch
        %4116 = sbr.rel (%p4114) target = $region112
      $region111: #{tpu_custom_call.1} parent=5 // pred_region
        %s4117 = ssub.s32 %s30, 2
        // Predicated region
        $region113: #{tpu_custom_call.1} parent=111 // pred_check
          %p4118 = pneg %p510
        $region114: #{tpu_custom_call.1} parent=111 // pred_check_branch
          %4120 = sbr.rel (%p4118) target = $region116
        $region115: #{tpu_custom_call.1} parent=111 // pred_region
          %s4121 = sand.u32 %s495, 1
          %s4122 = scalar_lea.sflag [#allocation3], %s4121
          %s4123 = sand.u32 %s495, 1
          %s4124 = smul.addr %s4123, 8
          %s4125 = scalar_lea.vmem [#allocation2], %s4124
          %4126 = dma.done %s4122, 128
        $region116: #{tpu_custom_call.1} parent=111 // pred_fallthru
          _
      $region112: #{tpu_custom_call.1} parent=5 // pred_fallthru
        _
    $region6: #{tpu_custom_call.1} parent=1 // loop_footer
      %s34 = sadd.s32 1, %s30
    $region7: #{tpu_custom_call.1} parent=1 // loop_footer_branch
      %29 = sbr.rel target = $region3
    $region8: #{tpu_custom_call.1} parent=1 // loop_exit
      _
    %4127 = vsyncpa [#allocation3], 1
    %s4128 = scalar_lea.sflag [#allocation3], 1
    %4129 = vsyncpa %s4128, 1

</llo_original>
